<compile_context>
chip_gen: v7x
topology: tpu7x:2x2x1
jax: 0.10.0
libtpu: 0.0.40
codegen_flags: <defaults>
</compile_context>

<pallas_src>
import functools
import math

import jax
import jax.numpy as jnp
import numpy as np
from jax import lax
from jax.experimental import pallas as pl
from jax.experimental.pallas import tpu as pltpu


# ----------------------------------------------------------------------------
# Pallas kernel: one time-chunk of the fused 4-pass GRU recurrence
# ----------------------------------------------------------------------------
def _gru_chunk_kernel(x_ref, h0_ref, wih_ref, whh_ref, bgi_ref, bhn_ref,
                      y_ref, hT_ref, *, Tc, S, T_actual, n_chunks, unroll):
    c = pl.program_id(0)

    # Running hidden state lives in the hT output block (constant block index
    # -> VMEM-resident across the whole serial grid).
    @pl.when(c == 0)
    def _():
        hT_ref[...] = h0_ref[...]

    rows = h0_ref.shape[0]            # padded batch rows (multiple of 8)
    G = bgi_ref.shape[-1]             # 3*S
    w_ih = wih_ref[...]               # (2I, 3S) packed input weights
    w_hh = whh_ref[...]               # (S, 3S)  block-diagonal packed W_hh^T
    # Hoist bias broadcasts out of the (unrolled) time loop.
    b_gi = jnp.broadcast_to(bgi_ref[...], (rows, G))
    b_hn = jnp.broadcast_to(bhn_ref[...], (rows, S))
    h_in = hT_ref[...]                # (rows, S) f32

    def step(t, h):
        # Fused input projection (independent of h -> off the serial chain).
        g = jnp.dot(x_ref[t], w_ih, preferred_element_type=jnp.float32) + b_gi
        gh = jnp.dot(h, w_hh, preferred_element_type=jnp.float32)
        r = jax.nn.sigmoid(g[:, 0:S] + gh[:, 0:S])
        z = jax.nn.sigmoid(g[:, S:2 * S] + gh[:, S:2 * S])
        n = jnp.tanh(g[:, 2 * S:3 * S] + r * (gh[:, 2 * S:3 * S] + b_hn))
        h_new = n + z * (h - n)       # == (1-z)*n + z*h, one fewer op on chain
        y_ref[t] = h_new
        return h_new

    def run(n_steps):
        return lax.fori_loop(0, n_steps, step, h_in,
                             unroll=min(n_steps, unroll))

    tail = T_actual - (n_chunks - 1) * Tc   # static: valid steps in last chunk
    if tail == Tc:                          # no time padding anywhere
        hT_ref[...] = run(Tc)
    else:
        # Only the final chunk contains padded timesteps: run a shorter static
        # loop there instead of masking every step of every chunk.
        @pl.when(c < n_chunks - 1)
        def _():
            hT_ref[...] = run(Tc)

        @pl.when(c == n_chunks - 1)
        def _():
            hT_ref[...] = run(tail)


def _fused_gru_recurrence(x_cat, h0, packed, T, chunk):
    """x_cat: (T, Bp, 2I) f32, h0: (Bp, 4H) f32 -> (y: (Tp,Bp,4H), hT: (Bp,4H))."""
    _, Bp, I2 = x_cat.shape
    S = h0.shape[1]                    # 4H
    G = 3 * S

    # Chunk auto-sizing against a conservative VMEM budget (double-buffered
    # x and y chunks); weights are small and resident.
    bytes_per_t = 2 * Bp * I2 * 4 + 2 * Bp * S * 4
    budget = 20 * 1024 * 1024
    tc_cap = max(1, budget // max(bytes_per_t, 1))
    Tc = max(1, min(chunk, T, tc_cap))
    n_chunks = pl.cdiv(T, Tc)
    Tp = n_chunks * Tc
    if Tp != T:                        # pad the NARROW x tensor, never gi
        x_cat = jnp.pad(x_cat, ((0, Tp - T), (0, 0), (0, 0)))

    unroll = 8 if Bp * S <= 8192 else 2

    kernel = functools.partial(_gru_chunk_kernel, Tc=Tc, S=S, T_actual=T,
                               n_chunks=n_chunks, unroll=unroll)

    grid_spec = pltpu.PrefetchScalarGridSpec(
        num_scalar_prefetch=0,
        grid=(n_chunks,),
        in_specs=[
            pl.BlockSpec((Tc, Bp, I2), lambda c: (c, 0, 0)),   # x chunk
            pl.BlockSpec((Bp, S), lambda c: (0, 0)),           # h0
            pl.BlockSpec((I2, G), lambda c: (0, 0)),           # packed W_ih
            pl.BlockSpec((S, G), lambda c: (0, 0)),            # packed W_hh
            pl.BlockSpec((1, G), lambda c: (0, 0)),            # folded input bias
            pl.BlockSpec((1, S), lambda c: (0, 0)),            # b_hn
        ],
        out_specs=[
            pl.BlockSpec((Tc, Bp, S), lambda c: (c, 0, 0)),    # hidden sequence
            pl.BlockSpec((Bp, S), lambda c: (0, 0)),           # final hidden
        ],
    )

    y_p, hT = pl.pallas_call(
        kernel,
        out_shape=(jax.ShapeDtypeStruct((Tp, Bp, S), jnp.float32),
                   jax.ShapeDtypeStruct((Bp, S), jnp.float32)),
        grid_spec=grid_spec,
        compiler_params=pltpu.CompilerParams(
            dimension_semantics=("arbitrary",),   # serial recurrence over time
            vmem_limit_bytes=48 * 1024 * 1024,
        ),
    )(x_cat, h0, packed["wih_p"], packed["whh_p"], packed["b_gi"], packed["b_hn"])
    return y_p, hT, Tp


# ----------------------------------------------------------------------------
# Parameters (PyTorch nn.GRU layout) and packing for the fused recurrence
# ----------------------------------------------------------------------------
def init_gru_params(key, input_size, hidden_size):
    """PyTorch-style uniform(-1/sqrt(H), 1/sqrt(H)) init, PyTorch layout."""
    k = 1.0 / math.sqrt(hidden_size)
    kw, kv, kb, kc = jax.random.split(key, 4)
    return {
        "wih": jax.random.uniform(kw, (3 * hidden_size, input_size), jnp.float32, -k, k),
        "whh": jax.random.uniform(kv, (3 * hidden_size, hidden_size), jnp.float32, -k, k),
        "bih": jax.random.uniform(kb, (3 * hidden_size,), jnp.float32, -k, k),
        "bhh": jax.random.uniform(kc, (3 * hidden_size,), jnp.float32, -k, k),
    }


# Pass order along the lane axis: [rr | ir | ri | ii]
#   rr = gru_r(x.real), ir = gru_r(x.imag), ri = gru_i(x.real), ii = gru_i(x.imag)
_PASSES = (("r", 0), ("r", 1), ("i", 0), ("i", 1))   # (which GRU, which x half)


def pack_complex_gru_params(params_r, params_i):
    """Pack gru_r + gru_i weights for the lane-packed 4-pass recurrence."""
    H = params_r["whh"].shape[1]
    I = params_r["wih"].shape[1]
    P = {"r": params_r, "i": params_i}
    z_ih = jnp.zeros((I, H), jnp.float32)
    z_hh = jnp.zeros((H, H), jnp.float32)

    wih_cols, whh_cols, bgi_cols = [], [], []
    for g in range(3):                                   # gate order r, z, n
        for k, (gru, half) in enumerate(_PASSES):
            w_ih_g = P[gru]["wih"][g * H:(g + 1) * H, :].T          # (I, H)
            wih_cols.append(jnp.concatenate(
                [w_ih_g if half == 0 else z_ih,
                 w_ih_g if half == 1 else z_ih], axis=0))           # (2I, H)
            w_hh_g = P[gru]["whh"][g * H:(g + 1) * H, :].T          # (H, H)
            whh_cols.append(jnp.concatenate(
                [w_hh_g if kk == k else z_hh for kk in range(4)], axis=0))  # (4H, H)
            b = P[gru]["bih"][g * H:(g + 1) * H]
            if g < 2:                                    # fold b_hh for r, z
                b = b + P[gru]["bhh"][g * H:(g + 1) * H]
            bgi_cols.append(b)

    wih_p = jnp.concatenate(wih_cols, axis=1)            # (2I, 12H)
    whh_p = jnp.concatenate(whh_cols, axis=1)            # (4H, 12H)
    b_gi = jnp.concatenate(bgi_cols).reshape(1, -1)      # (1, 12H)
    b_hn = jnp.concatenate(
        [P[gru]["bhh"][2 * H:3 * H] for gru, _ in _PASSES]).reshape(1, -1)  # (1, 4H)
    return {"wih_p": wih_p, "whh_p": whh_p, "b_gi": b_gi, "b_hn": b_hn,
            "hidden_size": H, "input_size": I}


# ----------------------------------------------------------------------------
# ComplexGRU forward (batch_first=True, 1 layer, unidirectional — defaults)
# ----------------------------------------------------------------------------
def complex_gru_forward(packed, x, h_rr=None, h_ir=None, h_ri=None, h_ii=None,
                        *, chunk=256):
    """x: (B, T, I) complex. Returns (y, h_rr, h_ir, h_ri, h_ii) like the module."""
    B, T, _ = x.shape
    H = packed["hidden_size"]
    S = 4 * H

    xr = jnp.real(x).astype(jnp.float32)
    xi = jnp.imag(x).astype(jnp.float32)
    x_cat = jnp.transpose(jnp.concatenate([xr, xi], axis=-1), (1, 0, 2))  # (T, B, 2I)

    Bp = ((B + 7) // 8) * 8                       # pad rows for sublane density
    if Bp != B:
        x_cat = jnp.pad(x_cat, ((0, 0), (0, Bp - B), (0, 0)))

    # Pack the four optional initial hidden states into the lane-packed layout.
    h0 = jnp.zeros((Bp, S), jnp.float32)
    for idx, h in enumerate((h_rr, h_ir, h_ri, h_ii)):
        if h is not None:
            h0 = h0.at[:B, idx * H:(idx + 1) * H].set(
                jnp.asarray(h, jnp.float32).reshape(B, H))

    y_p, hT, Tp = _fused_gru_recurrence(x_cat, h0, packed, T, chunk)

    y_seq = y_p if Tp == T else y_p[:T]
    if Bp != B:
        y_seq = y_seq[:, :B]
        hT = hT[:B]

    Frr = y_seq[:, :, 0 * H:1 * H]
    Fir = y_seq[:, :, 1 * H:2 * H]
    Fri = y_seq[:, :, 2 * H:3 * H]
    Fii = y_seq[:, :, 3 * H:4 * H]
    y = lax.complex(jnp.transpose(Frr - Fii, (1, 0, 2)),
                    jnp.transpose(Fri + Fir, (1, 0, 2)))   # (B, T, H) complex

    as_h = lambda k: hT[:, k * H:(k + 1) * H].reshape(1, B, H)
    return (y, as_h(0), as_h(1), as_h(2), as_h(3))


# ----------------------------------------------------------------------------
# Pure-JAX reference (lax.scan, PyTorch semantics) for a sanity check.
# ----------------------------------------------------------------------------
def _gru_ref(x_tm, h0, p):
    H = p["whh"].shape[1]
    wih_t, whh_t = p["wih"].T, p["whh"].T
    bih, bhh = p["bih"], p["bhh"]

    def step(h, x_t):
        gi = jnp.dot(x_t, wih_t, precision=lax.Precision.HIGHEST) + bih
        gh = jnp.dot(h, whh_t, precision=lax.Precision.HIGHEST) + bhh
        r = jax.nn.sigmoid(gi[:, :H] + gh[:, :H])
        z = jax.nn.sigmoid(gi[:, H:2 * H] + gh[:, H:2 * H])
        n = jnp.tanh(gi[:, 2 * H:] + r * gh[:, 2 * H:])
        h_new = (1.0 - z) * n + z * h
        return h_new, h_new

    hT, ys = lax.scan(step, h0, x_tm)
    return ys, hT


def _complex_gru_ref(params_r, params_i, x, h_rr=None, h_ir=None, h_ri=None, h_ii=None):
    B, T, _ = x.shape
    H = params_r["whh"].shape[1]
    xr = jnp.transpose(jnp.real(x).astype(jnp.float32), (1, 0, 2))
    xi = jnp.transpose(jnp.imag(x).astype(jnp.float32), (1, 0, 2))
    get = lambda h: (jnp.zeros((B, H), jnp.float32) if h is None
                     else jnp.asarray(h, jnp.float32).reshape(B, H))
    Frr, o_rr = _gru_ref(xr, get(h_rr), params_r)
    Fir, o_ir = _gru_ref(xi, get(h_ir), params_r)
    Fri, o_ri = _gru_ref(xr, get(h_ri), params_i)
    Fii, o_ii = _gru_ref(xi, get(h_ii), params_i)
    y = lax.complex(jnp.transpose(Frr - Fii, (1, 0, 2)),
                    jnp.transpose(Fri + Fir, (1, 0, 2)))
    to_h = lambda a: a.reshape(1, B, H)
    return y, to_h(o_rr), to_h(o_ir), to_h(o_ri), to_h(o_ii)


if __name__ == "__main__":
    # Small shapes consistent with the module: batch=2, seq=8, input=16, hidden=32.
    B, T, I, H = 2, 8, 16, 32

    key = jax.random.PRNGKey(0)
    k_xr, k_xi, k_gr, k_gi, k_h = jax.random.split(key, 5)

    x = lax.complex(
        jax.random.normal(k_xr, (B, T, I), jnp.float32),
        jax.random.normal(k_xi, (B, T, I), jnp.float32),
    )

    params_r = init_gru_params(k_gr, I, H)   # gru_r
    params_i = init_gru_params(k_gi, I, H)   # gru_i
    packed = pack_complex_gru_params(params_r, params_i)

    # Default path: single chunk, zero initial states.
    out = complex_gru_forward(packed, x)
    jax.block_until_ready(out)
    ref = _complex_gru_ref(params_r, params_i, x)
    for got, want in zip(out, ref):
        np.testing.assert_allclose(np.asarray(got), np.asarray(want),
                                   atol=1e-4, rtol=1e-4)

    # Multi-chunk + padded-tail path with provided initial hidden states.
    hs = jax.random.normal(k_h, (4, 1, B, H), jnp.float32)
    out2 = complex_gru_forward(packed, x, hs[0], hs[1], hs[2], hs[3], chunk=3)
    jax.block_until_ready(out2)
    ref2 = _complex_gru_ref(params_r, params_i, x, hs[0], hs[1], hs[2], hs[3])
    for got, want in zip(out2, ref2):
        np.testing.assert_allclose(np.asarray(got), np.asarray(want),
                                   atol=1e-4, rtol=1e-4)

    print("KERNEL_OK")
</pallas_src>

<mosaic_0001>
module attributes {stable_mosaic.version = 11 : i64} {
  func.func @_gru_chunk_kernel(%arg0: i32, %arg1: memref<8x8x32xf32, #tpu.memory_space<vmem>>, %arg2: memref<8x128xf32, #tpu.memory_space<vmem>>, %arg3: memref<32x384xf32, #tpu.memory_space<vmem>>, %arg4: memref<128x384xf32, #tpu.memory_space<vmem>>, %arg5: memref<1x384xf32, #tpu.memory_space<vmem>>, %arg6: memref<1x128xf32, #tpu.memory_space<vmem>>, %arg7: memref<8x8x128xf32, #tpu.memory_space<vmem>>, %arg8: memref<8x128xf32, #tpu.memory_space<vmem>>) attributes {dimension_semantics = [#tpu.dimension_semantics<arbitrary>], iteration_bounds = array<i64: 1>, scalar_prefetch = 0 : i64, scratch_operands = 0 : i64, tpu.core_type = #tpu.core_type<tc>, window_params = [{transform_indices = @transform_0, window_bounds = array<i64: 8, 8, 32>}, {pipeline_mode = #tpu.pipeline_mode<synchronous>, transform_indices = @transform_1, window_bounds = array<i64: 8, 128>}, {pipeline_mode = #tpu.pipeline_mode<synchronous>, transform_indices = @transform_2, window_bounds = array<i64: 32, 384>}, {pipeline_mode = #tpu.pipeline_mode<synchronous>, transform_indices = @transform_3, window_bounds = array<i64: 128, 384>}, {pipeline_mode = #tpu.pipeline_mode<synchronous>, transform_indices = @transform_4, window_bounds = array<i64: 1, 384>}, {pipeline_mode = #tpu.pipeline_mode<synchronous>, transform_indices = @transform_5, window_bounds = array<i64: 1, 128>}, {transform_indices = @transform_6, window_bounds = array<i64: 8, 8, 128>}, {pipeline_mode = #tpu.pipeline_mode<synchronous>, transform_indices = @transform_7, window_bounds = array<i64: 8, 128>}]} {
    %c0_i32 = arith.constant 0 : i32
    %0 = arith.cmpi eq, %arg0, %c0_i32 : i32
    %1 = arith.extui %0 : i1 to i32
    %c0_i32_0 = arith.constant 0 : i32
    %2 = arith.cmpi ne, %1, %c0_i32_0 : i32
    scf.if %2 {
      %c0_76 = arith.constant 0 : index
      %c0_77 = arith.constant 0 : index
      %293 = vector.load %arg2[%c0_76, %c0_77] : memref<8x128xf32, #tpu.memory_space<vmem>>, vector<8x128xf32>
      %c0_78 = arith.constant 0 : index
      %c0_79 = arith.constant 0 : index
      %294 = vector.load %arg8[%c0_78, %c0_79] : memref<8x128xf32, #tpu.memory_space<vmem>>, vector<8x128xf32>
      tpu.vector_store %arg8[%c0_78, %c0_79], %293 {strides = array<i32>} : memref<8x128xf32, #tpu.memory_space<vmem>>, vector<8x128xf32>,
    } else {
    }
    %c0 = arith.constant 0 : index
    %c0_1 = arith.constant 0 : index
    %3 = vector.load %arg3[%c0, %c0_1] : memref<32x384xf32, #tpu.memory_space<vmem>>, vector<32x384xf32>
    %c0_2 = arith.constant 0 : index
    %c0_3 = arith.constant 0 : index
    %4 = vector.load %arg4[%c0_2, %c0_3] : memref<128x384xf32, #tpu.memory_space<vmem>>, vector<128x384xf32>
    %c0_4 = arith.constant 0 : index
    %c0_5 = arith.constant 0 : index
    %5 = vector.load %arg5[%c0_4, %c0_5] : memref<1x384xf32, #tpu.memory_space<vmem>>, vector<1x384xf32>
    %6 = vector.shape_cast %5 : vector<1x384xf32> to vector<1x384xf32>
    %7 = vector.broadcast %6 : vector<1x384xf32> to vector<8x384xf32>
    %c0_6 = arith.constant 0 : index
    %c0_7 = arith.constant 0 : index
    %8 = vector.load %arg6[%c0_6, %c0_7] : memref<1x128xf32, #tpu.memory_space<vmem>>, vector<1x128xf32>
    %9 = vector.shape_cast %8 : vector<1x128xf32> to vector<1x128xf32>
    %10 = vector.broadcast %9 : vector<1x128xf32> to vector<8x128xf32>
    %c0_8 = arith.constant 0 : index
    %c0_9 = arith.constant 0 : index
    %11 = vector.load %arg8[%c0_8, %c0_9] : memref<8x128xf32, #tpu.memory_space<vmem>>, vector<8x128xf32>
    %c0_i32_10 = arith.constant 0 : i32
    %12 = arith.index_cast %c0_i32_10 : i32 to index
    %c0_11 = arith.constant 0 : index
    %c0_12 = arith.constant 0 : index
    %13 = vector.load %arg1[%12, %c0_11, %c0_12] : memref<8x8x32xf32, #tpu.memory_space<vmem>>, vector<1x8x32xf32>
    %14 = vector.shape_cast %13 : vector<1x8x32xf32> to vector<8x32xf32>
    %cst = arith.constant dense<0.000000e+00> : vector<8x384xf32>
    %15 = tpu.matmul %14, %3, %cst {dimension_numbers = #tpu.dot_dimension_numbers<[1], [0], [0], [1], [0, 0, 1, 1], [], []>} : vector<8x32xf32>, vector<32x384xf32>, vector<8x384xf32> -> vector<8x384xf32>
    %16 = arith.addf %15, %7 : vector<8x384xf32>
    %cst_13 = arith.constant dense<0.000000e+00> : vector<8x384xf32>
    %17 = tpu.matmul %11, %4, %cst_13 {dimension_numbers = #tpu.dot_dimension_numbers<[1], [0], [0], [1], [0, 0, 1, 1], [], []>} : vector<8x128xf32>, vector<128x384xf32>, vector<8x384xf32> -> vector<8x384xf32>
    %18 = vector.extract_strided_slice %16 {offsets = [0, 0], sizes = [8, 128], strides = [1, 1]} : vector<8x384xf32> to vector<8x128xf32>
    %19 = vector.extract_strided_slice %17 {offsets = [0, 0], sizes = [8, 128], strides = [1, 1]} : vector<8x384xf32> to vector<8x128xf32>
    %20 = arith.addf %18, %19 : vector<8x128xf32>
    %21 = arith.negf %20 : vector<8x128xf32>
    %22 = math.exp %21 : vector<8x128xf32>
    %cst_14 = arith.constant 1.000000e+00 : f32
    %23 = vector.broadcast %cst_14 : f32 to vector<8x128xf32>
    %24 = arith.addf %23, %22 : vector<8x128xf32>
    %25 = arith.divf %23, %24 : vector<8x128xf32>
    %26 = vector.extract_strided_slice %16 {offsets = [0, 128], sizes = [8, 128], strides = [1, 1]} : vector<8x384xf32> to vector<8x128xf32>
    %27 = vector.extract_strided_slice %17 {offsets = [0, 128], sizes = [8, 128], strides = [1, 1]} : vector<8x384xf32> to vector<8x128xf32>
    %28 = arith.addf %26, %27 : vector<8x128xf32>
    %29 = arith.negf %28 : vector<8x128xf32>
    %30 = math.exp %29 : vector<8x128xf32>
    %cst_15 = arith.constant 1.000000e+00 : f32
    %31 = vector.broadcast %cst_15 : f32 to vector<8x128xf32>
    %32 = arith.addf %31, %30 : vector<8x128xf32>
    %33 = arith.divf %31, %32 : vector<8x128xf32>
    %34 = vector.extract_strided_slice %16 {offsets = [0, 256], sizes = [8, 128], strides = [1, 1]} : vector<8x384xf32> to vector<8x128xf32>
    %35 = vector.extract_strided_slice %17 {offsets = [0, 256], sizes = [8, 128], strides = [1, 1]} : vector<8x384xf32> to vector<8x128xf32>
    %36 = arith.addf %35, %10 : vector<8x128xf32>
    %37 = arith.mulf %25, %36 : vector<8x128xf32>
    %38 = arith.addf %34, %37 : vector<8x128xf32>
    %39 = math.tanh %38 : vector<8x128xf32>
    %40 = arith.subf %11, %39 : vector<8x128xf32>
    %41 = arith.mulf %33, %40 : vector<8x128xf32>
    %42 = arith.addf %39, %41 : vector<8x128xf32>
    %43 = arith.index_cast %c0_i32_10 : i32 to index
    %c0_16 = arith.constant 0 : index
    %c0_17 = arith.constant 0 : index
    %44 = vector.load %arg7[%43, %c0_16, %c0_17] : memref<8x8x128xf32, #tpu.memory_space<vmem>>, vector<1x8x128xf32>
    %45 = vector.shape_cast %44 : vector<1x8x128xf32> to vector<8x128xf32>
    %46 = vector.shape_cast %42 : vector<8x128xf32> to vector<1x8x128xf32>
    tpu.vector_store %arg7[%43, %c0_16, %c0_17], %46 {strides = array<i32>} : memref<8x8x128xf32, #tpu.memory_space<vmem>>, vector<1x8x128xf32>,
    %c1_i32 = arith.constant 1 : i32
    %47 = arith.index_cast %c1_i32 : i32 to index
    %c0_18 = arith.constant 0 : index
    %c0_19 = arith.constant 0 : index
    %48 = vector.load %arg1[%47, %c0_18, %c0_19] : memref<8x8x32xf32, #tpu.memory_space<vmem>>, vector<1x8x32xf32>
    %49 = vector.shape_cast %48 : vector<1x8x32xf32> to vector<8x32xf32>
    %cst_20 = arith.constant dense<0.000000e+00> : vector<8x384xf32>
    %50 = tpu.matmul %49, %3, %cst_20 {dimension_numbers = #tpu.dot_dimension_numbers<[1], [0], [0], [1], [0, 0, 1, 1], [], []>} : vector<8x32xf32>, vector<32x384xf32>, vector<8x384xf32> -> vector<8x384xf32>
    %51 = arith.addf %50, %7 : vector<8x384xf32>
    %cst_21 = arith.constant dense<0.000000e+00> : vector<8x384xf32>
    %52 = tpu.matmul %42, %4, %cst_21 {dimension_numbers = #tpu.dot_dimension_numbers<[1], [0], [0], [1], [0, 0, 1, 1], [], []>} : vector<8x128xf32>, vector<128x384xf32>, vector<8x384xf32> -> vector<8x384xf32>
    %53 = vector.extract_strided_slice %51 {offsets = [0, 0], sizes = [8, 128], strides = [1, 1]} : vector<8x384xf32> to vector<8x128xf32>
    %54 = vector.extract_strided_slice %52 {offsets = [0, 0], sizes = [8, 128], strides = [1, 1]} : vector<8x384xf32> to vector<8x128xf32>
    %55 = arith.addf %53, %54 : vector<8x128xf32>
    %56 = arith.negf %55 : vector<8x128xf32>
    %57 = math.exp %56 : vector<8x128xf32>
    %cst_22 = arith.constant 1.000000e+00 : f32
    %58 = vector.broadcast %cst_22 : f32 to vector<8x128xf32>
    %59 = arith.addf %58, %57 : vector<8x128xf32>
    %60 = arith.divf %58, %59 : vector<8x128xf32>
    %61 = vector.extract_strided_slice %51 {offsets = [0, 128], sizes = [8, 128], strides = [1, 1]} : vector<8x384xf32> to vector<8x128xf32>
    %62 = vector.extract_strided_slice %52 {offsets = [0, 128], sizes = [8, 128], strides = [1, 1]} : vector<8x384xf32> to vector<8x128xf32>
    %63 = arith.addf %61, %62 : vector<8x128xf32>
    %64 = arith.negf %63 : vector<8x128xf32>
    %65 = math.exp %64 : vector<8x128xf32>
    %cst_23 = arith.constant 1.000000e+00 : f32
    %66 = vector.broadcast %cst_23 : f32 to vector<8x128xf32>
    %67 = arith.addf %66, %65 : vector<8x128xf32>
    %68 = arith.divf %66, %67 : vector<8x128xf32>
    %69 = vector.extract_strided_slice %51 {offsets = [0, 256], sizes = [8, 128], strides = [1, 1]} : vector<8x384xf32> to vector<8x128xf32>
    %70 = vector.extract_strided_slice %52 {offsets = [0, 256], sizes = [8, 128], strides = [1, 1]} : vector<8x384xf32> to vector<8x128xf32>
    %71 = arith.addf %70, %10 : vector<8x128xf32>
    %72 = arith.mulf %60, %71 : vector<8x128xf32>
    %73 = arith.addf %69, %72 : vector<8x128xf32>
    %74 = math.tanh %73 : vector<8x128xf32>
    %75 = arith.subf %42, %74 : vector<8x128xf32>
    %76 = arith.mulf %68, %75 : vector<8x128xf32>
    %77 = arith.addf %74, %76 : vector<8x128xf32>
    %78 = arith.index_cast %c1_i32 : i32 to index
    %c0_24 = arith.constant 0 : index
    %c0_25 = arith.constant 0 : index
    %79 = vector.load %arg7[%78, %c0_24, %c0_25] : memref<8x8x128xf32, #tpu.memory_space<vmem>>, vector<1x8x128xf32>
    %80 = vector.shape_cast %79 : vector<1x8x128xf32> to vector<8x128xf32>
    %81 = vector.shape_cast %77 : vector<8x128xf32> to vector<1x8x128xf32>
    tpu.vector_store %arg7[%78, %c0_24, %c0_25], %81 {strides = array<i32>} : memref<8x8x128xf32, #tpu.memory_space<vmem>>, vector<1x8x128xf32>,
    %c2_i32 = arith.constant 2 : i32
    %82 = arith.index_cast %c2_i32 : i32 to index
    %c0_26 = arith.constant 0 : index
    %c0_27 = arith.constant 0 : index
    %83 = vector.load %arg1[%82, %c0_26, %c0_27] : memref<8x8x32xf32, #tpu.memory_space<vmem>>, vector<1x8x32xf32>
    %84 = vector.shape_cast %83 : vector<1x8x32xf32> to vector<8x32xf32>
    %cst_28 = arith.constant dense<0.000000e+00> : vector<8x384xf32>
    %85 = tpu.matmul %84, %3, %cst_28 {dimension_numbers = #tpu.dot_dimension_numbers<[1], [0], [0], [1], [0, 0, 1, 1], [], []>} : vector<8x32xf32>, vector<32x384xf32>, vector<8x384xf32> -> vector<8x384xf32>
    %86 = arith.addf %85, %7 : vector<8x384xf32>
    %cst_29 = arith.constant dense<0.000000e+00> : vector<8x384xf32>
    %87 = tpu.matmul %77, %4, %cst_29 {dimension_numbers = #tpu.dot_dimension_numbers<[1], [0], [0], [1], [0, 0, 1, 1], [], []>} : vector<8x128xf32>, vector<128x384xf32>, vector<8x384xf32> -> vector<8x384xf32>
    %88 = vector.extract_strided_slice %86 {offsets = [0, 0], sizes = [8, 128], strides = [1, 1]} : vector<8x384xf32> to vector<8x128xf32>
    %89 = vector.extract_strided_slice %87 {offsets = [0, 0], sizes = [8, 128], strides = [1, 1]} : vector<8x384xf32> to vector<8x128xf32>
    %90 = arith.addf %88, %89 : vector<8x128xf32>
    %91 = arith.negf %90 : vector<8x128xf32>
    %92 = math.exp %91 : vector<8x128xf32>
    %cst_30 = arith.constant 1.000000e+00 : f32
    %93 = vector.broadcast %cst_30 : f32 to vector<8x128xf32>
    %94 = arith.addf %93, %92 : vector<8x128xf32>
    %95 = arith.divf %93, %94 : vector<8x128xf32>
    %96 = vector.extract_strided_slice %86 {offsets = [0, 128], sizes = [8, 128], strides = [1, 1]} : vector<8x384xf32> to vector<8x128xf32>
    %97 = vector.extract_strided_slice %87 {offsets = [0, 128], sizes = [8, 128], strides = [1, 1]} : vector<8x384xf32> to vector<8x128xf32>
    %98 = arith.addf %96, %97 : vector<8x128xf32>
    %99 = arith.negf %98 : vector<8x128xf32>
    %100 = math.exp %99 : vector<8x128xf32>
    %cst_31 = arith.constant 1.000000e+00 : f32
    %101 = vector.broadcast %cst_31 : f32 to vector<8x128xf32>
    %102 = arith.addf %101, %100 : vector<8x128xf32>
    %103 = arith.divf %101, %102 : vector<8x128xf32>
    %104 = vector.extract_strided_slice %86 {offsets = [0, 256], sizes = [8, 128], strides = [1, 1]} : vector<8x384xf32> to vector<8x128xf32>
    %105 = vector.extract_strided_slice %87 {offsets = [0, 256], sizes = [8, 128], strides = [1, 1]} : vector<8x384xf32> to vector<8x128xf32>
    %106 = arith.addf %105, %10 : vector<8x128xf32>
    %107 = arith.mulf %95, %106 : vector<8x128xf32>
    %108 = arith.addf %104, %107 : vector<8x128xf32>
    %109 = math.tanh %108 : vector<8x128xf32>
    %110 = arith.subf %77, %109 : vector<8x128xf32>
    %111 = arith.mulf %103, %110 : vector<8x128xf32>
    %112 = arith.addf %109, %111 : vector<8x128xf32>
    %113 = arith.index_cast %c2_i32 : i32 to index
    %c0_32 = arith.constant 0 : index
    %c0_33 = arith.constant 0 : index
    %114 = vector.load %arg7[%113, %c0_32, %c0_33] : memref<8x8x128xf32, #tpu.memory_space<vmem>>, vector<1x8x128xf32>
    %115 = vector.shape_cast %114 : vector<1x8x128xf32> to vector<8x128xf32>
    %116 = vector.shape_cast %112 : vector<8x128xf32> to vector<1x8x128xf32>
    tpu.vector_store %arg7[%113, %c0_32, %c0_33], %116 {strides = array<i32>} : memref<8x8x128xf32, #tpu.memory_space<vmem>>, vector<1x8x128xf32>,
    %c3_i32 = arith.constant 3 : i32
    %117 = arith.index_cast %c3_i32 : i32 to index
    %c0_34 = arith.constant 0 : index
    %c0_35 = arith.constant 0 : index
    %118 = vector.load %arg1[%117, %c0_34, %c0_35] : memref<8x8x32xf32, #tpu.memory_space<vmem>>, vector<1x8x32xf32>
    %119 = vector.shape_cast %118 : vector<1x8x32xf32> to vector<8x32xf32>
    %cst_36 = arith.constant dense<0.000000e+00> : vector<8x384xf32>
    %120 = tpu.matmul %119, %3, %cst_36 {dimension_numbers = #tpu.dot_dimension_numbers<[1], [0], [0], [1], [0, 0, 1, 1], [], []>} : vector<8x32xf32>, vector<32x384xf32>, vector<8x384xf32> -> vector<8x384xf32>
    %121 = arith.addf %120, %7 : vector<8x384xf32>
    %cst_37 = arith.constant dense<0.000000e+00> : vector<8x384xf32>
    %122 = tpu.matmul %112, %4, %cst_37 {dimension_numbers = #tpu.dot_dimension_numbers<[1], [0], [0], [1], [0, 0, 1, 1], [], []>} : vector<8x128xf32>, vector<128x384xf32>, vector<8x384xf32> -> vector<8x384xf32>
    %123 = vector.extract_strided_slice %121 {offsets = [0, 0], sizes = [8, 128], strides = [1, 1]} : vector<8x384xf32> to vector<8x128xf32>
    %124 = vector.extract_strided_slice %122 {offsets = [0, 0], sizes = [8, 128], strides = [1, 1]} : vector<8x384xf32> to vector<8x128xf32>
    %125 = arith.addf %123, %124 : vector<8x128xf32>
    %126 = arith.negf %125 : vector<8x128xf32>
    %127 = math.exp %126 : vector<8x128xf32>
    %cst_38 = arith.constant 1.000000e+00 : f32
    %128 = vector.broadcast %cst_38 : f32 to vector<8x128xf32>
    %129 = arith.addf %128, %127 : vector<8x128xf32>
    %130 = arith.divf %128, %129 : vector<8x128xf32>
    %131 = vector.extract_strided_slice %121 {offsets = [0, 128], sizes = [8, 128], strides = [1, 1]} : vector<8x384xf32> to vector<8x128xf32>
    %132 = vector.extract_strided_slice %122 {offsets = [0, 128], sizes = [8, 128], strides = [1, 1]} : vector<8x384xf32> to vector<8x128xf32>
    %133 = arith.addf %131, %132 : vector<8x128xf32>
    %134 = arith.negf %133 : vector<8x128xf32>
    %135 = math.exp %134 : vector<8x128xf32>
    %cst_39 = arith.constant 1.000000e+00 : f32
    %136 = vector.broadcast %cst_39 : f32 to vector<8x128xf32>
    %137 = arith.addf %136, %135 : vector<8x128xf32>
    %138 = arith.divf %136, %137 : vector<8x128xf32>
    %139 = vector.extract_strided_slice %121 {offsets = [0, 256], sizes = [8, 128], strides = [1, 1]} : vector<8x384xf32> to vector<8x128xf32>
    %140 = vector.extract_strided_slice %122 {offsets = [0, 256], sizes = [8, 128], strides = [1, 1]} : vector<8x384xf32> to vector<8x128xf32>
    %141 = arith.addf %140, %10 : vector<8x128xf32>
    %142 = arith.mulf %130, %141 : vector<8x128xf32>
    %143 = arith.addf %139, %142 : vector<8x128xf32>
    %144 = math.tanh %143 : vector<8x128xf32>
    %145 = arith.subf %112, %144 : vector<8x128xf32>
    %146 = arith.mulf %138, %145 : vector<8x128xf32>
    %147 = arith.addf %144, %146 : vector<8x128xf32>
    %148 = arith.index_cast %c3_i32 : i32 to index
    %c0_40 = arith.constant 0 : index
    %c0_41 = arith.constant 0 : index
    %149 = vector.load %arg7[%148, %c0_40, %c0_41] : memref<8x8x128xf32, #tpu.memory_space<vmem>>, vector<1x8x128xf32>
    %150 = vector.shape_cast %149 : vector<1x8x128xf32> to vector<8x128xf32>
    %151 = vector.shape_cast %147 : vector<8x128xf32> to vector<1x8x128xf32>
    tpu.vector_store %arg7[%148, %c0_40, %c0_41], %151 {strides = array<i32>} : memref<8x8x128xf32, #tpu.memory_space<vmem>>, vector<1x8x128xf32>,
    %c4_i32 = arith.constant 4 : i32
    %152 = arith.index_cast %c4_i32 : i32 to index
    %c0_42 = arith.constant 0 : index
    %c0_43 = arith.constant 0 : index
    %153 = vector.load %arg1[%152, %c0_42, %c0_43] : memref<8x8x32xf32, #tpu.memory_space<vmem>>, vector<1x8x32xf32>
    %154 = vector.shape_cast %153 : vector<1x8x32xf32> to vector<8x32xf32>
    %cst_44 = arith.constant dense<0.000000e+00> : vector<8x384xf32>
    %155 = tpu.matmul %154, %3, %cst_44 {dimension_numbers = #tpu.dot_dimension_numbers<[1], [0], [0], [1], [0, 0, 1, 1], [], []>} : vector<8x32xf32>, vector<32x384xf32>, vector<8x384xf32> -> vector<8x384xf32>
    %156 = arith.addf %155, %7 : vector<8x384xf32>
    %cst_45 = arith.constant dense<0.000000e+00> : vector<8x384xf32>
    %157 = tpu.matmul %147, %4, %cst_45 {dimension_numbers = #tpu.dot_dimension_numbers<[1], [0], [0], [1], [0, 0, 1, 1], [], []>} : vector<8x128xf32>, vector<128x384xf32>, vector<8x384xf32> -> vector<8x384xf32>
    %158 = vector.extract_strided_slice %156 {offsets = [0, 0], sizes = [8, 128], strides = [1, 1]} : vector<8x384xf32> to vector<8x128xf32>
    %159 = vector.extract_strided_slice %157 {offsets = [0, 0], sizes = [8, 128], strides = [1, 1]} : vector<8x384xf32> to vector<8x128xf32>
    %160 = arith.addf %158, %159 : vector<8x128xf32>
    %161 = arith.negf %160 : vector<8x128xf32>
    %162 = math.exp %161 : vector<8x128xf32>
    %cst_46 = arith.constant 1.000000e+00 : f32
    %163 = vector.broadcast %cst_46 : f32 to vector<8x128xf32>
    %164 = arith.addf %163, %162 : vector<8x128xf32>
    %165 = arith.divf %163, %164 : vector<8x128xf32>
    %166 = vector.extract_strided_slice %156 {offsets = [0, 128], sizes = [8, 128], strides = [1, 1]} : vector<8x384xf32> to vector<8x128xf32>
    %167 = vector.extract_strided_slice %157 {offsets = [0, 128], sizes = [8, 128], strides = [1, 1]} : vector<8x384xf32> to vector<8x128xf32>
    %168 = arith.addf %166, %167 : vector<8x128xf32>
    %169 = arith.negf %168 : vector<8x128xf32>
    %170 = math.exp %169 : vector<8x128xf32>
    %cst_47 = arith.constant 1.000000e+00 : f32
    %171 = vector.broadcast %cst_47 : f32 to vector<8x128xf32>
    %172 = arith.addf %171, %170 : vector<8x128xf32>
    %173 = arith.divf %171, %172 : vector<8x128xf32>
    %174 = vector.extract_strided_slice %156 {offsets = [0, 256], sizes = [8, 128], strides = [1, 1]} : vector<8x384xf32> to vector<8x128xf32>
    %175 = vector.extract_strided_slice %157 {offsets = [0, 256], sizes = [8, 128], strides = [1, 1]} : vector<8x384xf32> to vector<8x128xf32>
    %176 = arith.addf %175, %10 : vector<8x128xf32>
    %177 = arith.mulf %165, %176 : vector<8x128xf32>
    %178 = arith.addf %174, %177 : vector<8x128xf32>
    %179 = math.tanh %178 : vector<8x128xf32>
    %180 = arith.subf %147, %179 : vector<8x128xf32>
    %181 = arith.mulf %173, %180 : vector<8x128xf32>
    %182 = arith.addf %179, %181 : vector<8x128xf32>
    %183 = arith.index_cast %c4_i32 : i32 to index
    %c0_48 = arith.constant 0 : index
    %c0_49 = arith.constant 0 : index
    %184 = vector.load %arg7[%183, %c0_48, %c0_49] : memref<8x8x128xf32, #tpu.memory_space<vmem>>, vector<1x8x128xf32>
    %185 = vector.shape_cast %184 : vector<1x8x128xf32> to vector<8x128xf32>
    %186 = vector.shape_cast %182 : vector<8x128xf32> to vector<1x8x128xf32>
    tpu.vector_store %arg7[%183, %c0_48, %c0_49], %186 {strides = array<i32>} : memref<8x8x128xf32, #tpu.memory_space<vmem>>, vector<1x8x128xf32>,
    %c5_i32 = arith.constant 5 : i32
    %187 = arith.index_cast %c5_i32 : i32 to index
    %c0_50 = arith.constant 0 : index
    %c0_51 = arith.constant 0 : index
    %188 = vector.load %arg1[%187, %c0_50, %c0_51] : memref<8x8x32xf32, #tpu.memory_space<vmem>>, vector<1x8x32xf32>
    %189 = vector.shape_cast %188 : vector<1x8x32xf32> to vector<8x32xf32>
    %cst_52 = arith.constant dense<0.000000e+00> : vector<8x384xf32>
    %190 = tpu.matmul %189, %3, %cst_52 {dimension_numbers = #tpu.dot_dimension_numbers<[1], [0], [0], [1], [0, 0, 1, 1], [], []>} : vector<8x32xf32>, vector<32x384xf32>, vector<8x384xf32> -> vector<8x384xf32>
    %191 = arith.addf %190, %7 : vector<8x384xf32>
    %cst_53 = arith.constant dense<0.000000e+00> : vector<8x384xf32>
    %192 = tpu.matmul %182, %4, %cst_53 {dimension_numbers = #tpu.dot_dimension_numbers<[1], [0], [0], [1], [0, 0, 1, 1], [], []>} : vector<8x128xf32>, vector<128x384xf32>, vector<8x384xf32> -> vector<8x384xf32>
    %193 = vector.extract_strided_slice %191 {offsets = [0, 0], sizes = [8, 128], strides = [1, 1]} : vector<8x384xf32> to vector<8x128xf32>
    %194 = vector.extract_strided_slice %192 {offsets = [0, 0], sizes = [8, 128], strides = [1, 1]} : vector<8x384xf32> to vector<8x128xf32>
    %195 = arith.addf %193, %194 : vector<8x128xf32>
    %196 = arith.negf %195 : vector<8x128xf32>
    %197 = math.exp %196 : vector<8x128xf32>
    %cst_54 = arith.constant 1.000000e+00 : f32
    %198 = vector.broadcast %cst_54 : f32 to vector<8x128xf32>
    %199 = arith.addf %198, %197 : vector<8x128xf32>
    %200 = arith.divf %198, %199 : vector<8x128xf32>
    %201 = vector.extract_strided_slice %191 {offsets = [0, 128], sizes = [8, 128], strides = [1, 1]} : vector<8x384xf32> to vector<8x128xf32>
    %202 = vector.extract_strided_slice %192 {offsets = [0, 128], sizes = [8, 128], strides = [1, 1]} : vector<8x384xf32> to vector<8x128xf32>
    %203 = arith.addf %201, %202 : vector<8x128xf32>
    %204 = arith.negf %203 : vector<8x128xf32>
    %205 = math.exp %204 : vector<8x128xf32>
    %cst_55 = arith.constant 1.000000e+00 : f32
    %206 = vector.broadcast %cst_55 : f32 to vector<8x128xf32>
    %207 = arith.addf %206, %205 : vector<8x128xf32>
    %208 = arith.divf %206, %207 : vector<8x128xf32>
    %209 = vector.extract_strided_slice %191 {offsets = [0, 256], sizes = [8, 128], strides = [1, 1]} : vector<8x384xf32> to vector<8x128xf32>
    %210 = vector.extract_strided_slice %192 {offsets = [0, 256], sizes = [8, 128], strides = [1, 1]} : vector<8x384xf32> to vector<8x128xf32>
    %211 = arith.addf %210, %10 : vector<8x128xf32>
    %212 = arith.mulf %200, %211 : vector<8x128xf32>
    %213 = arith.addf %209, %212 : vector<8x128xf32>
    %214 = math.tanh %213 : vector<8x128xf32>
    %215 = arith.subf %182, %214 : vector<8x128xf32>
    %216 = arith.mulf %208, %215 : vector<8x128xf32>
    %217 = arith.addf %214, %216 : vector<8x128xf32>
    %218 = arith.index_cast %c5_i32 : i32 to index
    %c0_56 = arith.constant 0 : index
    %c0_57 = arith.constant 0 : index
    %219 = vector.load %arg7[%218, %c0_56, %c0_57] : memref<8x8x128xf32, #tpu.memory_space<vmem>>, vector<1x8x128xf32>
    %220 = vector.shape_cast %219 : vector<1x8x128xf32> to vector<8x128xf32>
    %221 = vector.shape_cast %217 : vector<8x128xf32> to vector<1x8x128xf32>
    tpu.vector_store %arg7[%218, %c0_56, %c0_57], %221 {strides = array<i32>} : memref<8x8x128xf32, #tpu.memory_space<vmem>>, vector<1x8x128xf32>,
    %c6_i32 = arith.constant 6 : i32
    %222 = arith.index_cast %c6_i32 : i32 to index
    %c0_58 = arith.constant 0 : index
    %c0_59 = arith.constant 0 : index
    %223 = vector.load %arg1[%222, %c0_58, %c0_59] : memref<8x8x32xf32, #tpu.memory_space<vmem>>, vector<1x8x32xf32>
    %224 = vector.shape_cast %223 : vector<1x8x32xf32> to vector<8x32xf32>
    %cst_60 = arith.constant dense<0.000000e+00> : vector<8x384xf32>
    %225 = tpu.matmul %224, %3, %cst_60 {dimension_numbers = #tpu.dot_dimension_numbers<[1], [0], [0], [1], [0, 0, 1, 1], [], []>} : vector<8x32xf32>, vector<32x384xf32>, vector<8x384xf32> -> vector<8x384xf32>
    %226 = arith.addf %225, %7 : vector<8x384xf32>
    %cst_61 = arith.constant dense<0.000000e+00> : vector<8x384xf32>
    %227 = tpu.matmul %217, %4, %cst_61 {dimension_numbers = #tpu.dot_dimension_numbers<[1], [0], [0], [1], [0, 0, 1, 1], [], []>} : vector<8x128xf32>, vector<128x384xf32>, vector<8x384xf32> -> vector<8x384xf32>
    %228 = vector.extract_strided_slice %226 {offsets = [0, 0], sizes = [8, 128], strides = [1, 1]} : vector<8x384xf32> to vector<8x128xf32>
    %229 = vector.extract_strided_slice %227 {offsets = [0, 0], sizes = [8, 128], strides = [1, 1]} : vector<8x384xf32> to vector<8x128xf32>
    %230 = arith.addf %228, %229 : vector<8x128xf32>
    %231 = arith.negf %230 : vector<8x128xf32>
    %232 = math.exp %231 : vector<8x128xf32>
    %cst_62 = arith.constant 1.000000e+00 : f32
    %233 = vector.broadcast %cst_62 : f32 to vector<8x128xf32>
    %234 = arith.addf %233, %232 : vector<8x128xf32>
    %235 = arith.divf %233, %234 : vector<8x128xf32>
    %236 = vector.extract_strided_slice %226 {offsets = [0, 128], sizes = [8, 128], strides = [1, 1]} : vector<8x384xf32> to vector<8x128xf32>
    %237 = vector.extract_strided_slice %227 {offsets = [0, 128], sizes = [8, 128], strides = [1, 1]} : vector<8x384xf32> to vector<8x128xf32>
    %238 = arith.addf %236, %237 : vector<8x128xf32>
    %239 = arith.negf %238 : vector<8x128xf32>
    %240 = math.exp %239 : vector<8x128xf32>
    %cst_63 = arith.constant 1.000000e+00 : f32
    %241 = vector.broadcast %cst_63 : f32 to vector<8x128xf32>
    %242 = arith.addf %241, %240 : vector<8x128xf32>
    %243 = arith.divf %241, %242 : vector<8x128xf32>
    %244 = vector.extract_strided_slice %226 {offsets = [0, 256], sizes = [8, 128], strides = [1, 1]} : vector<8x384xf32> to vector<8x128xf32>
    %245 = vector.extract_strided_slice %227 {offsets = [0, 256], sizes = [8, 128], strides = [1, 1]} : vector<8x384xf32> to vector<8x128xf32>
    %246 = arith.addf %245, %10 : vector<8x128xf32>
    %247 = arith.mulf %235, %246 : vector<8x128xf32>
    %248 = arith.addf %244, %247 : vector<8x128xf32>
    %249 = math.tanh %248 : vector<8x128xf32>
    %250 = arith.subf %217, %249 : vector<8x128xf32>
    %251 = arith.mulf %243, %250 : vector<8x128xf32>
    %252 = arith.addf %249, %251 : vector<8x128xf32>
    %253 = arith.index_cast %c6_i32 : i32 to index
    %c0_64 = arith.constant 0 : index
    %c0_65 = arith.constant 0 : index
    %254 = vector.load %arg7[%253, %c0_64, %c0_65] : memref<8x8x128xf32, #tpu.memory_space<vmem>>, vector<1x8x128xf32>
    %255 = vector.shape_cast %254 : vector<1x8x128xf32> to vector<8x128xf32>
    %256 = vector.shape_cast %252 : vector<8x128xf32> to vector<1x8x128xf32>
    tpu.vector_store %arg7[%253, %c0_64, %c0_65], %256 {strides = array<i32>} : memref<8x8x128xf32, #tpu.memory_space<vmem>>, vector<1x8x128xf32>,
    %c7_i32 = arith.constant 7 : i32
    %257 = arith.index_cast %c7_i32 : i32 to index
    %c0_66 = arith.constant 0 : index
    %c0_67 = arith.constant 0 : index
    %258 = vector.load %arg1[%257, %c0_66, %c0_67] : memref<8x8x32xf32, #tpu.memory_space<vmem>>, vector<1x8x32xf32>
    %259 = vector.shape_cast %258 : vector<1x8x32xf32> to vector<8x32xf32>
    %cst_68 = arith.constant dense<0.000000e+00> : vector<8x384xf32>
    %260 = tpu.matmul %259, %3, %cst_68 {dimension_numbers = #tpu.dot_dimension_numbers<[1], [0], [0], [1], [0, 0, 1, 1], [], []>} : vector<8x32xf32>, vector<32x384xf32>, vector<8x384xf32> -> vector<8x384xf32>
    %261 = arith.addf %260, %7 : vector<8x384xf32>
    %cst_69 = arith.constant dense<0.000000e+00> : vector<8x384xf32>
    %262 = tpu.matmul %252, %4, %cst_69 {dimension_numbers = #tpu.dot_dimension_numbers<[1], [0], [0], [1], [0, 0, 1, 1], [], []>} : vector<8x128xf32>, vector<128x384xf32>, vector<8x384xf32> -> vector<8x384xf32>
    %263 = vector.extract_strided_slice %261 {offsets = [0, 0], sizes = [8, 128], strides = [1, 1]} : vector<8x384xf32> to vector<8x128xf32>
    %264 = vector.extract_strided_slice %262 {offsets = [0, 0], sizes = [8, 128], strides = [1, 1]} : vector<8x384xf32> to vector<8x128xf32>
    %265 = arith.addf %263, %264 : vector<8x128xf32>
    %266 = arith.negf %265 : vector<8x128xf32>
    %267 = math.exp %266 : vector<8x128xf32>
    %cst_70 = arith.constant 1.000000e+00 : f32
    %268 = vector.broadcast %cst_70 : f32 to vector<8x128xf32>
    %269 = arith.addf %268, %267 : vector<8x128xf32>
    %270 = arith.divf %268, %269 : vector<8x128xf32>
    %271 = vector.extract_strided_slice %261 {offsets = [0, 128], sizes = [8, 128], strides = [1, 1]} : vector<8x384xf32> to vector<8x128xf32>
    %272 = vector.extract_strided_slice %262 {offsets = [0, 128], sizes = [8, 128], strides = [1, 1]} : vector<8x384xf32> to vector<8x128xf32>
    %273 = arith.addf %271, %272 : vector<8x128xf32>
    %274 = arith.negf %273 : vector<8x128xf32>
    %275 = math.exp %274 : vector<8x128xf32>
    %cst_71 = arith.constant 1.000000e+00 : f32
    %276 = vector.broadcast %cst_71 : f32 to vector<8x128xf32>
    %277 = arith.addf %276, %275 : vector<8x128xf32>
    %278 = arith.divf %276, %277 : vector<8x128xf32>
    %279 = vector.extract_strided_slice %261 {offsets = [0, 256], sizes = [8, 128], strides = [1, 1]} : vector<8x384xf32> to vector<8x128xf32>
    %280 = vector.extract_strided_slice %262 {offsets = [0, 256], sizes = [8, 128], strides = [1, 1]} : vector<8x384xf32> to vector<8x128xf32>
    %281 = arith.addf %280, %10 : vector<8x128xf32>
    %282 = arith.mulf %270, %281 : vector<8x128xf32>
    %283 = arith.addf %279, %282 : vector<8x128xf32>
    %284 = math.tanh %283 : vector<8x128xf32>
    %285 = arith.subf %252, %284 : vector<8x128xf32>
    %286 = arith.mulf %278, %285 : vector<8x128xf32>
    %287 = arith.addf %284, %286 : vector<8x128xf32>
    %288 = arith.index_cast %c7_i32 : i32 to index
    %c0_72 = arith.constant 0 : index
    %c0_73 = arith.constant 0 : index
    %289 = vector.load %arg7[%288, %c0_72, %c0_73] : memref<8x8x128xf32, #tpu.memory_space<vmem>>, vector<1x8x128xf32>
    %290 = vector.shape_cast %289 : vector<1x8x128xf32> to vector<8x128xf32>
    %291 = vector.shape_cast %287 : vector<8x128xf32> to vector<1x8x128xf32>
    tpu.vector_store %arg7[%288, %c0_72, %c0_73], %291 {strides = array<i32>} : memref<8x8x128xf32, #tpu.memory_space<vmem>>, vector<1x8x128xf32>,
    %c8_i32 = arith.constant 8 : i32
    %c0_74 = arith.constant 0 : index
    %c0_75 = arith.constant 0 : index
    %292 = vector.load %arg8[%c0_74, %c0_75] : memref<8x128xf32, #tpu.memory_space<vmem>>, vector<8x128xf32>
    tpu.vector_store %arg8[%c0_74, %c0_75], %287 {strides = array<i32>} : memref<8x128xf32, #tpu.memory_space<vmem>>, vector<8x128xf32>,
    return
  }
  func.func @transform_0(%arg0: i32) -> (i32, i32, i32) {
    %c0_i32 = arith.constant 0 : i32
    %c0_i32_0 = arith.constant 0 : i32
    %c0_i32_1 = arith.constant 0 : i32
    return %arg0, %c0_i32, %c0_i32_0 : i32, i32, i32
  }
  func.func @transform_1(%arg0: i32) -> (i32, i32) {
    %c0_i32 = arith.constant 0 : i32
    %c0_i32_0 = arith.constant 0 : i32
    %c0_i32_1 = arith.constant 0 : i32
    return %c0_i32, %c0_i32_0 : i32, i32
  }
  func.func @transform_2(%arg0: i32) -> (i32, i32) {
    %c0_i32 = arith.constant 0 : i32
    %c0_i32_0 = arith.constant 0 : i32
    %c0_i32_1 = arith.constant 0 : i32
    return %c0_i32, %c0_i32_0 : i32, i32
  }
  func.func @transform_3(%arg0: i32) -> (i32, i32) {
    %c0_i32 = arith.constant 0 : i32
    %c0_i32_0 = arith.constant 0 : i32
    %c0_i32_1 = arith.constant 0 : i32
    return %c0_i32, %c0_i32_0 : i32, i32
  }
  func.func @transform_4(%arg0: i32) -> (i32, i32) {
    %c0_i32 = arith.constant 0 : i32
    %c0_i32_0 = arith.constant 0 : i32
    %c0_i32_1 = arith.constant 0 : i32
    return %c0_i32, %c0_i32_0 : i32, i32
  }
  func.func @transform_5(%arg0: i32) -> (i32, i32) {
    %c0_i32 = arith.constant 0 : i32
    %c0_i32_0 = arith.constant 0 : i32
    %c0_i32_1 = arith.constant 0 : i32
    return %c0_i32, %c0_i32_0 : i32, i32
  }
  func.func @transform_6(%arg0: i32) -> (i32, i32, i32) {
    %c0_i32 = arith.constant 0 : i32
    %c0_i32_0 = arith.constant 0 : i32
    %c0_i32_1 = arith.constant 0 : i32
    return %arg0, %c0_i32, %c0_i32_0 : i32, i32, i32
  }
  func.func @transform_7(%arg0: i32) -> (i32, i32) {
    %c0_i32 = arith.constant 0 : i32
    %c0_i32_0 = arith.constant 0 : i32
    %c0_i32_1 = arith.constant 0 : i32
    return %c0_i32, %c0_i32_0 : i32, i32
  }
}

</mosaic_0001>

<llo_original>
// kernel: tpu_custom_call.1
$region0: #{tpu_custom_call.1}
  #allocation0 [shape = 'u32[]', space=smem, size = 0x4, offset = 0x4, fixed_abs, tag = 'smem constant byte address 0x4 - core index']
  #allocation1 [shape = 'u32[144,128]{1,0:T(1,128)}', space=vmem, size = 0x12000, scoped, tag = 'internal scratch']
  %s0 = inlined_call_operand.hbm [shape: f32[8,8,32], index: 0, kind: input, shape index: {}]
  %s1 = inlined_call_operand.hbm [shape: f32[8,128], index: 1, kind: input, shape index: {}]
  %s2 = inlined_call_operand.hbm [shape: f32[32,384], index: 2, kind: input, shape index: {}]
  %s3 = inlined_call_operand.hbm [shape: f32[128,384], index: 3, kind: input, shape index: {}]
  %s4 = inlined_call_operand.vmem [shape: f32[1,384], index: 4, kind: input, shape index: {}]
  %s5 = inlined_call_operand.vmem [shape: f32[1,128], index: 5, kind: input, shape index: {}]
  %s6 = inlined_call_operand.hbm [shape: f32[8,8,128], index: 6, kind: output, shape index: {0}]
  %s7 = inlined_call_operand.hbm [shape: f32[8,128], index: 7, kind: output, shape index: {1}]
  %8 = xla_tuple %s6, %s7
  %s9 = sld [smem:[#allocation0]]
  $region62: #{tpu_custom_call.1} parent=0
    _
  %s11 = ssub.s32 1, %s9
  %s12 = scalar_select 0, %s11, %s9
  $region1: #{tpu_custom_call.1} parent=0
    #allocation2 [shape = 'u8[32768]{0}', space=vmem, size = 0x8000, scoped, tag = 'input window, operand 0, single buffered']
    #allocation3 [shape = 's32[1]{0}', space=sflag, size = 0x4, scoped, tag = 'scoped memory for tpu_custom_call.1']
    #allocation4 [shape = 's32[1]{0}', space=sflag, size = 0x4, scoped, tag = 'scoped memory for tpu_custom_call.1']
    #allocation5 [shape = 'u8[4096]{0}', space=vmem, size = 0x1000, scoped, tag = 'input window, operand 1, single buffered']
    #allocation6 [shape = 's32[1]{0}', space=sflag, size = 0x4, scoped, tag = 'scoped memory for tpu_custom_call.1']
    #allocation7 [shape = 'u8[49152]{0}', space=vmem, size = 0xc000, scoped, tag = 'input window, operand 2, single buffered']
    #allocation8 [shape = 'u8[196608]{0}', space=vmem, size = 0x30000, scoped, tag = 'input window, operand 3, single buffered']
    #allocation9 [shape = 's32[1]{0}', space=sflag, size = 0x4, scoped, tag = 'scoped memory for tpu_custom_call.1']
    #allocation10 [shape = 'u8[32768]{0}', space=vmem, size = 0x8000, scoped, tag = 'output window, operand 0, single buffered']
    #allocation11 [shape = 'u8[4096]{0}', space=vmem, size = 0x1000, scoped, tag = 'output window, operand 1, single buffered']
    #allocation12 [shape = 's32[1]{0}', space=sflag, size = 0x4, scoped, tag = 'scoped memory for tpu_custom_call.1']
    %13 = vsyncpa [#allocation3], 0
    %14 = vsyncpa [#allocation6], 0
    %15 = vsyncpa [#allocation9], 0
    %16 = vsyncpa [#allocation4], 0
    %17 = vsyncpa [#allocation12], 0
    // Predicated region
    $region2: #{tpu_custom_call.1} parent=1 // pred_check
      _
    $region3: #{tpu_custom_call.1} parent=1 // pred_check_branch
      %19 = sbr.rel (0) target = $region5
    $region4: #{tpu_custom_call.1} parent=1 // pred_region
      %s21 = ssub.s32 1024, 1024
      %22 = vsyncadd [#allocation3], %s21
      %s23 = sshll.u32 [#allocation2], 4
      %s24 = int_to_ptr.vmem [resolvable:$true] %s23
      %29 = dma.hbm_to_vmem [thread:$0]  %s0, 1024, %s24, [#allocation3], 128, 128, 8
    $region5: #{tpu_custom_call.1} parent=1 // pred_fallthru
      _
    // Predicated region
    $region6: #{tpu_custom_call.1} parent=1 // pred_check
      _
    $region7: #{tpu_custom_call.1} parent=1 // pred_check_branch
      %31 = sbr.rel (0) target = $region9
    $region8: #{tpu_custom_call.1} parent=1 // pred_region
      %s33 = ssub.s32 128, 128
      %34 = vsyncadd [#allocation6], %s33
      %s36 = sshll.u32 [#allocation5], 4
      %s37 = int_to_ptr.vmem [resolvable:$true] %s36
      %39 = dma.hbm_to_vmem [thread:$0]  %s1, 128, %s37, [#allocation6]
    $region9: #{tpu_custom_call.1} parent=1 // pred_fallthru
      _
    // Predicated region
    $region10: #{tpu_custom_call.1} parent=1 // pred_check
      _
    $region11: #{tpu_custom_call.1} parent=1 // pred_check_branch
      %41 = sbr.rel (0) target = $region13
    $region12: #{tpu_custom_call.1} parent=1 // pred_region
      %s43 = ssub.s32 1536, 1536
      %44 = vsyncadd [#allocation6], %s43
      %s45 = sshll.u32 [#allocation7], 4
      %s46 = int_to_ptr.vmem [resolvable:$true] %s45
      %51 = dma.hbm_to_vmem [thread:$0]  %s2, 1536, %s46, [#allocation6], 384, 384, 24
    $region13: #{tpu_custom_call.1} parent=1 // pred_fallthru
      _
    // Predicated region
    $region14: #{tpu_custom_call.1} parent=1 // pred_check
      _
    $region15: #{tpu_custom_call.1} parent=1 // pred_check_branch
      %53 = sbr.rel (0) target = $region17
    $region16: #{tpu_custom_call.1} parent=1 // pred_region
      %s55 = ssub.s32 6144, 6144
      %56 = vsyncadd [#allocation9], %s55
      %s57 = sshll.u32 [#allocation8], 4
      %s58 = int_to_ptr.vmem [resolvable:$true] %s57
      %63 = dma.hbm_to_vmem [thread:$0]  %s3, 6144, %s58, [#allocation9], 384, 384, 24
    $region17: #{tpu_custom_call.1} parent=1 // pred_fallthru
      _
    // Predicated region
    $region18: #{tpu_custom_call.1} parent=1 // pred_check
      _
    $region19: #{tpu_custom_call.1} parent=1 // pred_check_branch
      %65 = sbr.rel (0) target = $region21
    $region20: #{tpu_custom_call.1} parent=1 // pred_region
      _
    $region21: #{tpu_custom_call.1} parent=1 // pred_fallthru
      _
    // Predicated region
    $region22: #{tpu_custom_call.1} parent=1 // pred_check
      _
    $region23: #{tpu_custom_call.1} parent=1 // pred_check_branch
      %67 = sbr.rel (0) target = $region25
    $region24: #{tpu_custom_call.1} parent=1 // pred_region
      _
    $region25: #{tpu_custom_call.1} parent=1 // pred_fallthru
      _
    // Predicated region
    $region26: #{tpu_custom_call.1} parent=1 // pred_check
      _
    $region27: #{tpu_custom_call.1} parent=1 // pred_check_branch
      %69 = sbr.rel (0) target = $region29
    $region28: #{tpu_custom_call.1} parent=1 // pred_region
      %70 = dma.done [#allocation3], 1024
    $region29: #{tpu_custom_call.1} parent=1 // pred_fallthru
      _
    // Predicated region
    $region30: #{tpu_custom_call.1} parent=1 // pred_check
      _
    $region31: #{tpu_custom_call.1} parent=1 // pred_check_branch
      %72 = sbr.rel (0) target = $region33
    $region32: #{tpu_custom_call.1} parent=1 // pred_region
      %73 = dma.done [#allocation6], 128
    $region33: #{tpu_custom_call.1} parent=1 // pred_fallthru
      _
    // Predicated region
    $region34: #{tpu_custom_call.1} parent=1 // pred_check
      _
    $region35: #{tpu_custom_call.1} parent=1 // pred_check_branch
      %75 = sbr.rel (0) target = $region37
    $region36: #{tpu_custom_call.1} parent=1 // pred_region
      %76 = dma.done [#allocation6], 1536
    $region37: #{tpu_custom_call.1} parent=1 // pred_fallthru
      _
    // Predicated region
    $region38: #{tpu_custom_call.1} parent=1 // pred_check
      _
    $region39: #{tpu_custom_call.1} parent=1 // pred_check_branch
      %78 = sbr.rel (0) target = $region41
    $region40: #{tpu_custom_call.1} parent=1 // pred_region
      %79 = dma.done [#allocation9], 6144
    $region41: #{tpu_custom_call.1} parent=1 // pred_fallthru
      _
    %p80 = scmp.eq.s32.totalorder 0, 0
    // Predicated region
    $region42: #{tpu_custom_call.1} parent=1 // pred_check
      %p81 = pneg %p80
    $region43: #{tpu_custom_call.1} parent=1 // pred_check_branch
      %83 = sbr.rel (%p81) target = $region45
    $region44: #{tpu_custom_call.1} parent=1 // pred_region
      %v84 = vld [vmem:[#allocation5] sm:$0xff]
      %85 = vst [vmem:[#allocation11] sm:$0xff] %v84
    $region45: #{tpu_custom_call.1} parent=1 // pred_fallthru
      _
    %v86 = vld [vmem:[#allocation7] sm:$0xff]
    %v87 = vld [vmem:[#allocation7 + $0x8] sm:$0xff]
    %v88 = vld [vmem:[#allocation7 + $0x10] sm:$0xff]
    %v89 = vld [vmem:[#allocation7 + $0x18] sm:$0xff]
    %v90 = vld [vmem:[#allocation7 + $0x20] sm:$0xff]
    %v91 = vld [vmem:[#allocation7 + $0x28] sm:$0xff]
    %v92 = vld [vmem:[#allocation7 + $0x30] sm:$0xff]
    %v93 = vld [vmem:[#allocation7 + $0x38] sm:$0xff]
    %v94 = vld [vmem:[#allocation7 + $0x40] sm:$0xff]
    %v95 = vld [vmem:[#allocation7 + $0x48] sm:$0xff]
    %v96 = vld [vmem:[#allocation7 + $0x50] sm:$0xff]
    %v97 = vld [vmem:[#allocation7 + $0x58] sm:$0xff]
    %v98 = vld [vmem:[#allocation8] sm:$0xff]
    %v99 = vld [vmem:[#allocation8 + $0x8] sm:$0xff]
    %v100 = vld [vmem:[#allocation8 + $0x10] sm:$0xff]
    %v101 = vld [vmem:[#allocation8 + $0x18] sm:$0xff]
    %v102 = vld [vmem:[#allocation8 + $0x20] sm:$0xff]
    %v103 = vld [vmem:[#allocation8 + $0x28] sm:$0xff]
    %v104 = vld [vmem:[#allocation8 + $0x30] sm:$0xff]
    %v105 = vld [vmem:[#allocation8 + $0x38] sm:$0xff]
    %v106 = vld [vmem:[#allocation8 + $0x40] sm:$0xff]
    %v107 = vld [vmem:[#allocation8 + $0x48] sm:$0xff]
    %v108 = vld [vmem:[#allocation8 + $0x50] sm:$0xff]
    %v109 = vld [vmem:[#allocation8 + $0x58] sm:$0xff]
    %v110 = vld [vmem:[#allocation8 + $0x60] sm:$0xff]
    %v111 = vld [vmem:[#allocation8 + $0x68] sm:$0xff]
    %v112 = vld [vmem:[#allocation8 + $0x70] sm:$0xff]
    %v113 = vld [vmem:[#allocation8 + $0x78] sm:$0xff]
    %v114 = vld [vmem:[#allocation8 + $0x80] sm:$0xff]
    %v115 = vld [vmem:[#allocation8 + $0x88] sm:$0xff]
    %v116 = vld [vmem:[#allocation8 + $0x90] sm:$0xff]
    %v117 = vld [vmem:[#allocation8 + $0x98] sm:$0xff]
    %v118 = vld [vmem:[#allocation8 + $0xa0] sm:$0xff]
    %v119 = vld [vmem:[#allocation8 + $0xa8] sm:$0xff]
    %v120 = vld [vmem:[#allocation8 + $0xb0] sm:$0xff]
    %v121 = vld [vmem:[#allocation8 + $0xb8] sm:$0xff]
    %v122 = vld [vmem:[#allocation8 + $0xc0] sm:$0xff]
    %v123 = vld [vmem:[#allocation8 + $0xc8] sm:$0xff]
    %v124 = vld [vmem:[#allocation8 + $0xd0] sm:$0xff]
    %v125 = vld [vmem:[#allocation8 + $0xd8] sm:$0xff]
    %v126 = vld [vmem:[#allocation8 + $0xe0] sm:$0xff]
    %v127 = vld [vmem:[#allocation8 + $0xe8] sm:$0xff]
    %v128 = vld [vmem:[#allocation8 + $0xf0] sm:$0xff]
    %v129 = vld [vmem:[#allocation8 + $0xf8] sm:$0xff]
    %v130 = vld [vmem:[#allocation8 + $0x100] sm:$0xff]
    %v131 = vld [vmem:[#allocation8 + $0x108] sm:$0xff]
    %v132 = vld [vmem:[#allocation8 + $0x110] sm:$0xff]
    %v133 = vld [vmem:[#allocation8 + $0x118] sm:$0xff]
    %v134 = vld [vmem:[#allocation8 + $0x120] sm:$0xff]
    %v135 = vld [vmem:[#allocation8 + $0x128] sm:$0xff]
    %v136 = vld [vmem:[#allocation8 + $0x130] sm:$0xff]
    %v137 = vld [vmem:[#allocation8 + $0x138] sm:$0xff]
    %v138 = vld [vmem:[#allocation8 + $0x140] sm:$0xff]
    %v139 = vld [vmem:[#allocation8 + $0x148] sm:$0xff]
    %v140 = vld [vmem:[#allocation8 + $0x150] sm:$0xff]
    %v141 = vld [vmem:[#allocation8 + $0x158] sm:$0xff]
    %v142 = vld [vmem:[#allocation8 + $0x160] sm:$0xff]
    %v143 = vld [vmem:[#allocation8 + $0x168] sm:$0xff]
    %v144 = vld [vmem:[#allocation8 + $0x170] sm:$0xff]
    %v145 = vld [vmem:[#allocation8 + $0x178] sm:$0xff]
    %v146 = vld [vmem:[%s4] sm:$0x7]
    %v148 = vlaneseq
    %v149 = vshrl.u32 %v148, 7
    %v150 = vsub.s32 0, %v149
    %v151 = vrot.slane %v146, %v150
    %v152 = vlaneseq
    %v153 = vshrl.u32 %v152, 7
    %v154 = vsub.s32 1, %v153
    %v155 = vrot.slane %v146, %v154
    %v156 = vlaneseq
    %v157 = vshrl.u32 %v156, 7
    %v158 = vsub.s32 2, %v157
    %v159 = vrot.slane %v146, %v158
    %v163 = vld [vmem:[%s5] sm:$0x1]
    %v165 = vlaneseq
    %v166 = vshrl.u32 %v165, 7
    %v167 = vsub.s32 0, %v166
    %v168 = vrot.slane %v163, %v167
    %v170 = vld [vmem:[#allocation11] sm:$0xff]
    %v171 = vld [vmem:[#allocation2] sm:$0xff]
    %vm172 = vcmask 261120
    %v174 = vsel %vm172, %v171, 0
    %176 = vmatprep.subr.mxu0 %v87
    %177 = vmatpush1.msra.mxu0 %v86
    %178 = vmatprep.subr.mxu0 %v90
    %179 = vmatpush1.msra.mxu0 %v89
    %180 = vmatprep.subr.mxu0 %v93
    %181 = vmatpush1.msra.mxu0 %v92
    %182 = vmatprep.subr.mxu0 %v96
    %183 = vmatpush1.msra.mxu0 %v95
    %184 = vmatprep.subr.mxu0 0.0
    %185 = vmatpush1.msra.mxu0 0.0
    %186 = vmatprep.subr.mxu0 0.0
    %187 = vmatpush1.msra.mxu0 0.0
    %188 = vmatprep.subr.mxu0 0.0
    %189 = vmatpush1.msra.mxu0 0.0
    %190 = vmatprep.subr.mxu0 0.0
    %191 = vmatpush1.msra.mxu0 0.0
    %192 = vmatprep.subr.mxu0 0.0
    %193 = vmatpush1.msra.mxu0 0.0
    %194 = vmatprep.subr.mxu0 0.0
    %195 = vmatpush1.msra.mxu0 0.0
    %196 = vmatprep.subr.mxu0 0.0
    %197 = vmatpush1.msra.mxu0 0.0
    %198 = vmatprep.subr.mxu0 0.0
    %199 = vmatpush1.msra.mxu0 0.0
    %200 = vmatprep.subr.mxu0 0.0
    %201 = vmatpush1.msra.mxu0 0.0
    %202 = vmatprep.subr.mxu0 0.0
    %203 = vmatpush1.msra.mxu0 0.0
    %204 = vmatprep.subr.mxu0 0.0
    %205 = vmatpush1.msra.mxu0 0.0
    %206 = vmatprep.subr.mxu0 0.0
    %207 = vmatpush1.msra.mxu0 0.0
    %208 = vmatprep.subr.mxu0 0.0
    %209 = vmatpush1.msra.mxu0 0.0
    %210 = vmatprep.subr.mxu0 0.0
    %211 = vmatpush1.msra.mxu0 0.0
    %212 = vmatprep.subr.mxu0 0.0
    %213 = vmatpush1.msra.mxu0 0.0
    %214 = vmatprep.subr.mxu0 0.0
    %215 = vmatpush1.msra.mxu0 0.0
    %216 = vmatprep.subr.mxu0 0.0
    %217 = vmatpush1.msra.mxu0 0.0
    %218 = vmatprep.subr.mxu0 0.0
    %219 = vmatpush1.msra.mxu0 0.0
    %220 = vmatprep.subr.mxu0 0.0
    %221 = vmatpush1.msra.mxu0 0.0
    %222 = vmatprep.subr.mxu0 0.0
    %223 = vmatpush1.msra.mxu0 0.0
    %224 = vmatprep.subr.mxu0 0.0
    %225 = vmatpush1.msra.mxu0 0.0
    %226 = vmatprep.subr.mxu0 0.0
    %227 = vmatpush1.msra.mxu0 0.0
    %228 = vmatprep.subr.mxu0 0.0
    %229 = vmatpush1.msra.mxu0 0.0
    %230 = vmatprep.subr.mxu0 0.0
    %231 = vmatpush1.msra.mxu0 0.0
    %232 = vmatprep.subr.mxu0 0.0
    %233 = vmatpush1.msra.mxu0 0.0
    %234 = vmatprep.subr.mxu0 0.0
    %235 = vmatpush1.msra.mxu0 0.0
    %236 = vmatprep.subr.mxu0 0.0
    %237 = vmatpush1.msra.mxu0 0.0
    %238 = vmatprep.subr.mxu0 0.0
    %239 = vmatpush1.msra.mxu0 0.0
    %240 = vmatprep.mubr.f32.mxu0 0.0
    %241 = vmatmul.mubr.f32.gmra.mrb[0].mxu0 %v174
    %v242 = vpop.f32.mrb[0].mxu0
    %v243 = vadd.f32 %v151, %v242
    %v244 = vpop.f32.mrb[0].mxu0
    %v245 = vadd.f32 %v155, %v244
    %246 = vdwg.mxu0
    %247 = vmatprep.subr.mxu0 0.0
    %248 = vmatpush1.msra.mxu0 %v88
    %249 = vmatprep.subr.mxu0 0.0
    %250 = vmatpush1.msra.mxu0 %v91
    %251 = vmatprep.subr.mxu0 0.0
    %252 = vmatpush1.msra.mxu0 %v94
    %253 = vmatprep.subr.mxu0 0.0
    %254 = vmatpush1.msra.mxu0 %v97
    %255 = vmatprep.subr.mxu0 0.0
    %256 = vmatpush1.msra.mxu0 0.0
    %257 = vmatprep.subr.mxu0 0.0
    %258 = vmatpush1.msra.mxu0 0.0
    %259 = vmatprep.subr.mxu0 0.0
    %260 = vmatpush1.msra.mxu0 0.0
    %261 = vmatprep.subr.mxu0 0.0
    %262 = vmatpush1.msra.mxu0 0.0
    %263 = vmatprep.subr.mxu0 0.0
    %264 = vmatpush1.msra.mxu0 0.0
    %265 = vmatprep.subr.mxu0 0.0
    %266 = vmatpush1.msra.mxu0 0.0
    %267 = vmatprep.subr.mxu0 0.0
    %268 = vmatpush1.msra.mxu0 0.0
    %269 = vmatprep.subr.mxu0 0.0
    %270 = vmatpush1.msra.mxu0 0.0
    %271 = vmatprep.subr.mxu0 0.0
    %272 = vmatpush1.msra.mxu0 0.0
    %273 = vmatprep.subr.mxu0 0.0
    %274 = vmatpush1.msra.mxu0 0.0
    %275 = vmatprep.subr.mxu0 0.0
    %276 = vmatpush1.msra.mxu0 0.0
    %277 = vmatprep.subr.mxu0 0.0
    %278 = vmatpush1.msra.mxu0 0.0
    %279 = vmatprep.subr.mxu0 0.0
    %280 = vmatpush1.msra.mxu0 0.0
    %281 = vmatprep.subr.mxu0 0.0
    %282 = vmatpush1.msra.mxu0 0.0
    %283 = vmatprep.subr.mxu0 0.0
    %284 = vmatpush1.msra.mxu0 0.0
    %285 = vmatprep.subr.mxu0 0.0
    %286 = vmatpush1.msra.mxu0 0.0
    %287 = vmatprep.subr.mxu0 0.0
    %288 = vmatpush1.msra.mxu0 0.0
    %289 = vmatprep.subr.mxu0 0.0
    %290 = vmatpush1.msra.mxu0 0.0
    %291 = vmatprep.subr.mxu0 0.0
    %292 = vmatpush1.msra.mxu0 0.0
    %293 = vmatprep.subr.mxu0 0.0
    %294 = vmatpush1.msra.mxu0 0.0
    %295 = vmatprep.subr.mxu0 0.0
    %296 = vmatpush1.msra.mxu0 0.0
    %297 = vmatprep.subr.mxu0 0.0
    %298 = vmatpush1.msra.mxu0 0.0
    %299 = vmatprep.subr.mxu0 0.0
    %300 = vmatpush1.msra.mxu0 0.0
    %301 = vmatprep.subr.mxu0 0.0
    %302 = vmatpush1.msra.mxu0 0.0
    %303 = vmatprep.subr.mxu0 0.0
    %304 = vmatpush1.msra.mxu0 0.0
    %305 = vmatprep.subr.mxu0 0.0
    %306 = vmatpush1.msra.mxu0 0.0
    %307 = vmatprep.subr.mxu0 0.0
    %308 = vmatpush1.msra.mxu0 0.0
    %309 = vmatprep.subr.mxu0 0.0
    %310 = vmatpush1.msra.mxu0 0.0
    %311 = vmatprep.mubr.f32.mxu0 0.0
    %312 = vmatmul.mubr.f32.gmra.mrb[0].mxu0 %v174
    %v313 = vpop.f32.mrb[0].mxu0
    %v314 = vadd.f32 %v159, %v313
    %v315 = vpop.f32.mrb[0].mxu0
    %316 = vdwg.mxu0
    %317 = vmatprep.subr.mxu0 %v99
    %318 = vmatpush1.msra.mxu0 %v98
    %319 = vmatprep.subr.mxu0 %v102
    %320 = vmatpush1.msra.mxu0 %v101
    %321 = vmatprep.subr.mxu0 %v105
    %322 = vmatpush1.msra.mxu0 %v104
    %323 = vmatprep.subr.mxu0 %v108
    %324 = vmatpush1.msra.mxu0 %v107
    %325 = vmatprep.subr.mxu0 %v111
    %326 = vmatpush1.msra.mxu0 %v110
    %327 = vmatprep.subr.mxu0 %v114
    %328 = vmatpush1.msra.mxu0 %v113
    %329 = vmatprep.subr.mxu0 %v117
    %330 = vmatpush1.msra.mxu0 %v116
    %331 = vmatprep.subr.mxu0 %v120
    %332 = vmatpush1.msra.mxu0 %v119
    %333 = vmatprep.subr.mxu0 %v123
    %334 = vmatpush1.msra.mxu0 %v122
    %335 = vmatprep.subr.mxu0 %v126
    %336 = vmatpush1.msra.mxu0 %v125
    %337 = vmatprep.subr.mxu0 %v129
    %338 = vmatpush1.msra.mxu0 %v128
    %339 = vmatprep.subr.mxu0 %v132
    %340 = vmatpush1.msra.mxu0 %v131
    %341 = vmatprep.subr.mxu0 %v135
    %342 = vmatpush1.msra.mxu0 %v134
    %343 = vmatprep.subr.mxu0 %v138
    %344 = vmatpush1.msra.mxu0 %v137
    %345 = vmatprep.subr.mxu0 %v141
    %346 = vmatpush1.msra.mxu0 %v140
    %347 = vmatprep.subr.mxu0 %v144
    %348 = vmatpush1.msra.mxu0 %v143
    %349 = vmatprep.subr.mxu0 0.0
    %350 = vmatpush1.msra.mxu0 0.0
    %351 = vmatprep.subr.mxu0 0.0
    %352 = vmatpush1.msra.mxu0 0.0
    %353 = vmatprep.subr.mxu0 0.0
    %354 = vmatpush1.msra.mxu0 0.0
    %355 = vmatprep.subr.mxu0 0.0
    %356 = vmatpush1.msra.mxu0 0.0
    %357 = vmatprep.subr.mxu0 0.0
    %358 = vmatpush1.msra.mxu0 0.0
    %359 = vmatprep.subr.mxu0 0.0
    %360 = vmatpush1.msra.mxu0 0.0
    %361 = vmatprep.subr.mxu0 0.0
    %362 = vmatpush1.msra.mxu0 0.0
    %363 = vmatprep.subr.mxu0 0.0
    %364 = vmatpush1.msra.mxu0 0.0
    %365 = vmatprep.subr.mxu0 0.0
    %366 = vmatpush1.msra.mxu0 0.0
    %367 = vmatprep.subr.mxu0 0.0
    %368 = vmatpush1.msra.mxu0 0.0
    %369 = vmatprep.subr.mxu0 0.0
    %370 = vmatpush1.msra.mxu0 0.0
    %371 = vmatprep.subr.mxu0 0.0
    %372 = vmatpush1.msra.mxu0 0.0
    %373 = vmatprep.subr.mxu0 0.0
    %374 = vmatpush1.msra.mxu0 0.0
    %375 = vmatprep.subr.mxu0 0.0
    %376 = vmatpush1.msra.mxu0 0.0
    %377 = vmatprep.subr.mxu0 0.0
    %378 = vmatpush1.msra.mxu0 0.0
    %379 = vmatprep.subr.mxu0 0.0
    %380 = vmatpush1.msra.mxu0 0.0
    %381 = vmatprep.mubr.f32.mxu0 0.0
    %382 = vmatmul.mubr.f32.gmra.mrb[0].mxu0 %v170
    %v383 = vpop.f32.mrb[0].mxu0
    %v384 = vadd.f32 0.0, %v383
    %v385 = vpop.f32.mrb[0].mxu0
    %v386 = vadd.f32 0.0, %v385
    %387 = vdwg.mxu0
    %388 = vmatprep.subr.mxu0 0.0
    %389 = vmatpush1.msra.mxu0 %v100
    %390 = vmatprep.subr.mxu0 0.0
    %391 = vmatpush1.msra.mxu0 %v103
    %392 = vmatprep.subr.mxu0 0.0
    %393 = vmatpush1.msra.mxu0 %v106
    %394 = vmatprep.subr.mxu0 0.0
    %395 = vmatpush1.msra.mxu0 %v109
    %396 = vmatprep.subr.mxu0 0.0
    %397 = vmatpush1.msra.mxu0 %v112
    %398 = vmatprep.subr.mxu0 0.0
    %399 = vmatpush1.msra.mxu0 %v115
    %400 = vmatprep.subr.mxu0 0.0
    %401 = vmatpush1.msra.mxu0 %v118
    %402 = vmatprep.subr.mxu0 0.0
    %403 = vmatpush1.msra.mxu0 %v121
    %404 = vmatprep.subr.mxu0 0.0
    %405 = vmatpush1.msra.mxu0 %v124
    %406 = vmatprep.subr.mxu0 0.0
    %407 = vmatpush1.msra.mxu0 %v127
    %408 = vmatprep.subr.mxu0 0.0
    %409 = vmatpush1.msra.mxu0 %v130
    %410 = vmatprep.subr.mxu0 0.0
    %411 = vmatpush1.msra.mxu0 %v133
    %412 = vmatprep.subr.mxu0 0.0
    %413 = vmatpush1.msra.mxu0 %v136
    %414 = vmatprep.subr.mxu0 0.0
    %415 = vmatpush1.msra.mxu0 %v139
    %416 = vmatprep.subr.mxu0 0.0
    %417 = vmatpush1.msra.mxu0 %v142
    %418 = vmatprep.subr.mxu0 0.0
    %419 = vmatpush1.msra.mxu0 %v145
    %420 = vmatprep.subr.mxu0 0.0
    %421 = vmatpush1.msra.mxu0 0.0
    %422 = vmatprep.subr.mxu0 0.0
    %423 = vmatpush1.msra.mxu0 0.0
    %424 = vmatprep.subr.mxu0 0.0
    %425 = vmatpush1.msra.mxu0 0.0
    %426 = vmatprep.subr.mxu0 0.0
    %427 = vmatpush1.msra.mxu0 0.0
    %428 = vmatprep.subr.mxu0 0.0
    %429 = vmatpush1.msra.mxu0 0.0
    %430 = vmatprep.subr.mxu0 0.0
    %431 = vmatpush1.msra.mxu0 0.0
    %432 = vmatprep.subr.mxu0 0.0
    %433 = vmatpush1.msra.mxu0 0.0
    %434 = vmatprep.subr.mxu0 0.0
    %435 = vmatpush1.msra.mxu0 0.0
    %436 = vmatprep.subr.mxu0 0.0
    %437 = vmatpush1.msra.mxu0 0.0
    %438 = vmatprep.subr.mxu0 0.0
    %439 = vmatpush1.msra.mxu0 0.0
    %440 = vmatprep.subr.mxu0 0.0
    %441 = vmatpush1.msra.mxu0 0.0
    %442 = vmatprep.subr.mxu0 0.0
    %443 = vmatpush1.msra.mxu0 0.0
    %444 = vmatprep.subr.mxu0 0.0
    %445 = vmatpush1.msra.mxu0 0.0
    %446 = vmatprep.subr.mxu0 0.0
    %447 = vmatpush1.msra.mxu0 0.0
    %448 = vmatprep.subr.mxu0 0.0
    %449 = vmatpush1.msra.mxu0 0.0
    %450 = vmatprep.subr.mxu0 0.0
    %451 = vmatpush1.msra.mxu0 0.0
    %452 = vmatprep.mubr.f32.mxu0 0.0
    %453 = vmatmul.mubr.f32.gmra.mrb[0].mxu0 %v170
    %v454 = vpop.f32.mrb[0].mxu0
    %v455 = vadd.f32 0.0, %v454
    %v456 = vpop.f32.mrb[0].mxu0
    %457 = vdwg.mxu0
    %v458 = vadd.f32 %v243, %v384
    %v459 = vxor.u32 %v458, 2147483648
    %v460 = vmul.f32 %v459, 1.442695
    %v461 = vpow.pop %v460
    %v462 = vadd.f32 %v461, 1.0
    %v463 = vrcp.pop %v462
    %v464 = vmul.f32 1.0, %v463
    %v465 = vadd.f32 %v245, %v386
    %v466 = vxor.u32 %v465, 2147483648
    %v467 = vmul.f32 %v466, 1.442695
    %v468 = vpow.pop %v467
    %v469 = vadd.f32 %v468, 1.0
    %v470 = vrcp.pop %v469
    %v471 = vmul.f32 1.0, %v470
    %v472 = vadd.f32 %v455, %v168
    %v473 = vmul.f32 %v464, %v472
    %v474 = vadd.f32 %v314, %v473
    %v475 = vtanh.pop %v474
    %v476 = vsub.f32 %v170, %v475
    %v477 = vmul.f32 %v471, %v476
    %v478 = vadd.f32 %v475, %v477
    %479 = vst [vmem:[#allocation10] sm:$0xff] %v478
    %s480 = scalar_lea.vmem [#allocation2], 8
    %v481 = vld [vmem:[%s480] sm:$0xff]
    %v483 = vsel %vm172, %v481, 0
    %485 = vmatprep.subr.mxu0 %v87
    %486 = vmatpush1.msra.mxu0 %v86
    %487 = vmatprep.subr.mxu0 %v90
    %488 = vmatpush1.msra.mxu0 %v89
    %489 = vmatprep.subr.mxu0 %v93
    %490 = vmatpush1.msra.mxu0 %v92
    %491 = vmatprep.subr.mxu0 %v96
    %492 = vmatpush1.msra.mxu0 %v95
    %493 = vmatprep.subr.mxu0 0.0
    %494 = vmatpush1.msra.mxu0 0.0
    %495 = vmatprep.subr.mxu0 0.0
    %496 = vmatpush1.msra.mxu0 0.0
    %497 = vmatprep.subr.mxu0 0.0
    %498 = vmatpush1.msra.mxu0 0.0
    %499 = vmatprep.subr.mxu0 0.0
    %500 = vmatpush1.msra.mxu0 0.0
    %501 = vmatprep.subr.mxu0 0.0
    %502 = vmatpush1.msra.mxu0 0.0
    %503 = vmatprep.subr.mxu0 0.0
    %504 = vmatpush1.msra.mxu0 0.0
    %505 = vmatprep.subr.mxu0 0.0
    %506 = vmatpush1.msra.mxu0 0.0
    %507 = vmatprep.subr.mxu0 0.0
    %508 = vmatpush1.msra.mxu0 0.0
    %509 = vmatprep.subr.mxu0 0.0
    %510 = vmatpush1.msra.mxu0 0.0
    %511 = vmatprep.subr.mxu0 0.0
    %512 = vmatpush1.msra.mxu0 0.0
    %513 = vmatprep.subr.mxu0 0.0
    %514 = vmatpush1.msra.mxu0 0.0
    %515 = vmatprep.subr.mxu0 0.0
    %516 = vmatpush1.msra.mxu0 0.0
    %517 = vmatprep.subr.mxu0 0.0
    %518 = vmatpush1.msra.mxu0 0.0
    %519 = vmatprep.subr.mxu0 0.0
    %520 = vmatpush1.msra.mxu0 0.0
    %521 = vmatprep.subr.mxu0 0.0
    %522 = vmatpush1.msra.mxu0 0.0
    %523 = vmatprep.subr.mxu0 0.0
    %524 = vmatpush1.msra.mxu0 0.0
    %525 = vmatprep.subr.mxu0 0.0
    %526 = vmatpush1.msra.mxu0 0.0
    %527 = vmatprep.subr.mxu0 0.0
    %528 = vmatpush1.msra.mxu0 0.0
    %529 = vmatprep.subr.mxu0 0.0
    %530 = vmatpush1.msra.mxu0 0.0
    %531 = vmatprep.subr.mxu0 0.0
    %532 = vmatpush1.msra.mxu0 0.0
    %533 = vmatprep.subr.mxu0 0.0
    %534 = vmatpush1.msra.mxu0 0.0
    %535 = vmatprep.subr.mxu0 0.0
    %536 = vmatpush1.msra.mxu0 0.0
    %537 = vmatprep.subr.mxu0 0.0
    %538 = vmatpush1.msra.mxu0 0.0
    %539 = vmatprep.subr.mxu0 0.0
    %540 = vmatpush1.msra.mxu0 0.0
    %541 = vmatprep.subr.mxu0 0.0
    %542 = vmatpush1.msra.mxu0 0.0
    %543 = vmatprep.subr.mxu0 0.0
    %544 = vmatpush1.msra.mxu0 0.0
    %545 = vmatprep.subr.mxu0 0.0
    %546 = vmatpush1.msra.mxu0 0.0
    %547 = vmatprep.subr.mxu0 0.0
    %548 = vmatpush1.msra.mxu0 0.0
    %549 = vmatprep.mubr.f32.mxu0 0.0
    %550 = vmatmul.mubr.f32.gmra.mrb[0].mxu0 %v483
    %v551 = vpop.f32.mrb[0].mxu0
    %v552 = vadd.f32 %v151, %v551
    %v553 = vpop.f32.mrb[0].mxu0
    %v554 = vadd.f32 %v155, %v553
    %555 = vdwg.mxu0
    %556 = vmatprep.subr.mxu0 0.0
    %557 = vmatpush1.msra.mxu0 %v88
    %558 = vmatprep.subr.mxu0 0.0
    %559 = vmatpush1.msra.mxu0 %v91
    %560 = vmatprep.subr.mxu0 0.0
    %561 = vmatpush1.msra.mxu0 %v94
    %562 = vmatprep.subr.mxu0 0.0
    %563 = vmatpush1.msra.mxu0 %v97
    %564 = vmatprep.subr.mxu0 0.0
    %565 = vmatpush1.msra.mxu0 0.0
    %566 = vmatprep.subr.mxu0 0.0
    %567 = vmatpush1.msra.mxu0 0.0
    %568 = vmatprep.subr.mxu0 0.0
    %569 = vmatpush1.msra.mxu0 0.0
    %570 = vmatprep.subr.mxu0 0.0
    %571 = vmatpush1.msra.mxu0 0.0
    %572 = vmatprep.subr.mxu0 0.0
    %573 = vmatpush1.msra.mxu0 0.0
    %574 = vmatprep.subr.mxu0 0.0
    %575 = vmatpush1.msra.mxu0 0.0
    %576 = vmatprep.subr.mxu0 0.0
    %577 = vmatpush1.msra.mxu0 0.0
    %578 = vmatprep.subr.mxu0 0.0
    %579 = vmatpush1.msra.mxu0 0.0
    %580 = vmatprep.subr.mxu0 0.0
    %581 = vmatpush1.msra.mxu0 0.0
    %582 = vmatprep.subr.mxu0 0.0
    %583 = vmatpush1.msra.mxu0 0.0
    %584 = vmatprep.subr.mxu0 0.0
    %585 = vmatpush1.msra.mxu0 0.0
    %586 = vmatprep.subr.mxu0 0.0
    %587 = vmatpush1.msra.mxu0 0.0
    %588 = vmatprep.subr.mxu0 0.0
    %589 = vmatpush1.msra.mxu0 0.0
    %590 = vmatprep.subr.mxu0 0.0
    %591 = vmatpush1.msra.mxu0 0.0
    %592 = vmatprep.subr.mxu0 0.0
    %593 = vmatpush1.msra.mxu0 0.0
    %594 = vmatprep.subr.mxu0 0.0
    %595 = vmatpush1.msra.mxu0 0.0
    %596 = vmatprep.subr.mxu0 0.0
    %597 = vmatpush1.msra.mxu0 0.0
    %598 = vmatprep.subr.mxu0 0.0
    %599 = vmatpush1.msra.mxu0 0.0
    %600 = vmatprep.subr.mxu0 0.0
    %601 = vmatpush1.msra.mxu0 0.0
    %602 = vmatprep.subr.mxu0 0.0
    %603 = vmatpush1.msra.mxu0 0.0
    %604 = vmatprep.subr.mxu0 0.0
    %605 = vmatpush1.msra.mxu0 0.0
    %606 = vmatprep.subr.mxu0 0.0
    %607 = vmatpush1.msra.mxu0 0.0
    %608 = vmatprep.subr.mxu0 0.0
    %609 = vmatpush1.msra.mxu0 0.0
    %610 = vmatprep.subr.mxu0 0.0
    %611 = vmatpush1.msra.mxu0 0.0
    %612 = vmatprep.subr.mxu0 0.0
    %613 = vmatpush1.msra.mxu0 0.0
    %614 = vmatprep.subr.mxu0 0.0
    %615 = vmatpush1.msra.mxu0 0.0
    %616 = vmatprep.subr.mxu0 0.0
    %617 = vmatpush1.msra.mxu0 0.0
    %618 = vmatprep.subr.mxu0 0.0
    %619 = vmatpush1.msra.mxu0 0.0
    %620 = vmatprep.mubr.f32.mxu0 0.0
    %621 = vmatmul.mubr.f32.gmra.mrb[0].mxu0 %v483
    %v622 = vpop.f32.mrb[0].mxu0
    %v623 = vadd.f32 %v159, %v622
    %v624 = vpop.f32.mrb[0].mxu0
    %625 = vdwg.mxu0
    %626 = vmatprep.subr.mxu0 %v99
    %627 = vmatpush1.msra.mxu0 %v98
    %628 = vmatprep.subr.mxu0 %v102
    %629 = vmatpush1.msra.mxu0 %v101
    %630 = vmatprep.subr.mxu0 %v105
    %631 = vmatpush1.msra.mxu0 %v104
    %632 = vmatprep.subr.mxu0 %v108
    %633 = vmatpush1.msra.mxu0 %v107
    %634 = vmatprep.subr.mxu0 %v111
    %635 = vmatpush1.msra.mxu0 %v110
    %636 = vmatprep.subr.mxu0 %v114
    %637 = vmatpush1.msra.mxu0 %v113
    %638 = vmatprep.subr.mxu0 %v117
    %639 = vmatpush1.msra.mxu0 %v116
    %640 = vmatprep.subr.mxu0 %v120
    %641 = vmatpush1.msra.mxu0 %v119
    %642 = vmatprep.subr.mxu0 %v123
    %643 = vmatpush1.msra.mxu0 %v122
    %644 = vmatprep.subr.mxu0 %v126
    %645 = vmatpush1.msra.mxu0 %v125
    %646 = vmatprep.subr.mxu0 %v129
    %647 = vmatpush1.msra.mxu0 %v128
    %648 = vmatprep.subr.mxu0 %v132
    %649 = vmatpush1.msra.mxu0 %v131
    %650 = vmatprep.subr.mxu0 %v135
    %651 = vmatpush1.msra.mxu0 %v134
    %652 = vmatprep.subr.mxu0 %v138
    %653 = vmatpush1.msra.mxu0 %v137
    %654 = vmatprep.subr.mxu0 %v141
    %655 = vmatpush1.msra.mxu0 %v140
    %656 = vmatprep.subr.mxu0 %v144
    %657 = vmatpush1.msra.mxu0 %v143
    %658 = vmatprep.subr.mxu0 0.0
    %659 = vmatpush1.msra.mxu0 0.0
    %660 = vmatprep.subr.mxu0 0.0
    %661 = vmatpush1.msra.mxu0 0.0
    %662 = vmatprep.subr.mxu0 0.0
    %663 = vmatpush1.msra.mxu0 0.0
    %664 = vmatprep.subr.mxu0 0.0
    %665 = vmatpush1.msra.mxu0 0.0
    %666 = vmatprep.subr.mxu0 0.0
    %667 = vmatpush1.msra.mxu0 0.0
    %668 = vmatprep.subr.mxu0 0.0
    %669 = vmatpush1.msra.mxu0 0.0
    %670 = vmatprep.subr.mxu0 0.0
    %671 = vmatpush1.msra.mxu0 0.0
    %672 = vmatprep.subr.mxu0 0.0
    %673 = vmatpush1.msra.mxu0 0.0
    %674 = vmatprep.subr.mxu0 0.0
    %675 = vmatpush1.msra.mxu0 0.0
    %676 = vmatprep.subr.mxu0 0.0
    %677 = vmatpush1.msra.mxu0 0.0
    %678 = vmatprep.subr.mxu0 0.0
    %679 = vmatpush1.msra.mxu0 0.0
    %680 = vmatprep.subr.mxu0 0.0
    %681 = vmatpush1.msra.mxu0 0.0
    %682 = vmatprep.subr.mxu0 0.0
    %683 = vmatpush1.msra.mxu0 0.0
    %684 = vmatprep.subr.mxu0 0.0
    %685 = vmatpush1.msra.mxu0 0.0
    %686 = vmatprep.subr.mxu0 0.0
    %687 = vmatpush1.msra.mxu0 0.0
    %688 = vmatprep.subr.mxu0 0.0
    %689 = vmatpush1.msra.mxu0 0.0
    %690 = vmatprep.mubr.f32.mxu0 0.0
    %691 = vmatmul.mubr.f32.gmra.mrb[0].mxu0 %v478
    %v692 = vpop.f32.mrb[0].mxu0
    %v693 = vadd.f32 0.0, %v692
    %v694 = vpop.f32.mrb[0].mxu0
    %v695 = vadd.f32 0.0, %v694
    %696 = vdwg.mxu0
    %697 = vmatprep.subr.mxu0 0.0
    %698 = vmatpush1.msra.mxu0 %v100
    %699 = vmatprep.subr.mxu0 0.0
    %700 = vmatpush1.msra.mxu0 %v103
    %701 = vmatprep.subr.mxu0 0.0
    %702 = vmatpush1.msra.mxu0 %v106
    %703 = vmatprep.subr.mxu0 0.0
    %704 = vmatpush1.msra.mxu0 %v109
    %705 = vmatprep.subr.mxu0 0.0
    %706 = vmatpush1.msra.mxu0 %v112
    %707 = vmatprep.subr.mxu0 0.0
    %708 = vmatpush1.msra.mxu0 %v115
    %709 = vmatprep.subr.mxu0 0.0
    %710 = vmatpush1.msra.mxu0 %v118
    %711 = vmatprep.subr.mxu0 0.0
    %712 = vmatpush1.msra.mxu0 %v121
    %713 = vmatprep.subr.mxu0 0.0
    %714 = vmatpush1.msra.mxu0 %v124
    %715 = vmatprep.subr.mxu0 0.0
    %716 = vmatpush1.msra.mxu0 %v127
    %717 = vmatprep.subr.mxu0 0.0
    %718 = vmatpush1.msra.mxu0 %v130
    %719 = vmatprep.subr.mxu0 0.0
    %720 = vmatpush1.msra.mxu0 %v133
    %721 = vmatprep.subr.mxu0 0.0
    %722 = vmatpush1.msra.mxu0 %v136
    %723 = vmatprep.subr.mxu0 0.0
    %724 = vmatpush1.msra.mxu0 %v139
    %725 = vmatprep.subr.mxu0 0.0
    %726 = vmatpush1.msra.mxu0 %v142
    %727 = vmatprep.subr.mxu0 0.0
    %728 = vmatpush1.msra.mxu0 %v145
    %729 = vmatprep.subr.mxu0 0.0
    %730 = vmatpush1.msra.mxu0 0.0
    %731 = vmatprep.subr.mxu0 0.0
    %732 = vmatpush1.msra.mxu0 0.0
    %733 = vmatprep.subr.mxu0 0.0
    %734 = vmatpush1.msra.mxu0 0.0
    %735 = vmatprep.subr.mxu0 0.0
    %736 = vmatpush1.msra.mxu0 0.0
    %737 = vmatprep.subr.mxu0 0.0
    %738 = vmatpush1.msra.mxu0 0.0
    %739 = vmatprep.subr.mxu0 0.0
    %740 = vmatpush1.msra.mxu0 0.0
    %741 = vmatprep.subr.mxu0 0.0
    %742 = vmatpush1.msra.mxu0 0.0
    %743 = vmatprep.subr.mxu0 0.0
    %744 = vmatpush1.msra.mxu0 0.0
    %745 = vmatprep.subr.mxu0 0.0
    %746 = vmatpush1.msra.mxu0 0.0
    %747 = vmatprep.subr.mxu0 0.0
    %748 = vmatpush1.msra.mxu0 0.0
    %749 = vmatprep.subr.mxu0 0.0
    %750 = vmatpush1.msra.mxu0 0.0
    %751 = vmatprep.subr.mxu0 0.0
    %752 = vmatpush1.msra.mxu0 0.0
    %753 = vmatprep.subr.mxu0 0.0
    %754 = vmatpush1.msra.mxu0 0.0
    %755 = vmatprep.subr.mxu0 0.0
    %756 = vmatpush1.msra.mxu0 0.0
    %757 = vmatprep.subr.mxu0 0.0
    %758 = vmatpush1.msra.mxu0 0.0
    %759 = vmatprep.subr.mxu0 0.0
    %760 = vmatpush1.msra.mxu0 0.0
    %761 = vmatprep.mubr.f32.mxu0 0.0
    %762 = vmatmul.mubr.f32.gmra.mrb[0].mxu0 %v478
    %v763 = vpop.f32.mrb[0].mxu0
    %v764 = vadd.f32 0.0, %v763
    %v765 = vpop.f32.mrb[0].mxu0
    %766 = vdwg.mxu0
    %v767 = vadd.f32 %v552, %v693
    %v768 = vxor.u32 %v767, 2147483648
    %v769 = vmul.f32 %v768, 1.442695
    %v770 = vpow.pop %v769
    %v771 = vadd.f32 %v770, 1.0
    %v772 = vrcp.pop %v771
    %v773 = vmul.f32 1.0, %v772
    %v774 = vadd.f32 %v554, %v695
    %v775 = vxor.u32 %v774, 2147483648
    %v776 = vmul.f32 %v775, 1.442695
    %v777 = vpow.pop %v776
    %v778 = vadd.f32 %v777, 1.0
    %v779 = vrcp.pop %v778
    %v780 = vmul.f32 1.0, %v779
    %v781 = vadd.f32 %v764, %v168
    %v782 = vmul.f32 %v773, %v781
    %v783 = vadd.f32 %v623, %v782
    %v784 = vtanh.pop %v783
    %v785 = vsub.f32 %v478, %v784
    %v786 = vmul.f32 %v780, %v785
    %v787 = vadd.f32 %v784, %v786
    %s788 = scalar_lea.vmem [#allocation10], 8
    %789 = vst [vmem:[%s788] sm:$0xff] %v787
    %s790 = scalar_lea.vmem [#allocation2], 16
    %v791 = vld [vmem:[%s790] sm:$0xff]
    %v793 = vsel %vm172, %v791, 0
    %795 = vmatprep.subr.mxu0 %v87
    %796 = vmatpush1.msra.mxu0 %v86
    %797 = vmatprep.subr.mxu0 %v90
    %798 = vmatpush1.msra.mxu0 %v89
    %799 = vmatprep.subr.mxu0 %v93
    %800 = vmatpush1.msra.mxu0 %v92
    %801 = vmatprep.subr.mxu0 %v96
    %802 = vmatpush1.msra.mxu0 %v95
    %803 = vmatprep.subr.mxu0 0.0
    %804 = vmatpush1.msra.mxu0 0.0
    %805 = vmatprep.subr.mxu0 0.0
    %806 = vmatpush1.msra.mxu0 0.0
    %807 = vmatprep.subr.mxu0 0.0
    %808 = vmatpush1.msra.mxu0 0.0
    %809 = vmatprep.subr.mxu0 0.0
    %810 = vmatpush1.msra.mxu0 0.0
    %811 = vmatprep.subr.mxu0 0.0
    %812 = vmatpush1.msra.mxu0 0.0
    %813 = vmatprep.subr.mxu0 0.0
    %814 = vmatpush1.msra.mxu0 0.0
    %815 = vmatprep.subr.mxu0 0.0
    %816 = vmatpush1.msra.mxu0 0.0
    %817 = vmatprep.subr.mxu0 0.0
    %818 = vmatpush1.msra.mxu0 0.0
    %819 = vmatprep.subr.mxu0 0.0
    %820 = vmatpush1.msra.mxu0 0.0
    %821 = vmatprep.subr.mxu0 0.0
    %822 = vmatpush1.msra.mxu0 0.0
    %823 = vmatprep.subr.mxu0 0.0
    %824 = vmatpush1.msra.mxu0 0.0
    %825 = vmatprep.subr.mxu0 0.0
    %826 = vmatpush1.msra.mxu0 0.0
    %827 = vmatprep.subr.mxu0 0.0
    %828 = vmatpush1.msra.mxu0 0.0
    %829 = vmatprep.subr.mxu0 0.0
    %830 = vmatpush1.msra.mxu0 0.0
    %831 = vmatprep.subr.mxu0 0.0
    %832 = vmatpush1.msra.mxu0 0.0
    %833 = vmatprep.subr.mxu0 0.0
    %834 = vmatpush1.msra.mxu0 0.0
    %835 = vmatprep.subr.mxu0 0.0
    %836 = vmatpush1.msra.mxu0 0.0
    %837 = vmatprep.subr.mxu0 0.0
    %838 = vmatpush1.msra.mxu0 0.0
    %839 = vmatprep.subr.mxu0 0.0
    %840 = vmatpush1.msra.mxu0 0.0
    %841 = vmatprep.subr.mxu0 0.0
    %842 = vmatpush1.msra.mxu0 0.0
    %843 = vmatprep.subr.mxu0 0.0
    %844 = vmatpush1.msra.mxu0 0.0
    %845 = vmatprep.subr.mxu0 0.0
    %846 = vmatpush1.msra.mxu0 0.0
    %847 = vmatprep.subr.mxu0 0.0
    %848 = vmatpush1.msra.mxu0 0.0
    %849 = vmatprep.subr.mxu0 0.0
    %850 = vmatpush1.msra.mxu0 0.0
    %851 = vmatprep.subr.mxu0 0.0
    %852 = vmatpush1.msra.mxu0 0.0
    %853 = vmatprep.subr.mxu0 0.0
    %854 = vmatpush1.msra.mxu0 0.0
    %855 = vmatprep.subr.mxu0 0.0
    %856 = vmatpush1.msra.mxu0 0.0
    %857 = vmatprep.subr.mxu0 0.0
    %858 = vmatpush1.msra.mxu0 0.0
    %859 = vmatprep.mubr.f32.mxu0 0.0
    %860 = vmatmul.mubr.f32.gmra.mrb[0].mxu0 %v793
    %v861 = vpop.f32.mrb[0].mxu0
    %v862 = vadd.f32 %v151, %v861
    %v863 = vpop.f32.mrb[0].mxu0
    %v864 = vadd.f32 %v155, %v863
    %865 = vdwg.mxu0
    %866 = vmatprep.subr.mxu0 0.0
    %867 = vmatpush1.msra.mxu0 %v88
    %868 = vmatprep.subr.mxu0 0.0
    %869 = vmatpush1.msra.mxu0 %v91
    %870 = vmatprep.subr.mxu0 0.0
    %871 = vmatpush1.msra.mxu0 %v94
    %872 = vmatprep.subr.mxu0 0.0
    %873 = vmatpush1.msra.mxu0 %v97
    %874 = vmatprep.subr.mxu0 0.0
    %875 = vmatpush1.msra.mxu0 0.0
    %876 = vmatprep.subr.mxu0 0.0
    %877 = vmatpush1.msra.mxu0 0.0
    %878 = vmatprep.subr.mxu0 0.0
    %879 = vmatpush1.msra.mxu0 0.0
    %880 = vmatprep.subr.mxu0 0.0
    %881 = vmatpush1.msra.mxu0 0.0
    %882 = vmatprep.subr.mxu0 0.0
    %883 = vmatpush1.msra.mxu0 0.0
    %884 = vmatprep.subr.mxu0 0.0
    %885 = vmatpush1.msra.mxu0 0.0
    %886 = vmatprep.subr.mxu0 0.0
    %887 = vmatpush1.msra.mxu0 0.0
    %888 = vmatprep.subr.mxu0 0.0
    %889 = vmatpush1.msra.mxu0 0.0
    %890 = vmatprep.subr.mxu0 0.0
    %891 = vmatpush1.msra.mxu0 0.0
    %892 = vmatprep.subr.mxu0 0.0
    %893 = vmatpush1.msra.mxu0 0.0
    %894 = vmatprep.subr.mxu0 0.0
    %895 = vmatpush1.msra.mxu0 0.0
    %896 = vmatprep.subr.mxu0 0.0
    %897 = vmatpush1.msra.mxu0 0.0
    %898 = vmatprep.subr.mxu0 0.0
    %899 = vmatpush1.msra.mxu0 0.0
    %900 = vmatprep.subr.mxu0 0.0
    %901 = vmatpush1.msra.mxu0 0.0
    %902 = vmatprep.subr.mxu0 0.0
    %903 = vmatpush1.msra.mxu0 0.0
    %904 = vmatprep.subr.mxu0 0.0
    %905 = vmatpush1.msra.mxu0 0.0
    %906 = vmatprep.subr.mxu0 0.0
    %907 = vmatpush1.msra.mxu0 0.0
    %908 = vmatprep.subr.mxu0 0.0
    %909 = vmatpush1.msra.mxu0 0.0
    %910 = vmatprep.subr.mxu0 0.0
    %911 = vmatpush1.msra.mxu0 0.0
    %912 = vmatprep.subr.mxu0 0.0
    %913 = vmatpush1.msra.mxu0 0.0
    %914 = vmatprep.subr.mxu0 0.0
    %915 = vmatpush1.msra.mxu0 0.0
    %916 = vmatprep.subr.mxu0 0.0
    %917 = vmatpush1.msra.mxu0 0.0
    %918 = vmatprep.subr.mxu0 0.0
    %919 = vmatpush1.msra.mxu0 0.0
    %920 = vmatprep.subr.mxu0 0.0
    %921 = vmatpush1.msra.mxu0 0.0
    %922 = vmatprep.subr.mxu0 0.0
    %923 = vmatpush1.msra.mxu0 0.0
    %924 = vmatprep.subr.mxu0 0.0
    %925 = vmatpush1.msra.mxu0 0.0
    %926 = vmatprep.subr.mxu0 0.0
    %927 = vmatpush1.msra.mxu0 0.0
    %928 = vmatprep.subr.mxu0 0.0
    %929 = vmatpush1.msra.mxu0 0.0
    %930 = vmatprep.mubr.f32.mxu0 0.0
    %931 = vmatmul.mubr.f32.gmra.mrb[0].mxu0 %v793
    %v932 = vpop.f32.mrb[0].mxu0
    %v933 = vadd.f32 %v159, %v932
    %v934 = vpop.f32.mrb[0].mxu0
    %935 = vdwg.mxu0
    %936 = vmatprep.subr.mxu0 %v99
    %937 = vmatpush1.msra.mxu0 %v98
    %938 = vmatprep.subr.mxu0 %v102
    %939 = vmatpush1.msra.mxu0 %v101
    %940 = vmatprep.subr.mxu0 %v105
    %941 = vmatpush1.msra.mxu0 %v104
    %942 = vmatprep.subr.mxu0 %v108
    %943 = vmatpush1.msra.mxu0 %v107
    %944 = vmatprep.subr.mxu0 %v111
    %945 = vmatpush1.msra.mxu0 %v110
    %946 = vmatprep.subr.mxu0 %v114
    %947 = vmatpush1.msra.mxu0 %v113
    %948 = vmatprep.subr.mxu0 %v117
    %949 = vmatpush1.msra.mxu0 %v116
    %950 = vmatprep.subr.mxu0 %v120
    %951 = vmatpush1.msra.mxu0 %v119
    %952 = vmatprep.subr.mxu0 %v123
    %953 = vmatpush1.msra.mxu0 %v122
    %954 = vmatprep.subr.mxu0 %v126
    %955 = vmatpush1.msra.mxu0 %v125
    %956 = vmatprep.subr.mxu0 %v129
    %957 = vmatpush1.msra.mxu0 %v128
    %958 = vmatprep.subr.mxu0 %v132
    %959 = vmatpush1.msra.mxu0 %v131
    %960 = vmatprep.subr.mxu0 %v135
    %961 = vmatpush1.msra.mxu0 %v134
    %962 = vmatprep.subr.mxu0 %v138
    %963 = vmatpush1.msra.mxu0 %v137
    %964 = vmatprep.subr.mxu0 %v141
    %965 = vmatpush1.msra.mxu0 %v140
    %966 = vmatprep.subr.mxu0 %v144
    %967 = vmatpush1.msra.mxu0 %v143
    %968 = vmatprep.subr.mxu0 0.0
    %969 = vmatpush1.msra.mxu0 0.0
    %970 = vmatprep.subr.mxu0 0.0
    %971 = vmatpush1.msra.mxu0 0.0
    %972 = vmatprep.subr.mxu0 0.0
    %973 = vmatpush1.msra.mxu0 0.0
    %974 = vmatprep.subr.mxu0 0.0
    %975 = vmatpush1.msra.mxu0 0.0
    %976 = vmatprep.subr.mxu0 0.0
    %977 = vmatpush1.msra.mxu0 0.0
    %978 = vmatprep.subr.mxu0 0.0
    %979 = vmatpush1.msra.mxu0 0.0
    %980 = vmatprep.subr.mxu0 0.0
    %981 = vmatpush1.msra.mxu0 0.0
    %982 = vmatprep.subr.mxu0 0.0
    %983 = vmatpush1.msra.mxu0 0.0
    %984 = vmatprep.subr.mxu0 0.0
    %985 = vmatpush1.msra.mxu0 0.0
    %986 = vmatprep.subr.mxu0 0.0
    %987 = vmatpush1.msra.mxu0 0.0
    %988 = vmatprep.subr.mxu0 0.0
    %989 = vmatpush1.msra.mxu0 0.0
    %990 = vmatprep.subr.mxu0 0.0
    %991 = vmatpush1.msra.mxu0 0.0
    %992 = vmatprep.subr.mxu0 0.0
    %993 = vmatpush1.msra.mxu0 0.0
    %994 = vmatprep.subr.mxu0 0.0
    %995 = vmatpush1.msra.mxu0 0.0
    %996 = vmatprep.subr.mxu0 0.0
    %997 = vmatpush1.msra.mxu0 0.0
    %998 = vmatprep.subr.mxu0 0.0
    %999 = vmatpush1.msra.mxu0 0.0
    %1000 = vmatprep.mubr.f32.mxu0 0.0
    %1001 = vmatmul.mubr.f32.gmra.mrb[0].mxu0 %v787
    %v1002 = vpop.f32.mrb[0].mxu0
    %v1003 = vadd.f32 0.0, %v1002
    %v1004 = vpop.f32.mrb[0].mxu0
    %v1005 = vadd.f32 0.0, %v1004
    %1006 = vdwg.mxu0
    %1007 = vmatprep.subr.mxu0 0.0
    %1008 = vmatpush1.msra.mxu0 %v100
    %1009 = vmatprep.subr.mxu0 0.0
    %1010 = vmatpush1.msra.mxu0 %v103
    %1011 = vmatprep.subr.mxu0 0.0
    %1012 = vmatpush1.msra.mxu0 %v106
    %1013 = vmatprep.subr.mxu0 0.0
    %1014 = vmatpush1.msra.mxu0 %v109
    %1015 = vmatprep.subr.mxu0 0.0
    %1016 = vmatpush1.msra.mxu0 %v112
    %1017 = vmatprep.subr.mxu0 0.0
    %1018 = vmatpush1.msra.mxu0 %v115
    %1019 = vmatprep.subr.mxu0 0.0
    %1020 = vmatpush1.msra.mxu0 %v118
    %1021 = vmatprep.subr.mxu0 0.0
    %1022 = vmatpush1.msra.mxu0 %v121
    %1023 = vmatprep.subr.mxu0 0.0
    %1024 = vmatpush1.msra.mxu0 %v124
    %1025 = vmatprep.subr.mxu0 0.0
    %1026 = vmatpush1.msra.mxu0 %v127
    %1027 = vmatprep.subr.mxu0 0.0
    %1028 = vmatpush1.msra.mxu0 %v130
    %1029 = vmatprep.subr.mxu0 0.0
    %1030 = vmatpush1.msra.mxu0 %v133
    %1031 = vmatprep.subr.mxu0 0.0
    %1032 = vmatpush1.msra.mxu0 %v136
    %1033 = vmatprep.subr.mxu0 0.0
    %1034 = vmatpush1.msra.mxu0 %v139
    %1035 = vmatprep.subr.mxu0 0.0
    %1036 = vmatpush1.msra.mxu0 %v142
    %1037 = vmatprep.subr.mxu0 0.0
    %1038 = vmatpush1.msra.mxu0 %v145
    %1039 = vmatprep.subr.mxu0 0.0
    %1040 = vmatpush1.msra.mxu0 0.0
    %1041 = vmatprep.subr.mxu0 0.0
    %1042 = vmatpush1.msra.mxu0 0.0
    %1043 = vmatprep.subr.mxu0 0.0
    %1044 = vmatpush1.msra.mxu0 0.0
    %1045 = vmatprep.subr.mxu0 0.0
    %1046 = vmatpush1.msra.mxu0 0.0
    %1047 = vmatprep.subr.mxu0 0.0
    %1048 = vmatpush1.msra.mxu0 0.0
    %1049 = vmatprep.subr.mxu0 0.0
    %1050 = vmatpush1.msra.mxu0 0.0
    %1051 = vmatprep.subr.mxu0 0.0
    %1052 = vmatpush1.msra.mxu0 0.0
    %1053 = vmatprep.subr.mxu0 0.0
    %1054 = vmatpush1.msra.mxu0 0.0
    %1055 = vmatprep.subr.mxu0 0.0
    %1056 = vmatpush1.msra.mxu0 0.0
    %1057 = vmatprep.subr.mxu0 0.0
    %1058 = vmatpush1.msra.mxu0 0.0
    %1059 = vmatprep.subr.mxu0 0.0
    %1060 = vmatpush1.msra.mxu0 0.0
    %1061 = vmatprep.subr.mxu0 0.0
    %1062 = vmatpush1.msra.mxu0 0.0
    %1063 = vmatprep.subr.mxu0 0.0
    %1064 = vmatpush1.msra.mxu0 0.0
    %1065 = vmatprep.subr.mxu0 0.0
    %1066 = vmatpush1.msra.mxu0 0.0
    %1067 = vmatprep.subr.mxu0 0.0
    %1068 = vmatpush1.msra.mxu0 0.0
    %1069 = vmatprep.subr.mxu0 0.0
    %1070 = vmatpush1.msra.mxu0 0.0
    %1071 = vmatprep.mubr.f32.mxu0 0.0
    %1072 = vmatmul.mubr.f32.gmra.mrb[0].mxu0 %v787
    %v1073 = vpop.f32.mrb[0].mxu0
    %v1074 = vadd.f32 0.0, %v1073
    %v1075 = vpop.f32.mrb[0].mxu0
    %1076 = vdwg.mxu0
    %v1077 = vadd.f32 %v862, %v1003
    %v1078 = vxor.u32 %v1077, 2147483648
    %v1079 = vmul.f32 %v1078, 1.442695
    %v1080 = vpow.pop %v1079
    %v1081 = vadd.f32 %v1080, 1.0
    %v1082 = vrcp.pop %v1081
    %v1083 = vmul.f32 1.0, %v1082
    %v1084 = vadd.f32 %v864, %v1005
    %v1085 = vxor.u32 %v1084, 2147483648
    %v1086 = vmul.f32 %v1085, 1.442695
    %v1087 = vpow.pop %v1086
    %v1088 = vadd.f32 %v1087, 1.0
    %v1089 = vrcp.pop %v1088
    %v1090 = vmul.f32 1.0, %v1089
    %v1091 = vadd.f32 %v1074, %v168
    %v1092 = vmul.f32 %v1083, %v1091
    %v1093 = vadd.f32 %v933, %v1092
    %v1094 = vtanh.pop %v1093
    %v1095 = vsub.f32 %v787, %v1094
    %v1096 = vmul.f32 %v1090, %v1095
    %v1097 = vadd.f32 %v1094, %v1096
    %s1098 = scalar_lea.vmem [#allocation10], 16
    %1099 = vst [vmem:[%s1098] sm:$0xff] %v1097
    %s1100 = scalar_lea.vmem [#allocation2], 24
    %v1101 = vld [vmem:[%s1100] sm:$0xff]
    %v1103 = vsel %vm172, %v1101, 0
    %1105 = vmatprep.subr.mxu0 %v87
    %1106 = vmatpush1.msra.mxu0 %v86
    %1107 = vmatprep.subr.mxu0 %v90
    %1108 = vmatpush1.msra.mxu0 %v89
    %1109 = vmatprep.subr.mxu0 %v93
    %1110 = vmatpush1.msra.mxu0 %v92
    %1111 = vmatprep.subr.mxu0 %v96
    %1112 = vmatpush1.msra.mxu0 %v95
    %1113 = vmatprep.subr.mxu0 0.0
    %1114 = vmatpush1.msra.mxu0 0.0
    %1115 = vmatprep.subr.mxu0 0.0
    %1116 = vmatpush1.msra.mxu0 0.0
    %1117 = vmatprep.subr.mxu0 0.0
    %1118 = vmatpush1.msra.mxu0 0.0
    %1119 = vmatprep.subr.mxu0 0.0
    %1120 = vmatpush1.msra.mxu0 0.0
    %1121 = vmatprep.subr.mxu0 0.0
    %1122 = vmatpush1.msra.mxu0 0.0
    %1123 = vmatprep.subr.mxu0 0.0
    %1124 = vmatpush1.msra.mxu0 0.0
    %1125 = vmatprep.subr.mxu0 0.0
    %1126 = vmatpush1.msra.mxu0 0.0
    %1127 = vmatprep.subr.mxu0 0.0
    %1128 = vmatpush1.msra.mxu0 0.0
    %1129 = vmatprep.subr.mxu0 0.0
    %1130 = vmatpush1.msra.mxu0 0.0
    %1131 = vmatprep.subr.mxu0 0.0
    %1132 = vmatpush1.msra.mxu0 0.0
    %1133 = vmatprep.subr.mxu0 0.0
    %1134 = vmatpush1.msra.mxu0 0.0
    %1135 = vmatprep.subr.mxu0 0.0
    %1136 = vmatpush1.msra.mxu0 0.0
    %1137 = vmatprep.subr.mxu0 0.0
    %1138 = vmatpush1.msra.mxu0 0.0
    %1139 = vmatprep.subr.mxu0 0.0
    %1140 = vmatpush1.msra.mxu0 0.0
    %1141 = vmatprep.subr.mxu0 0.0
    %1142 = vmatpush1.msra.mxu0 0.0
    %1143 = vmatprep.subr.mxu0 0.0
    %1144 = vmatpush1.msra.mxu0 0.0
    %1145 = vmatprep.subr.mxu0 0.0
    %1146 = vmatpush1.msra.mxu0 0.0
    %1147 = vmatprep.subr.mxu0 0.0
    %1148 = vmatpush1.msra.mxu0 0.0
    %1149 = vmatprep.subr.mxu0 0.0
    %1150 = vmatpush1.msra.mxu0 0.0
    %1151 = vmatprep.subr.mxu0 0.0
    %1152 = vmatpush1.msra.mxu0 0.0
    %1153 = vmatprep.subr.mxu0 0.0
    %1154 = vmatpush1.msra.mxu0 0.0
    %1155 = vmatprep.subr.mxu0 0.0
    %1156 = vmatpush1.msra.mxu0 0.0
    %1157 = vmatprep.subr.mxu0 0.0
    %1158 = vmatpush1.msra.mxu0 0.0
    %1159 = vmatprep.subr.mxu0 0.0
    %1160 = vmatpush1.msra.mxu0 0.0
    %1161 = vmatprep.subr.mxu0 0.0
    %1162 = vmatpush1.msra.mxu0 0.0
    %1163 = vmatprep.subr.mxu0 0.0
    %1164 = vmatpush1.msra.mxu0 0.0
    %1165 = vmatprep.subr.mxu0 0.0
    %1166 = vmatpush1.msra.mxu0 0.0
    %1167 = vmatprep.subr.mxu0 0.0
    %1168 = vmatpush1.msra.mxu0 0.0
    %1169 = vmatprep.mubr.f32.mxu0 0.0
    %1170 = vmatmul.mubr.f32.gmra.mrb[0].mxu0 %v1103
    %v1171 = vpop.f32.mrb[0].mxu0
    %v1172 = vadd.f32 %v151, %v1171
    %v1173 = vpop.f32.mrb[0].mxu0
    %v1174 = vadd.f32 %v155, %v1173
    %1175 = vdwg.mxu0
    %1176 = vmatprep.subr.mxu0 0.0
    %1177 = vmatpush1.msra.mxu0 %v88
    %1178 = vmatprep.subr.mxu0 0.0
    %1179 = vmatpush1.msra.mxu0 %v91
    %1180 = vmatprep.subr.mxu0 0.0
    %1181 = vmatpush1.msra.mxu0 %v94
    %1182 = vmatprep.subr.mxu0 0.0
    %1183 = vmatpush1.msra.mxu0 %v97
    %1184 = vmatprep.subr.mxu0 0.0
    %1185 = vmatpush1.msra.mxu0 0.0
    %1186 = vmatprep.subr.mxu0 0.0
    %1187 = vmatpush1.msra.mxu0 0.0
    %1188 = vmatprep.subr.mxu0 0.0
    %1189 = vmatpush1.msra.mxu0 0.0
    %1190 = vmatprep.subr.mxu0 0.0
    %1191 = vmatpush1.msra.mxu0 0.0
    %1192 = vmatprep.subr.mxu0 0.0
    %1193 = vmatpush1.msra.mxu0 0.0
    %1194 = vmatprep.subr.mxu0 0.0
    %1195 = vmatpush1.msra.mxu0 0.0
    %1196 = vmatprep.subr.mxu0 0.0
    %1197 = vmatpush1.msra.mxu0 0.0
    %1198 = vmatprep.subr.mxu0 0.0
    %1199 = vmatpush1.msra.mxu0 0.0
    %1200 = vmatprep.subr.mxu0 0.0
    %1201 = vmatpush1.msra.mxu0 0.0
    %1202 = vmatprep.subr.mxu0 0.0
    %1203 = vmatpush1.msra.mxu0 0.0
    %1204 = vmatprep.subr.mxu0 0.0
    %1205 = vmatpush1.msra.mxu0 0.0
    %1206 = vmatprep.subr.mxu0 0.0
    %1207 = vmatpush1.msra.mxu0 0.0
    %1208 = vmatprep.subr.mxu0 0.0
    %1209 = vmatpush1.msra.mxu0 0.0
    %1210 = vmatprep.subr.mxu0 0.0
    %1211 = vmatpush1.msra.mxu0 0.0
    %1212 = vmatprep.subr.mxu0 0.0
    %1213 = vmatpush1.msra.mxu0 0.0
    %1214 = vmatprep.subr.mxu0 0.0
    %1215 = vmatpush1.msra.mxu0 0.0
    %1216 = vmatprep.subr.mxu0 0.0
    %1217 = vmatpush1.msra.mxu0 0.0
    %1218 = vmatprep.subr.mxu0 0.0
    %1219 = vmatpush1.msra.mxu0 0.0
    %1220 = vmatprep.subr.mxu0 0.0
    %1221 = vmatpush1.msra.mxu0 0.0
    %1222 = vmatprep.subr.mxu0 0.0
    %1223 = vmatpush1.msra.mxu0 0.0
    %1224 = vmatprep.subr.mxu0 0.0
    %1225 = vmatpush1.msra.mxu0 0.0
    %1226 = vmatprep.subr.mxu0 0.0
    %1227 = vmatpush1.msra.mxu0 0.0
    %1228 = vmatprep.subr.mxu0 0.0
    %1229 = vmatpush1.msra.mxu0 0.0
    %1230 = vmatprep.subr.mxu0 0.0
    %1231 = vmatpush1.msra.mxu0 0.0
    %1232 = vmatprep.subr.mxu0 0.0
    %1233 = vmatpush1.msra.mxu0 0.0
    %1234 = vmatprep.subr.mxu0 0.0
    %1235 = vmatpush1.msra.mxu0 0.0
    %1236 = vmatprep.subr.mxu0 0.0
    %1237 = vmatpush1.msra.mxu0 0.0
    %1238 = vmatprep.subr.mxu0 0.0
    %1239 = vmatpush1.msra.mxu0 0.0
    %1240 = vmatprep.mubr.f32.mxu0 0.0
    %1241 = vmatmul.mubr.f32.gmra.mrb[0].mxu0 %v1103
    %v1242 = vpop.f32.mrb[0].mxu0
    %v1243 = vadd.f32 %v159, %v1242
    %v1244 = vpop.f32.mrb[0].mxu0
    %1245 = vdwg.mxu0
    %1246 = vmatprep.subr.mxu0 %v99
    %1247 = vmatpush1.msra.mxu0 %v98
    %1248 = vmatprep.subr.mxu0 %v102
    %1249 = vmatpush1.msra.mxu0 %v101
    %1250 = vmatprep.subr.mxu0 %v105
    %1251 = vmatpush1.msra.mxu0 %v104
    %1252 = vmatprep.subr.mxu0 %v108
    %1253 = vmatpush1.msra.mxu0 %v107
    %1254 = vmatprep.subr.mxu0 %v111
    %1255 = vmatpush1.msra.mxu0 %v110
    %1256 = vmatprep.subr.mxu0 %v114
    %1257 = vmatpush1.msra.mxu0 %v113
    %1258 = vmatprep.subr.mxu0 %v117
    %1259 = vmatpush1.msra.mxu0 %v116
    %1260 = vmatprep.subr.mxu0 %v120
    %1261 = vmatpush1.msra.mxu0 %v119
    %1262 = vmatprep.subr.mxu0 %v123
    %1263 = vmatpush1.msra.mxu0 %v122
    %1264 = vmatprep.subr.mxu0 %v126
    %1265 = vmatpush1.msra.mxu0 %v125
    %1266 = vmatprep.subr.mxu0 %v129
    %1267 = vmatpush1.msra.mxu0 %v128
    %1268 = vmatprep.subr.mxu0 %v132
    %1269 = vmatpush1.msra.mxu0 %v131
    %1270 = vmatprep.subr.mxu0 %v135
    %1271 = vmatpush1.msra.mxu0 %v134
    %1272 = vmatprep.subr.mxu0 %v138
    %1273 = vmatpush1.msra.mxu0 %v137
    %1274 = vmatprep.subr.mxu0 %v141
    %1275 = vmatpush1.msra.mxu0 %v140
    %1276 = vmatprep.subr.mxu0 %v144
    %1277 = vmatpush1.msra.mxu0 %v143
    %1278 = vmatprep.subr.mxu0 0.0
    %1279 = vmatpush1.msra.mxu0 0.0
    %1280 = vmatprep.subr.mxu0 0.0
    %1281 = vmatpush1.msra.mxu0 0.0
    %1282 = vmatprep.subr.mxu0 0.0
    %1283 = vmatpush1.msra.mxu0 0.0
    %1284 = vmatprep.subr.mxu0 0.0
    %1285 = vmatpush1.msra.mxu0 0.0
    %1286 = vmatprep.subr.mxu0 0.0
    %1287 = vmatpush1.msra.mxu0 0.0
    %1288 = vmatprep.subr.mxu0 0.0
    %1289 = vmatpush1.msra.mxu0 0.0
    %1290 = vmatprep.subr.mxu0 0.0
    %1291 = vmatpush1.msra.mxu0 0.0
    %1292 = vmatprep.subr.mxu0 0.0
    %1293 = vmatpush1.msra.mxu0 0.0
    %1294 = vmatprep.subr.mxu0 0.0
    %1295 = vmatpush1.msra.mxu0 0.0
    %1296 = vmatprep.subr.mxu0 0.0
    %1297 = vmatpush1.msra.mxu0 0.0
    %1298 = vmatprep.subr.mxu0 0.0
    %1299 = vmatpush1.msra.mxu0 0.0
    %1300 = vmatprep.subr.mxu0 0.0
    %1301 = vmatpush1.msra.mxu0 0.0
    %1302 = vmatprep.subr.mxu0 0.0
    %1303 = vmatpush1.msra.mxu0 0.0
    %1304 = vmatprep.subr.mxu0 0.0
    %1305 = vmatpush1.msra.mxu0 0.0
    %1306 = vmatprep.subr.mxu0 0.0
    %1307 = vmatpush1.msra.mxu0 0.0
    %1308 = vmatprep.subr.mxu0 0.0
    %1309 = vmatpush1.msra.mxu0 0.0
    %1310 = vmatprep.mubr.f32.mxu0 0.0
    %1311 = vmatmul.mubr.f32.gmra.mrb[0].mxu0 %v1097
    %v1312 = vpop.f32.mrb[0].mxu0
    %v1313 = vadd.f32 0.0, %v1312
    %v1314 = vpop.f32.mrb[0].mxu0
    %v1315 = vadd.f32 0.0, %v1314
    %1316 = vdwg.mxu0
    %1317 = vmatprep.subr.mxu0 0.0
    %1318 = vmatpush1.msra.mxu0 %v100
    %1319 = vmatprep.subr.mxu0 0.0
    %1320 = vmatpush1.msra.mxu0 %v103
    %1321 = vmatprep.subr.mxu0 0.0
    %1322 = vmatpush1.msra.mxu0 %v106
    %1323 = vmatprep.subr.mxu0 0.0
    %1324 = vmatpush1.msra.mxu0 %v109
    %1325 = vmatprep.subr.mxu0 0.0
    %1326 = vmatpush1.msra.mxu0 %v112
    %1327 = vmatprep.subr.mxu0 0.0
    %1328 = vmatpush1.msra.mxu0 %v115
    %1329 = vmatprep.subr.mxu0 0.0
    %1330 = vmatpush1.msra.mxu0 %v118
    %1331 = vmatprep.subr.mxu0 0.0
    %1332 = vmatpush1.msra.mxu0 %v121
    %1333 = vmatprep.subr.mxu0 0.0
    %1334 = vmatpush1.msra.mxu0 %v124
    %1335 = vmatprep.subr.mxu0 0.0
    %1336 = vmatpush1.msra.mxu0 %v127
    %1337 = vmatprep.subr.mxu0 0.0
    %1338 = vmatpush1.msra.mxu0 %v130
    %1339 = vmatprep.subr.mxu0 0.0
    %1340 = vmatpush1.msra.mxu0 %v133
    %1341 = vmatprep.subr.mxu0 0.0
    %1342 = vmatpush1.msra.mxu0 %v136
    %1343 = vmatprep.subr.mxu0 0.0
    %1344 = vmatpush1.msra.mxu0 %v139
    %1345 = vmatprep.subr.mxu0 0.0
    %1346 = vmatpush1.msra.mxu0 %v142
    %1347 = vmatprep.subr.mxu0 0.0
    %1348 = vmatpush1.msra.mxu0 %v145
    %1349 = vmatprep.subr.mxu0 0.0
    %1350 = vmatpush1.msra.mxu0 0.0
    %1351 = vmatprep.subr.mxu0 0.0
    %1352 = vmatpush1.msra.mxu0 0.0
    %1353 = vmatprep.subr.mxu0 0.0
    %1354 = vmatpush1.msra.mxu0 0.0
    %1355 = vmatprep.subr.mxu0 0.0
    %1356 = vmatpush1.msra.mxu0 0.0
    %1357 = vmatprep.subr.mxu0 0.0
    %1358 = vmatpush1.msra.mxu0 0.0
    %1359 = vmatprep.subr.mxu0 0.0
    %1360 = vmatpush1.msra.mxu0 0.0
    %1361 = vmatprep.subr.mxu0 0.0
    %1362 = vmatpush1.msra.mxu0 0.0
    %1363 = vmatprep.subr.mxu0 0.0
    %1364 = vmatpush1.msra.mxu0 0.0
    %1365 = vmatprep.subr.mxu0 0.0
    %1366 = vmatpush1.msra.mxu0 0.0
    %1367 = vmatprep.subr.mxu0 0.0
    %1368 = vmatpush1.msra.mxu0 0.0
    %1369 = vmatprep.subr.mxu0 0.0
    %1370 = vmatpush1.msra.mxu0 0.0
    %1371 = vmatprep.subr.mxu0 0.0
    %1372 = vmatpush1.msra.mxu0 0.0
    %1373 = vmatprep.subr.mxu0 0.0
    %1374 = vmatpush1.msra.mxu0 0.0
    %1375 = vmatprep.subr.mxu0 0.0
    %1376 = vmatpush1.msra.mxu0 0.0
    %1377 = vmatprep.subr.mxu0 0.0
    %1378 = vmatpush1.msra.mxu0 0.0
    %1379 = vmatprep.subr.mxu0 0.0
    %1380 = vmatpush1.msra.mxu0 0.0
    %1381 = vmatprep.mubr.f32.mxu0 0.0
    %1382 = vmatmul.mubr.f32.gmra.mrb[0].mxu0 %v1097
    %v1383 = vpop.f32.mrb[0].mxu0
    %v1384 = vadd.f32 0.0, %v1383
    %v1385 = vpop.f32.mrb[0].mxu0
    %1386 = vdwg.mxu0
    %v1387 = vadd.f32 %v1172, %v1313
    %v1388 = vxor.u32 %v1387, 2147483648
    %v1389 = vmul.f32 %v1388, 1.442695
    %v1390 = vpow.pop %v1389
    %v1391 = vadd.f32 %v1390, 1.0
    %v1392 = vrcp.pop %v1391
    %v1393 = vmul.f32 1.0, %v1392
    %v1394 = vadd.f32 %v1174, %v1315
    %v1395 = vxor.u32 %v1394, 2147483648
    %v1396 = vmul.f32 %v1395, 1.442695
    %v1397 = vpow.pop %v1396
    %v1398 = vadd.f32 %v1397, 1.0
    %v1399 = vrcp.pop %v1398
    %v1400 = vmul.f32 1.0, %v1399
    %v1401 = vadd.f32 %v1384, %v168
    %v1402 = vmul.f32 %v1393, %v1401
    %v1403 = vadd.f32 %v1243, %v1402
    %v1404 = vtanh.pop %v1403
    %v1405 = vsub.f32 %v1097, %v1404
    %v1406 = vmul.f32 %v1400, %v1405
    %v1407 = vadd.f32 %v1404, %v1406
    %s1408 = scalar_lea.vmem [#allocation10], 24
    %1409 = vst [vmem:[%s1408] sm:$0xff] %v1407
    %s1410 = scalar_lea.vmem [#allocation2], 32
    %v1411 = vld [vmem:[%s1410] sm:$0xff]
    %v1413 = vsel %vm172, %v1411, 0
    %1415 = vmatprep.subr.mxu0 %v87
    %1416 = vmatpush1.msra.mxu0 %v86
    %1417 = vmatprep.subr.mxu0 %v90
    %1418 = vmatpush1.msra.mxu0 %v89
    %1419 = vmatprep.subr.mxu0 %v93
    %1420 = vmatpush1.msra.mxu0 %v92
    %1421 = vmatprep.subr.mxu0 %v96
    %1422 = vmatpush1.msra.mxu0 %v95
    %1423 = vmatprep.subr.mxu0 0.0
    %1424 = vmatpush1.msra.mxu0 0.0
    %1425 = vmatprep.subr.mxu0 0.0
    %1426 = vmatpush1.msra.mxu0 0.0
    %1427 = vmatprep.subr.mxu0 0.0
    %1428 = vmatpush1.msra.mxu0 0.0
    %1429 = vmatprep.subr.mxu0 0.0
    %1430 = vmatpush1.msra.mxu0 0.0
    %1431 = vmatprep.subr.mxu0 0.0
    %1432 = vmatpush1.msra.mxu0 0.0
    %1433 = vmatprep.subr.mxu0 0.0
    %1434 = vmatpush1.msra.mxu0 0.0
    %1435 = vmatprep.subr.mxu0 0.0
    %1436 = vmatpush1.msra.mxu0 0.0
    %1437 = vmatprep.subr.mxu0 0.0
    %1438 = vmatpush1.msra.mxu0 0.0
    %1439 = vmatprep.subr.mxu0 0.0
    %1440 = vmatpush1.msra.mxu0 0.0
    %1441 = vmatprep.subr.mxu0 0.0
    %1442 = vmatpush1.msra.mxu0 0.0
    %1443 = vmatprep.subr.mxu0 0.0
    %1444 = vmatpush1.msra.mxu0 0.0
    %1445 = vmatprep.subr.mxu0 0.0
    %1446 = vmatpush1.msra.mxu0 0.0
    %1447 = vmatprep.subr.mxu0 0.0
    %1448 = vmatpush1.msra.mxu0 0.0
    %1449 = vmatprep.subr.mxu0 0.0
    %1450 = vmatpush1.msra.mxu0 0.0
    %1451 = vmatprep.subr.mxu0 0.0
    %1452 = vmatpush1.msra.mxu0 0.0
    %1453 = vmatprep.subr.mxu0 0.0
    %1454 = vmatpush1.msra.mxu0 0.0
    %1455 = vmatprep.subr.mxu0 0.0
    %1456 = vmatpush1.msra.mxu0 0.0
    %1457 = vmatprep.subr.mxu0 0.0
    %1458 = vmatpush1.msra.mxu0 0.0
    %1459 = vmatprep.subr.mxu0 0.0
    %1460 = vmatpush1.msra.mxu0 0.0
    %1461 = vmatprep.subr.mxu0 0.0
    %1462 = vmatpush1.msra.mxu0 0.0
    %1463 = vmatprep.subr.mxu0 0.0
    %1464 = vmatpush1.msra.mxu0 0.0
    %1465 = vmatprep.subr.mxu0 0.0
    %1466 = vmatpush1.msra.mxu0 0.0
    %1467 = vmatprep.subr.mxu0 0.0
    %1468 = vmatpush1.msra.mxu0 0.0
    %1469 = vmatprep.subr.mxu0 0.0
    %1470 = vmatpush1.msra.mxu0 0.0
    %1471 = vmatprep.subr.mxu0 0.0
    %1472 = vmatpush1.msra.mxu0 0.0
    %1473 = vmatprep.subr.mxu0 0.0
    %1474 = vmatpush1.msra.mxu0 0.0
    %1475 = vmatprep.subr.mxu0 0.0
    %1476 = vmatpush1.msra.mxu0 0.0
    %1477 = vmatprep.subr.mxu0 0.0
    %1478 = vmatpush1.msra.mxu0 0.0
    %1479 = vmatprep.mubr.f32.mxu0 0.0
    %1480 = vmatmul.mubr.f32.gmra.mrb[0].mxu0 %v1413
    %v1481 = vpop.f32.mrb[0].mxu0
    %v1482 = vadd.f32 %v151, %v1481
    %v1483 = vpop.f32.mrb[0].mxu0
    %v1484 = vadd.f32 %v155, %v1483
    %1485 = vdwg.mxu0
    %1486 = vmatprep.subr.mxu0 0.0
    %1487 = vmatpush1.msra.mxu0 %v88
    %1488 = vmatprep.subr.mxu0 0.0
    %1489 = vmatpush1.msra.mxu0 %v91
    %1490 = vmatprep.subr.mxu0 0.0
    %1491 = vmatpush1.msra.mxu0 %v94
    %1492 = vmatprep.subr.mxu0 0.0
    %1493 = vmatpush1.msra.mxu0 %v97
    %1494 = vmatprep.subr.mxu0 0.0
    %1495 = vmatpush1.msra.mxu0 0.0
    %1496 = vmatprep.subr.mxu0 0.0
    %1497 = vmatpush1.msra.mxu0 0.0
    %1498 = vmatprep.subr.mxu0 0.0
    %1499 = vmatpush1.msra.mxu0 0.0
    %1500 = vmatprep.subr.mxu0 0.0
    %1501 = vmatpush1.msra.mxu0 0.0
    %1502 = vmatprep.subr.mxu0 0.0
    %1503 = vmatpush1.msra.mxu0 0.0
    %1504 = vmatprep.subr.mxu0 0.0
    %1505 = vmatpush1.msra.mxu0 0.0
    %1506 = vmatprep.subr.mxu0 0.0
    %1507 = vmatpush1.msra.mxu0 0.0
    %1508 = vmatprep.subr.mxu0 0.0
    %1509 = vmatpush1.msra.mxu0 0.0
    %1510 = vmatprep.subr.mxu0 0.0
    %1511 = vmatpush1.msra.mxu0 0.0
    %1512 = vmatprep.subr.mxu0 0.0
    %1513 = vmatpush1.msra.mxu0 0.0
    %1514 = vmatprep.subr.mxu0 0.0
    %1515 = vmatpush1.msra.mxu0 0.0
    %1516 = vmatprep.subr.mxu0 0.0
    %1517 = vmatpush1.msra.mxu0 0.0
    %1518 = vmatprep.subr.mxu0 0.0
    %1519 = vmatpush1.msra.mxu0 0.0
    %1520 = vmatprep.subr.mxu0 0.0
    %1521 = vmatpush1.msra.mxu0 0.0
    %1522 = vmatprep.subr.mxu0 0.0
    %1523 = vmatpush1.msra.mxu0 0.0
    %1524 = vmatprep.subr.mxu0 0.0
    %1525 = vmatpush1.msra.mxu0 0.0
    %1526 = vmatprep.subr.mxu0 0.0
    %1527 = vmatpush1.msra.mxu0 0.0
    %1528 = vmatprep.subr.mxu0 0.0
    %1529 = vmatpush1.msra.mxu0 0.0
    %1530 = vmatprep.subr.mxu0 0.0
    %1531 = vmatpush1.msra.mxu0 0.0
    %1532 = vmatprep.subr.mxu0 0.0
    %1533 = vmatpush1.msra.mxu0 0.0
    %1534 = vmatprep.subr.mxu0 0.0
    %1535 = vmatpush1.msra.mxu0 0.0
    %1536 = vmatprep.subr.mxu0 0.0
    %1537 = vmatpush1.msra.mxu0 0.0
    %1538 = vmatprep.subr.mxu0 0.0
    %1539 = vmatpush1.msra.mxu0 0.0
    %1540 = vmatprep.subr.mxu0 0.0
    %1541 = vmatpush1.msra.mxu0 0.0
    %1542 = vmatprep.subr.mxu0 0.0
    %1543 = vmatpush1.msra.mxu0 0.0
    %1544 = vmatprep.subr.mxu0 0.0
    %1545 = vmatpush1.msra.mxu0 0.0
    %1546 = vmatprep.subr.mxu0 0.0
    %1547 = vmatpush1.msra.mxu0 0.0
    %1548 = vmatprep.subr.mxu0 0.0
    %1549 = vmatpush1.msra.mxu0 0.0
    %1550 = vmatprep.mubr.f32.mxu0 0.0
    %1551 = vmatmul.mubr.f32.gmra.mrb[0].mxu0 %v1413
    %v1552 = vpop.f32.mrb[0].mxu0
    %v1553 = vadd.f32 %v159, %v1552
    %v1554 = vpop.f32.mrb[0].mxu0
    %1555 = vdwg.mxu0
    %1556 = vmatprep.subr.mxu0 %v99
    %1557 = vmatpush1.msra.mxu0 %v98
    %1558 = vmatprep.subr.mxu0 %v102
    %1559 = vmatpush1.msra.mxu0 %v101
    %1560 = vmatprep.subr.mxu0 %v105
    %1561 = vmatpush1.msra.mxu0 %v104
    %1562 = vmatprep.subr.mxu0 %v108
    %1563 = vmatpush1.msra.mxu0 %v107
    %1564 = vmatprep.subr.mxu0 %v111
    %1565 = vmatpush1.msra.mxu0 %v110
    %1566 = vmatprep.subr.mxu0 %v114
    %1567 = vmatpush1.msra.mxu0 %v113
    %1568 = vmatprep.subr.mxu0 %v117
    %1569 = vmatpush1.msra.mxu0 %v116
    %1570 = vmatprep.subr.mxu0 %v120
    %1571 = vmatpush1.msra.mxu0 %v119
    %1572 = vmatprep.subr.mxu0 %v123
    %1573 = vmatpush1.msra.mxu0 %v122
    %1574 = vmatprep.subr.mxu0 %v126
    %1575 = vmatpush1.msra.mxu0 %v125
    %1576 = vmatprep.subr.mxu0 %v129
    %1577 = vmatpush1.msra.mxu0 %v128
    %1578 = vmatprep.subr.mxu0 %v132
    %1579 = vmatpush1.msra.mxu0 %v131
    %1580 = vmatprep.subr.mxu0 %v135
    %1581 = vmatpush1.msra.mxu0 %v134
    %1582 = vmatprep.subr.mxu0 %v138
    %1583 = vmatpush1.msra.mxu0 %v137
    %1584 = vmatprep.subr.mxu0 %v141
    %1585 = vmatpush1.msra.mxu0 %v140
    %1586 = vmatprep.subr.mxu0 %v144
    %1587 = vmatpush1.msra.mxu0 %v143
    %1588 = vmatprep.subr.mxu0 0.0
    %1589 = vmatpush1.msra.mxu0 0.0
    %1590 = vmatprep.subr.mxu0 0.0
    %1591 = vmatpush1.msra.mxu0 0.0
    %1592 = vmatprep.subr.mxu0 0.0
    %1593 = vmatpush1.msra.mxu0 0.0
    %1594 = vmatprep.subr.mxu0 0.0
    %1595 = vmatpush1.msra.mxu0 0.0
    %1596 = vmatprep.subr.mxu0 0.0
    %1597 = vmatpush1.msra.mxu0 0.0
    %1598 = vmatprep.subr.mxu0 0.0
    %1599 = vmatpush1.msra.mxu0 0.0
    %1600 = vmatprep.subr.mxu0 0.0
    %1601 = vmatpush1.msra.mxu0 0.0
    %1602 = vmatprep.subr.mxu0 0.0
    %1603 = vmatpush1.msra.mxu0 0.0
    %1604 = vmatprep.subr.mxu0 0.0
    %1605 = vmatpush1.msra.mxu0 0.0
    %1606 = vmatprep.subr.mxu0 0.0
    %1607 = vmatpush1.msra.mxu0 0.0
    %1608 = vmatprep.subr.mxu0 0.0
    %1609 = vmatpush1.msra.mxu0 0.0
    %1610 = vmatprep.subr.mxu0 0.0
    %1611 = vmatpush1.msra.mxu0 0.0
    %1612 = vmatprep.subr.mxu0 0.0
    %1613 = vmatpush1.msra.mxu0 0.0
    %1614 = vmatprep.subr.mxu0 0.0
    %1615 = vmatpush1.msra.mxu0 0.0
    %1616 = vmatprep.subr.mxu0 0.0
    %1617 = vmatpush1.msra.mxu0 0.0
    %1618 = vmatprep.subr.mxu0 0.0
    %1619 = vmatpush1.msra.mxu0 0.0
    %1620 = vmatprep.mubr.f32.mxu0 0.0
    %1621 = vmatmul.mubr.f32.gmra.mrb[0].mxu0 %v1407
    %v1622 = vpop.f32.mrb[0].mxu0
    %v1623 = vadd.f32 0.0, %v1622
    %v1624 = vpop.f32.mrb[0].mxu0
    %v1625 = vadd.f32 0.0, %v1624
    %1626 = vdwg.mxu0
    %1627 = vmatprep.subr.mxu0 0.0
    %1628 = vmatpush1.msra.mxu0 %v100
    %1629 = vmatprep.subr.mxu0 0.0
    %1630 = vmatpush1.msra.mxu0 %v103
    %1631 = vmatprep.subr.mxu0 0.0
    %1632 = vmatpush1.msra.mxu0 %v106
    %1633 = vmatprep.subr.mxu0 0.0
    %1634 = vmatpush1.msra.mxu0 %v109
    %1635 = vmatprep.subr.mxu0 0.0
    %1636 = vmatpush1.msra.mxu0 %v112
    %1637 = vmatprep.subr.mxu0 0.0
    %1638 = vmatpush1.msra.mxu0 %v115
    %1639 = vmatprep.subr.mxu0 0.0
    %1640 = vmatpush1.msra.mxu0 %v118
    %1641 = vmatprep.subr.mxu0 0.0
    %1642 = vmatpush1.msra.mxu0 %v121
    %1643 = vmatprep.subr.mxu0 0.0
    %1644 = vmatpush1.msra.mxu0 %v124
    %1645 = vmatprep.subr.mxu0 0.0
    %1646 = vmatpush1.msra.mxu0 %v127
    %1647 = vmatprep.subr.mxu0 0.0
    %1648 = vmatpush1.msra.mxu0 %v130
    %1649 = vmatprep.subr.mxu0 0.0
    %1650 = vmatpush1.msra.mxu0 %v133
    %1651 = vmatprep.subr.mxu0 0.0
    %1652 = vmatpush1.msra.mxu0 %v136
    %1653 = vmatprep.subr.mxu0 0.0
    %1654 = vmatpush1.msra.mxu0 %v139
    %1655 = vmatprep.subr.mxu0 0.0
    %1656 = vmatpush1.msra.mxu0 %v142
    %1657 = vmatprep.subr.mxu0 0.0
    %1658 = vmatpush1.msra.mxu0 %v145
    %1659 = vmatprep.subr.mxu0 0.0
    %1660 = vmatpush1.msra.mxu0 0.0
    %1661 = vmatprep.subr.mxu0 0.0
    %1662 = vmatpush1.msra.mxu0 0.0
    %1663 = vmatprep.subr.mxu0 0.0
    %1664 = vmatpush1.msra.mxu0 0.0
    %1665 = vmatprep.subr.mxu0 0.0
    %1666 = vmatpush1.msra.mxu0 0.0
    %1667 = vmatprep.subr.mxu0 0.0
    %1668 = vmatpush1.msra.mxu0 0.0
    %1669 = vmatprep.subr.mxu0 0.0
    %1670 = vmatpush1.msra.mxu0 0.0
    %1671 = vmatprep.subr.mxu0 0.0
    %1672 = vmatpush1.msra.mxu0 0.0
    %1673 = vmatprep.subr.mxu0 0.0
    %1674 = vmatpush1.msra.mxu0 0.0
    %1675 = vmatprep.subr.mxu0 0.0
    %1676 = vmatpush1.msra.mxu0 0.0
    %1677 = vmatprep.subr.mxu0 0.0
    %1678 = vmatpush1.msra.mxu0 0.0
    %1679 = vmatprep.subr.mxu0 0.0
    %1680 = vmatpush1.msra.mxu0 0.0
    %1681 = vmatprep.subr.mxu0 0.0
    %1682 = vmatpush1.msra.mxu0 0.0
    %1683 = vmatprep.subr.mxu0 0.0
    %1684 = vmatpush1.msra.mxu0 0.0
    %1685 = vmatprep.subr.mxu0 0.0
    %1686 = vmatpush1.msra.mxu0 0.0
    %1687 = vmatprep.subr.mxu0 0.0
    %1688 = vmatpush1.msra.mxu0 0.0
    %1689 = vmatprep.subr.mxu0 0.0
    %1690 = vmatpush1.msra.mxu0 0.0
    %1691 = vmatprep.mubr.f32.mxu0 0.0
    %1692 = vmatmul.mubr.f32.gmra.mrb[0].mxu0 %v1407
    %v1693 = vpop.f32.mrb[0].mxu0
    %v1694 = vadd.f32 0.0, %v1693
    %v1695 = vpop.f32.mrb[0].mxu0
    %1696 = vdwg.mxu0
    %v1697 = vadd.f32 %v1482, %v1623
    %v1698 = vxor.u32 %v1697, 2147483648
    %v1699 = vmul.f32 %v1698, 1.442695
    %v1700 = vpow.pop %v1699
    %v1701 = vadd.f32 %v1700, 1.0
    %v1702 = vrcp.pop %v1701
    %v1703 = vmul.f32 1.0, %v1702
    %v1704 = vadd.f32 %v1484, %v1625
    %v1705 = vxor.u32 %v1704, 2147483648
    %v1706 = vmul.f32 %v1705, 1.442695
    %v1707 = vpow.pop %v1706
    %v1708 = vadd.f32 %v1707, 1.0
    %v1709 = vrcp.pop %v1708
    %v1710 = vmul.f32 1.0, %v1709
    %v1711 = vadd.f32 %v1694, %v168
    %v1712 = vmul.f32 %v1703, %v1711
    %v1713 = vadd.f32 %v1553, %v1712
    %v1714 = vtanh.pop %v1713
    %v1715 = vsub.f32 %v1407, %v1714
    %v1716 = vmul.f32 %v1710, %v1715
    %v1717 = vadd.f32 %v1714, %v1716
    %s1718 = scalar_lea.vmem [#allocation10], 32
    %1719 = vst [vmem:[%s1718] sm:$0xff] %v1717
    %s1720 = scalar_lea.vmem [#allocation2], 40
    %v1721 = vld [vmem:[%s1720] sm:$0xff]
    %v1723 = vsel %vm172, %v1721, 0
    %1725 = vmatprep.subr.mxu0 %v87
    %1726 = vmatpush1.msra.mxu0 %v86
    %1727 = vmatprep.subr.mxu0 %v90
    %1728 = vmatpush1.msra.mxu0 %v89
    %1729 = vmatprep.subr.mxu0 %v93
    %1730 = vmatpush1.msra.mxu0 %v92
    %1731 = vmatprep.subr.mxu0 %v96
    %1732 = vmatpush1.msra.mxu0 %v95
    %1733 = vmatprep.subr.mxu0 0.0
    %1734 = vmatpush1.msra.mxu0 0.0
    %1735 = vmatprep.subr.mxu0 0.0
    %1736 = vmatpush1.msra.mxu0 0.0
    %1737 = vmatprep.subr.mxu0 0.0
    %1738 = vmatpush1.msra.mxu0 0.0
    %1739 = vmatprep.subr.mxu0 0.0
    %1740 = vmatpush1.msra.mxu0 0.0
    %1741 = vmatprep.subr.mxu0 0.0
    %1742 = vmatpush1.msra.mxu0 0.0
    %1743 = vmatprep.subr.mxu0 0.0
    %1744 = vmatpush1.msra.mxu0 0.0
    %1745 = vmatprep.subr.mxu0 0.0
    %1746 = vmatpush1.msra.mxu0 0.0
    %1747 = vmatprep.subr.mxu0 0.0
    %1748 = vmatpush1.msra.mxu0 0.0
    %1749 = vmatprep.subr.mxu0 0.0
    %1750 = vmatpush1.msra.mxu0 0.0
    %1751 = vmatprep.subr.mxu0 0.0
    %1752 = vmatpush1.msra.mxu0 0.0
    %1753 = vmatprep.subr.mxu0 0.0
    %1754 = vmatpush1.msra.mxu0 0.0
    %1755 = vmatprep.subr.mxu0 0.0
    %1756 = vmatpush1.msra.mxu0 0.0
    %1757 = vmatprep.subr.mxu0 0.0
    %1758 = vmatpush1.msra.mxu0 0.0
    %1759 = vmatprep.subr.mxu0 0.0
    %1760 = vmatpush1.msra.mxu0 0.0
    %1761 = vmatprep.subr.mxu0 0.0
    %1762 = vmatpush1.msra.mxu0 0.0
    %1763 = vmatprep.subr.mxu0 0.0
    %1764 = vmatpush1.msra.mxu0 0.0
    %1765 = vmatprep.subr.mxu0 0.0
    %1766 = vmatpush1.msra.mxu0 0.0
    %1767 = vmatprep.subr.mxu0 0.0
    %1768 = vmatpush1.msra.mxu0 0.0
    %1769 = vmatprep.subr.mxu0 0.0
    %1770 = vmatpush1.msra.mxu0 0.0
    %1771 = vmatprep.subr.mxu0 0.0
    %1772 = vmatpush1.msra.mxu0 0.0
    %1773 = vmatprep.subr.mxu0 0.0
    %1774 = vmatpush1.msra.mxu0 0.0
    %1775 = vmatprep.subr.mxu0 0.0
    %1776 = vmatpush1.msra.mxu0 0.0
    %1777 = vmatprep.subr.mxu0 0.0
    %1778 = vmatpush1.msra.mxu0 0.0
    %1779 = vmatprep.subr.mxu0 0.0
    %1780 = vmatpush1.msra.mxu0 0.0
    %1781 = vmatprep.subr.mxu0 0.0
    %1782 = vmatpush1.msra.mxu0 0.0
    %1783 = vmatprep.subr.mxu0 0.0
    %1784 = vmatpush1.msra.mxu0 0.0
    %1785 = vmatprep.subr.mxu0 0.0
    %1786 = vmatpush1.msra.mxu0 0.0
    %1787 = vmatprep.subr.mxu0 0.0
    %1788 = vmatpush1.msra.mxu0 0.0
    %1789 = vmatprep.mubr.f32.mxu0 0.0
    %1790 = vmatmul.mubr.f32.gmra.mrb[0].mxu0 %v1723
    %v1791 = vpop.f32.mrb[0].mxu0
    %v1792 = vadd.f32 %v151, %v1791
    %v1793 = vpop.f32.mrb[0].mxu0
    %v1794 = vadd.f32 %v155, %v1793
    %1795 = vdwg.mxu0
    %1796 = vmatprep.subr.mxu0 0.0
    %1797 = vmatpush1.msra.mxu0 %v88
    %1798 = vmatprep.subr.mxu0 0.0
    %1799 = vmatpush1.msra.mxu0 %v91
    %1800 = vmatprep.subr.mxu0 0.0
    %1801 = vmatpush1.msra.mxu0 %v94
    %1802 = vmatprep.subr.mxu0 0.0
    %1803 = vmatpush1.msra.mxu0 %v97
    %1804 = vmatprep.subr.mxu0 0.0
    %1805 = vmatpush1.msra.mxu0 0.0
    %1806 = vmatprep.subr.mxu0 0.0
    %1807 = vmatpush1.msra.mxu0 0.0
    %1808 = vmatprep.subr.mxu0 0.0
    %1809 = vmatpush1.msra.mxu0 0.0
    %1810 = vmatprep.subr.mxu0 0.0
    %1811 = vmatpush1.msra.mxu0 0.0
    %1812 = vmatprep.subr.mxu0 0.0
    %1813 = vmatpush1.msra.mxu0 0.0
    %1814 = vmatprep.subr.mxu0 0.0
    %1815 = vmatpush1.msra.mxu0 0.0
    %1816 = vmatprep.subr.mxu0 0.0
    %1817 = vmatpush1.msra.mxu0 0.0
    %1818 = vmatprep.subr.mxu0 0.0
    %1819 = vmatpush1.msra.mxu0 0.0
    %1820 = vmatprep.subr.mxu0 0.0
    %1821 = vmatpush1.msra.mxu0 0.0
    %1822 = vmatprep.subr.mxu0 0.0
    %1823 = vmatpush1.msra.mxu0 0.0
    %1824 = vmatprep.subr.mxu0 0.0
    %1825 = vmatpush1.msra.mxu0 0.0
    %1826 = vmatprep.subr.mxu0 0.0
    %1827 = vmatpush1.msra.mxu0 0.0
    %1828 = vmatprep.subr.mxu0 0.0
    %1829 = vmatpush1.msra.mxu0 0.0
    %1830 = vmatprep.subr.mxu0 0.0
    %1831 = vmatpush1.msra.mxu0 0.0
    %1832 = vmatprep.subr.mxu0 0.0
    %1833 = vmatpush1.msra.mxu0 0.0
    %1834 = vmatprep.subr.mxu0 0.0
    %1835 = vmatpush1.msra.mxu0 0.0
    %1836 = vmatprep.subr.mxu0 0.0
    %1837 = vmatpush1.msra.mxu0 0.0
    %1838 = vmatprep.subr.mxu0 0.0
    %1839 = vmatpush1.msra.mxu0 0.0
    %1840 = vmatprep.subr.mxu0 0.0
    %1841 = vmatpush1.msra.mxu0 0.0
    %1842 = vmatprep.subr.mxu0 0.0
    %1843 = vmatpush1.msra.mxu0 0.0
    %1844 = vmatprep.subr.mxu0 0.0
    %1845 = vmatpush1.msra.mxu0 0.0
    %1846 = vmatprep.subr.mxu0 0.0
    %1847 = vmatpush1.msra.mxu0 0.0
    %1848 = vmatprep.subr.mxu0 0.0
    %1849 = vmatpush1.msra.mxu0 0.0
    %1850 = vmatprep.subr.mxu0 0.0
    %1851 = vmatpush1.msra.mxu0 0.0
    %1852 = vmatprep.subr.mxu0 0.0
    %1853 = vmatpush1.msra.mxu0 0.0
    %1854 = vmatprep.subr.mxu0 0.0
    %1855 = vmatpush1.msra.mxu0 0.0
    %1856 = vmatprep.subr.mxu0 0.0
    %1857 = vmatpush1.msra.mxu0 0.0
    %1858 = vmatprep.subr.mxu0 0.0
    %1859 = vmatpush1.msra.mxu0 0.0
    %1860 = vmatprep.mubr.f32.mxu0 0.0
    %1861 = vmatmul.mubr.f32.gmra.mrb[0].mxu0 %v1723
    %v1862 = vpop.f32.mrb[0].mxu0
    %v1863 = vadd.f32 %v159, %v1862
    %v1864 = vpop.f32.mrb[0].mxu0
    %1865 = vdwg.mxu0
    %1866 = vmatprep.subr.mxu0 %v99
    %1867 = vmatpush1.msra.mxu0 %v98
    %1868 = vmatprep.subr.mxu0 %v102
    %1869 = vmatpush1.msra.mxu0 %v101
    %1870 = vmatprep.subr.mxu0 %v105
    %1871 = vmatpush1.msra.mxu0 %v104
    %1872 = vmatprep.subr.mxu0 %v108
    %1873 = vmatpush1.msra.mxu0 %v107
    %1874 = vmatprep.subr.mxu0 %v111
    %1875 = vmatpush1.msra.mxu0 %v110
    %1876 = vmatprep.subr.mxu0 %v114
    %1877 = vmatpush1.msra.mxu0 %v113
    %1878 = vmatprep.subr.mxu0 %v117
    %1879 = vmatpush1.msra.mxu0 %v116
    %1880 = vmatprep.subr.mxu0 %v120
    %1881 = vmatpush1.msra.mxu0 %v119
    %1882 = vmatprep.subr.mxu0 %v123
    %1883 = vmatpush1.msra.mxu0 %v122
    %1884 = vmatprep.subr.mxu0 %v126
    %1885 = vmatpush1.msra.mxu0 %v125
    %1886 = vmatprep.subr.mxu0 %v129
    %1887 = vmatpush1.msra.mxu0 %v128
    %1888 = vmatprep.subr.mxu0 %v132
    %1889 = vmatpush1.msra.mxu0 %v131
    %1890 = vmatprep.subr.mxu0 %v135
    %1891 = vmatpush1.msra.mxu0 %v134
    %1892 = vmatprep.subr.mxu0 %v138
    %1893 = vmatpush1.msra.mxu0 %v137
    %1894 = vmatprep.subr.mxu0 %v141
    %1895 = vmatpush1.msra.mxu0 %v140
    %1896 = vmatprep.subr.mxu0 %v144
    %1897 = vmatpush1.msra.mxu0 %v143
    %1898 = vmatprep.subr.mxu0 0.0
    %1899 = vmatpush1.msra.mxu0 0.0
    %1900 = vmatprep.subr.mxu0 0.0
    %1901 = vmatpush1.msra.mxu0 0.0
    %1902 = vmatprep.subr.mxu0 0.0
    %1903 = vmatpush1.msra.mxu0 0.0
    %1904 = vmatprep.subr.mxu0 0.0
    %1905 = vmatpush1.msra.mxu0 0.0
    %1906 = vmatprep.subr.mxu0 0.0
    %1907 = vmatpush1.msra.mxu0 0.0
    %1908 = vmatprep.subr.mxu0 0.0
    %1909 = vmatpush1.msra.mxu0 0.0
    %1910 = vmatprep.subr.mxu0 0.0
    %1911 = vmatpush1.msra.mxu0 0.0
    %1912 = vmatprep.subr.mxu0 0.0
    %1913 = vmatpush1.msra.mxu0 0.0
    %1914 = vmatprep.subr.mxu0 0.0
    %1915 = vmatpush1.msra.mxu0 0.0
    %1916 = vmatprep.subr.mxu0 0.0
    %1917 = vmatpush1.msra.mxu0 0.0
    %1918 = vmatprep.subr.mxu0 0.0
    %1919 = vmatpush1.msra.mxu0 0.0
    %1920 = vmatprep.subr.mxu0 0.0
    %1921 = vmatpush1.msra.mxu0 0.0
    %1922 = vmatprep.subr.mxu0 0.0
    %1923 = vmatpush1.msra.mxu0 0.0
    %1924 = vmatprep.subr.mxu0 0.0
    %1925 = vmatpush1.msra.mxu0 0.0
    %1926 = vmatprep.subr.mxu0 0.0
    %1927 = vmatpush1.msra.mxu0 0.0
    %1928 = vmatprep.subr.mxu0 0.0
    %1929 = vmatpush1.msra.mxu0 0.0
    %1930 = vmatprep.mubr.f32.mxu0 0.0
    %1931 = vmatmul.mubr.f32.gmra.mrb[0].mxu0 %v1717
    %v1932 = vpop.f32.mrb[0].mxu0
    %v1933 = vadd.f32 0.0, %v1932
    %v1934 = vpop.f32.mrb[0].mxu0
    %v1935 = vadd.f32 0.0, %v1934
    %1936 = vdwg.mxu0
    %1937 = vmatprep.subr.mxu0 0.0
    %1938 = vmatpush1.msra.mxu0 %v100
    %1939 = vmatprep.subr.mxu0 0.0
    %1940 = vmatpush1.msra.mxu0 %v103
    %1941 = vmatprep.subr.mxu0 0.0
    %1942 = vmatpush1.msra.mxu0 %v106
    %1943 = vmatprep.subr.mxu0 0.0
    %1944 = vmatpush1.msra.mxu0 %v109
    %1945 = vmatprep.subr.mxu0 0.0
    %1946 = vmatpush1.msra.mxu0 %v112
    %1947 = vmatprep.subr.mxu0 0.0
    %1948 = vmatpush1.msra.mxu0 %v115
    %1949 = vmatprep.subr.mxu0 0.0
    %1950 = vmatpush1.msra.mxu0 %v118
    %1951 = vmatprep.subr.mxu0 0.0
    %1952 = vmatpush1.msra.mxu0 %v121
    %1953 = vmatprep.subr.mxu0 0.0
    %1954 = vmatpush1.msra.mxu0 %v124
    %1955 = vmatprep.subr.mxu0 0.0
    %1956 = vmatpush1.msra.mxu0 %v127
    %1957 = vmatprep.subr.mxu0 0.0
    %1958 = vmatpush1.msra.mxu0 %v130
    %1959 = vmatprep.subr.mxu0 0.0
    %1960 = vmatpush1.msra.mxu0 %v133
    %1961 = vmatprep.subr.mxu0 0.0
    %1962 = vmatpush1.msra.mxu0 %v136
    %1963 = vmatprep.subr.mxu0 0.0
    %1964 = vmatpush1.msra.mxu0 %v139
    %1965 = vmatprep.subr.mxu0 0.0
    %1966 = vmatpush1.msra.mxu0 %v142
    %1967 = vmatprep.subr.mxu0 0.0
    %1968 = vmatpush1.msra.mxu0 %v145
    %1969 = vmatprep.subr.mxu0 0.0
    %1970 = vmatpush1.msra.mxu0 0.0
    %1971 = vmatprep.subr.mxu0 0.0
    %1972 = vmatpush1.msra.mxu0 0.0
    %1973 = vmatprep.subr.mxu0 0.0
    %1974 = vmatpush1.msra.mxu0 0.0
    %1975 = vmatprep.subr.mxu0 0.0
    %1976 = vmatpush1.msra.mxu0 0.0
    %1977 = vmatprep.subr.mxu0 0.0
    %1978 = vmatpush1.msra.mxu0 0.0
    %1979 = vmatprep.subr.mxu0 0.0
    %1980 = vmatpush1.msra.mxu0 0.0
    %1981 = vmatprep.subr.mxu0 0.0
    %1982 = vmatpush1.msra.mxu0 0.0
    %1983 = vmatprep.subr.mxu0 0.0
    %1984 = vmatpush1.msra.mxu0 0.0
    %1985 = vmatprep.subr.mxu0 0.0
    %1986 = vmatpush1.msra.mxu0 0.0
    %1987 = vmatprep.subr.mxu0 0.0
    %1988 = vmatpush1.msra.mxu0 0.0
    %1989 = vmatprep.subr.mxu0 0.0
    %1990 = vmatpush1.msra.mxu0 0.0
    %1991 = vmatprep.subr.mxu0 0.0
    %1992 = vmatpush1.msra.mxu0 0.0
    %1993 = vmatprep.subr.mxu0 0.0
    %1994 = vmatpush1.msra.mxu0 0.0
    %1995 = vmatprep.subr.mxu0 0.0
    %1996 = vmatpush1.msra.mxu0 0.0
    %1997 = vmatprep.subr.mxu0 0.0
    %1998 = vmatpush1.msra.mxu0 0.0
    %1999 = vmatprep.subr.mxu0 0.0
    %2000 = vmatpush1.msra.mxu0 0.0
    %2001 = vmatprep.mubr.f32.mxu0 0.0
    %2002 = vmatmul.mubr.f32.gmra.mrb[0].mxu0 %v1717
    %v2003 = vpop.f32.mrb[0].mxu0
    %v2004 = vadd.f32 0.0, %v2003
    %v2005 = vpop.f32.mrb[0].mxu0
    %2006 = vdwg.mxu0
    %v2007 = vadd.f32 %v1792, %v1933
    %v2008 = vxor.u32 %v2007, 2147483648
    %v2009 = vmul.f32 %v2008, 1.442695
    %v2010 = vpow.pop %v2009
    %v2011 = vadd.f32 %v2010, 1.0
    %v2012 = vrcp.pop %v2011
    %v2013 = vmul.f32 1.0, %v2012
    %v2014 = vadd.f32 %v1794, %v1935
    %v2015 = vxor.u32 %v2014, 2147483648
    %v2016 = vmul.f32 %v2015, 1.442695
    %v2017 = vpow.pop %v2016
    %v2018 = vadd.f32 %v2017, 1.0
    %v2019 = vrcp.pop %v2018
    %v2020 = vmul.f32 1.0, %v2019
    %v2021 = vadd.f32 %v2004, %v168
    %v2022 = vmul.f32 %v2013, %v2021
    %v2023 = vadd.f32 %v1863, %v2022
    %v2024 = vtanh.pop %v2023
    %v2025 = vsub.f32 %v1717, %v2024
    %v2026 = vmul.f32 %v2020, %v2025
    %v2027 = vadd.f32 %v2024, %v2026
    %s2028 = scalar_lea.vmem [#allocation10], 40
    %2029 = vst [vmem:[%s2028] sm:$0xff] %v2027
    %s2030 = scalar_lea.vmem [#allocation2], 48
    %v2031 = vld [vmem:[%s2030] sm:$0xff]
    %v2033 = vsel %vm172, %v2031, 0
    %2035 = vmatprep.subr.mxu0 %v87
    %2036 = vmatpush1.msra.mxu0 %v86
    %2037 = vmatprep.subr.mxu0 %v90
    %2038 = vmatpush1.msra.mxu0 %v89
    %2039 = vmatprep.subr.mxu0 %v93
    %2040 = vmatpush1.msra.mxu0 %v92
    %2041 = vmatprep.subr.mxu0 %v96
    %2042 = vmatpush1.msra.mxu0 %v95
    %2043 = vmatprep.subr.mxu0 0.0
    %2044 = vmatpush1.msra.mxu0 0.0
    %2045 = vmatprep.subr.mxu0 0.0
    %2046 = vmatpush1.msra.mxu0 0.0
    %2047 = vmatprep.subr.mxu0 0.0
    %2048 = vmatpush1.msra.mxu0 0.0
    %2049 = vmatprep.subr.mxu0 0.0
    %2050 = vmatpush1.msra.mxu0 0.0
    %2051 = vmatprep.subr.mxu0 0.0
    %2052 = vmatpush1.msra.mxu0 0.0
    %2053 = vmatprep.subr.mxu0 0.0
    %2054 = vmatpush1.msra.mxu0 0.0
    %2055 = vmatprep.subr.mxu0 0.0
    %2056 = vmatpush1.msra.mxu0 0.0
    %2057 = vmatprep.subr.mxu0 0.0
    %2058 = vmatpush1.msra.mxu0 0.0
    %2059 = vmatprep.subr.mxu0 0.0
    %2060 = vmatpush1.msra.mxu0 0.0
    %2061 = vmatprep.subr.mxu0 0.0
    %2062 = vmatpush1.msra.mxu0 0.0
    %2063 = vmatprep.subr.mxu0 0.0
    %2064 = vmatpush1.msra.mxu0 0.0
    %2065 = vmatprep.subr.mxu0 0.0
    %2066 = vmatpush1.msra.mxu0 0.0
    %2067 = vmatprep.subr.mxu0 0.0
    %2068 = vmatpush1.msra.mxu0 0.0
    %2069 = vmatprep.subr.mxu0 0.0
    %2070 = vmatpush1.msra.mxu0 0.0
    %2071 = vmatprep.subr.mxu0 0.0
    %2072 = vmatpush1.msra.mxu0 0.0
    %2073 = vmatprep.subr.mxu0 0.0
    %2074 = vmatpush1.msra.mxu0 0.0
    %2075 = vmatprep.subr.mxu0 0.0
    %2076 = vmatpush1.msra.mxu0 0.0
    %2077 = vmatprep.subr.mxu0 0.0
    %2078 = vmatpush1.msra.mxu0 0.0
    %2079 = vmatprep.subr.mxu0 0.0
    %2080 = vmatpush1.msra.mxu0 0.0
    %2081 = vmatprep.subr.mxu0 0.0
    %2082 = vmatpush1.msra.mxu0 0.0
    %2083 = vmatprep.subr.mxu0 0.0
    %2084 = vmatpush1.msra.mxu0 0.0
    %2085 = vmatprep.subr.mxu0 0.0
    %2086 = vmatpush1.msra.mxu0 0.0
    %2087 = vmatprep.subr.mxu0 0.0
    %2088 = vmatpush1.msra.mxu0 0.0
    %2089 = vmatprep.subr.mxu0 0.0
    %2090 = vmatpush1.msra.mxu0 0.0
    %2091 = vmatprep.subr.mxu0 0.0
    %2092 = vmatpush1.msra.mxu0 0.0
    %2093 = vmatprep.subr.mxu0 0.0
    %2094 = vmatpush1.msra.mxu0 0.0
    %2095 = vmatprep.subr.mxu0 0.0
    %2096 = vmatpush1.msra.mxu0 0.0
    %2097 = vmatprep.subr.mxu0 0.0
    %2098 = vmatpush1.msra.mxu0 0.0
    %2099 = vmatprep.mubr.f32.mxu0 0.0
    %2100 = vmatmul.mubr.f32.gmra.mrb[0].mxu0 %v2033
    %v2101 = vpop.f32.mrb[0].mxu0
    %v2102 = vadd.f32 %v151, %v2101
    %v2103 = vpop.f32.mrb[0].mxu0
    %v2104 = vadd.f32 %v155, %v2103
    %2105 = vdwg.mxu0
    %2106 = vmatprep.subr.mxu0 0.0
    %2107 = vmatpush1.msra.mxu0 %v88
    %2108 = vmatprep.subr.mxu0 0.0
    %2109 = vmatpush1.msra.mxu0 %v91
    %2110 = vmatprep.subr.mxu0 0.0
    %2111 = vmatpush1.msra.mxu0 %v94
    %2112 = vmatprep.subr.mxu0 0.0
    %2113 = vmatpush1.msra.mxu0 %v97
    %2114 = vmatprep.subr.mxu0 0.0
    %2115 = vmatpush1.msra.mxu0 0.0
    %2116 = vmatprep.subr.mxu0 0.0
    %2117 = vmatpush1.msra.mxu0 0.0
    %2118 = vmatprep.subr.mxu0 0.0
    %2119 = vmatpush1.msra.mxu0 0.0
    %2120 = vmatprep.subr.mxu0 0.0
    %2121 = vmatpush1.msra.mxu0 0.0
    %2122 = vmatprep.subr.mxu0 0.0
    %2123 = vmatpush1.msra.mxu0 0.0
    %2124 = vmatprep.subr.mxu0 0.0
    %2125 = vmatpush1.msra.mxu0 0.0
    %2126 = vmatprep.subr.mxu0 0.0
    %2127 = vmatpush1.msra.mxu0 0.0
    %2128 = vmatprep.subr.mxu0 0.0
    %2129 = vmatpush1.msra.mxu0 0.0
    %2130 = vmatprep.subr.mxu0 0.0
    %2131 = vmatpush1.msra.mxu0 0.0
    %2132 = vmatprep.subr.mxu0 0.0
    %2133 = vmatpush1.msra.mxu0 0.0
    %2134 = vmatprep.subr.mxu0 0.0
    %2135 = vmatpush1.msra.mxu0 0.0
    %2136 = vmatprep.subr.mxu0 0.0
    %2137 = vmatpush1.msra.mxu0 0.0
    %2138 = vmatprep.subr.mxu0 0.0
    %2139 = vmatpush1.msra.mxu0 0.0
    %2140 = vmatprep.subr.mxu0 0.0
    %2141 = vmatpush1.msra.mxu0 0.0
    %2142 = vmatprep.subr.mxu0 0.0
    %2143 = vmatpush1.msra.mxu0 0.0
    %2144 = vmatprep.subr.mxu0 0.0
    %2145 = vmatpush1.msra.mxu0 0.0
    %2146 = vmatprep.subr.mxu0 0.0
    %2147 = vmatpush1.msra.mxu0 0.0
    %2148 = vmatprep.subr.mxu0 0.0
    %2149 = vmatpush1.msra.mxu0 0.0
    %2150 = vmatprep.subr.mxu0 0.0
    %2151 = vmatpush1.msra.mxu0 0.0
    %2152 = vmatprep.subr.mxu0 0.0
    %2153 = vmatpush1.msra.mxu0 0.0
    %2154 = vmatprep.subr.mxu0 0.0
    %2155 = vmatpush1.msra.mxu0 0.0
    %2156 = vmatprep.subr.mxu0 0.0
    %2157 = vmatpush1.msra.mxu0 0.0
    %2158 = vmatprep.subr.mxu0 0.0
    %2159 = vmatpush1.msra.mxu0 0.0
    %2160 = vmatprep.subr.mxu0 0.0
    %2161 = vmatpush1.msra.mxu0 0.0
    %2162 = vmatprep.subr.mxu0 0.0
    %2163 = vmatpush1.msra.mxu0 0.0
    %2164 = vmatprep.subr.mxu0 0.0
    %2165 = vmatpush1.msra.mxu0 0.0
    %2166 = vmatprep.subr.mxu0 0.0
    %2167 = vmatpush1.msra.mxu0 0.0
    %2168 = vmatprep.subr.mxu0 0.0
    %2169 = vmatpush1.msra.mxu0 0.0
    %2170 = vmatprep.mubr.f32.mxu0 0.0
    %2171 = vmatmul.mubr.f32.gmra.mrb[0].mxu0 %v2033
    %v2172 = vpop.f32.mrb[0].mxu0
    %v2173 = vadd.f32 %v159, %v2172
    %v2174 = vpop.f32.mrb[0].mxu0
    %2175 = vdwg.mxu0
    %2176 = vmatprep.subr.mxu0 %v99
    %2177 = vmatpush1.msra.mxu0 %v98
    %2178 = vmatprep.subr.mxu0 %v102
    %2179 = vmatpush1.msra.mxu0 %v101
    %2180 = vmatprep.subr.mxu0 %v105
    %2181 = vmatpush1.msra.mxu0 %v104
    %2182 = vmatprep.subr.mxu0 %v108
    %2183 = vmatpush1.msra.mxu0 %v107
    %2184 = vmatprep.subr.mxu0 %v111
    %2185 = vmatpush1.msra.mxu0 %v110
    %2186 = vmatprep.subr.mxu0 %v114
    %2187 = vmatpush1.msra.mxu0 %v113
    %2188 = vmatprep.subr.mxu0 %v117
    %2189 = vmatpush1.msra.mxu0 %v116
    %2190 = vmatprep.subr.mxu0 %v120
    %2191 = vmatpush1.msra.mxu0 %v119
    %2192 = vmatprep.subr.mxu0 %v123
    %2193 = vmatpush1.msra.mxu0 %v122
    %2194 = vmatprep.subr.mxu0 %v126
    %2195 = vmatpush1.msra.mxu0 %v125
    %2196 = vmatprep.subr.mxu0 %v129
    %2197 = vmatpush1.msra.mxu0 %v128
    %2198 = vmatprep.subr.mxu0 %v132
    %2199 = vmatpush1.msra.mxu0 %v131
    %2200 = vmatprep.subr.mxu0 %v135
    %2201 = vmatpush1.msra.mxu0 %v134
    %2202 = vmatprep.subr.mxu0 %v138
    %2203 = vmatpush1.msra.mxu0 %v137
    %2204 = vmatprep.subr.mxu0 %v141
    %2205 = vmatpush1.msra.mxu0 %v140
    %2206 = vmatprep.subr.mxu0 %v144
    %2207 = vmatpush1.msra.mxu0 %v143
    %2208 = vmatprep.subr.mxu0 0.0
    %2209 = vmatpush1.msra.mxu0 0.0
    %2210 = vmatprep.subr.mxu0 0.0
    %2211 = vmatpush1.msra.mxu0 0.0
    %2212 = vmatprep.subr.mxu0 0.0
    %2213 = vmatpush1.msra.mxu0 0.0
    %2214 = vmatprep.subr.mxu0 0.0
    %2215 = vmatpush1.msra.mxu0 0.0
    %2216 = vmatprep.subr.mxu0 0.0
    %2217 = vmatpush1.msra.mxu0 0.0
    %2218 = vmatprep.subr.mxu0 0.0
    %2219 = vmatpush1.msra.mxu0 0.0
    %2220 = vmatprep.subr.mxu0 0.0
    %2221 = vmatpush1.msra.mxu0 0.0
    %2222 = vmatprep.subr.mxu0 0.0
    %2223 = vmatpush1.msra.mxu0 0.0
    %2224 = vmatprep.subr.mxu0 0.0
    %2225 = vmatpush1.msra.mxu0 0.0
    %2226 = vmatprep.subr.mxu0 0.0
    %2227 = vmatpush1.msra.mxu0 0.0
    %2228 = vmatprep.subr.mxu0 0.0
    %2229 = vmatpush1.msra.mxu0 0.0
    %2230 = vmatprep.subr.mxu0 0.0
    %2231 = vmatpush1.msra.mxu0 0.0
    %2232 = vmatprep.subr.mxu0 0.0
    %2233 = vmatpush1.msra.mxu0 0.0
    %2234 = vmatprep.subr.mxu0 0.0
    %2235 = vmatpush1.msra.mxu0 0.0
    %2236 = vmatprep.subr.mxu0 0.0
    %2237 = vmatpush1.msra.mxu0 0.0
    %2238 = vmatprep.subr.mxu0 0.0
    %2239 = vmatpush1.msra.mxu0 0.0
    %2240 = vmatprep.mubr.f32.mxu0 0.0
    %2241 = vmatmul.mubr.f32.gmra.mrb[0].mxu0 %v2027
    %v2242 = vpop.f32.mrb[0].mxu0
    %v2243 = vadd.f32 0.0, %v2242
    %v2244 = vpop.f32.mrb[0].mxu0
    %v2245 = vadd.f32 0.0, %v2244
    %2246 = vdwg.mxu0
    %2247 = vmatprep.subr.mxu0 0.0
    %2248 = vmatpush1.msra.mxu0 %v100
    %2249 = vmatprep.subr.mxu0 0.0
    %2250 = vmatpush1.msra.mxu0 %v103
    %2251 = vmatprep.subr.mxu0 0.0
    %2252 = vmatpush1.msra.mxu0 %v106
    %2253 = vmatprep.subr.mxu0 0.0
    %2254 = vmatpush1.msra.mxu0 %v109
    %2255 = vmatprep.subr.mxu0 0.0
    %2256 = vmatpush1.msra.mxu0 %v112
    %2257 = vmatprep.subr.mxu0 0.0
    %2258 = vmatpush1.msra.mxu0 %v115
    %2259 = vmatprep.subr.mxu0 0.0
    %2260 = vmatpush1.msra.mxu0 %v118
    %2261 = vmatprep.subr.mxu0 0.0
    %2262 = vmatpush1.msra.mxu0 %v121
    %2263 = vmatprep.subr.mxu0 0.0
    %2264 = vmatpush1.msra.mxu0 %v124
    %2265 = vmatprep.subr.mxu0 0.0
    %2266 = vmatpush1.msra.mxu0 %v127
    %2267 = vmatprep.subr.mxu0 0.0
    %2268 = vmatpush1.msra.mxu0 %v130
    %2269 = vmatprep.subr.mxu0 0.0
    %2270 = vmatpush1.msra.mxu0 %v133
    %2271 = vmatprep.subr.mxu0 0.0
    %2272 = vmatpush1.msra.mxu0 %v136
    %2273 = vmatprep.subr.mxu0 0.0
    %2274 = vmatpush1.msra.mxu0 %v139
    %2275 = vmatprep.subr.mxu0 0.0
    %2276 = vmatpush1.msra.mxu0 %v142
    %2277 = vmatprep.subr.mxu0 0.0
    %2278 = vmatpush1.msra.mxu0 %v145
    %2279 = vmatprep.subr.mxu0 0.0
    %2280 = vmatpush1.msra.mxu0 0.0
    %2281 = vmatprep.subr.mxu0 0.0
    %2282 = vmatpush1.msra.mxu0 0.0
    %2283 = vmatprep.subr.mxu0 0.0
    %2284 = vmatpush1.msra.mxu0 0.0
    %2285 = vmatprep.subr.mxu0 0.0
    %2286 = vmatpush1.msra.mxu0 0.0
    %2287 = vmatprep.subr.mxu0 0.0
    %2288 = vmatpush1.msra.mxu0 0.0
    %2289 = vmatprep.subr.mxu0 0.0
    %2290 = vmatpush1.msra.mxu0 0.0
    %2291 = vmatprep.subr.mxu0 0.0
    %2292 = vmatpush1.msra.mxu0 0.0
    %2293 = vmatprep.subr.mxu0 0.0
    %2294 = vmatpush1.msra.mxu0 0.0
    %2295 = vmatprep.subr.mxu0 0.0
    %2296 = vmatpush1.msra.mxu0 0.0
    %2297 = vmatprep.subr.mxu0 0.0
    %2298 = vmatpush1.msra.mxu0 0.0
    %2299 = vmatprep.subr.mxu0 0.0
    %2300 = vmatpush1.msra.mxu0 0.0
    %2301 = vmatprep.subr.mxu0 0.0
    %2302 = vmatpush1.msra.mxu0 0.0
    %2303 = vmatprep.subr.mxu0 0.0
    %2304 = vmatpush1.msra.mxu0 0.0
    %2305 = vmatprep.subr.mxu0 0.0
    %2306 = vmatpush1.msra.mxu0 0.0
    %2307 = vmatprep.subr.mxu0 0.0
    %2308 = vmatpush1.msra.mxu0 0.0
    %2309 = vmatprep.subr.mxu0 0.0
    %2310 = vmatpush1.msra.mxu0 0.0
    %2311 = vmatprep.mubr.f32.mxu0 0.0
    %2312 = vmatmul.mubr.f32.gmra.mrb[0].mxu0 %v2027
    %v2313 = vpop.f32.mrb[0].mxu0
    %v2314 = vadd.f32 0.0, %v2313
    %v2315 = vpop.f32.mrb[0].mxu0
    %2316 = vdwg.mxu0
    %v2317 = vadd.f32 %v2102, %v2243
    %v2318 = vxor.u32 %v2317, 2147483648
    %v2319 = vmul.f32 %v2318, 1.442695
    %v2320 = vpow.pop %v2319
    %v2321 = vadd.f32 %v2320, 1.0
    %v2322 = vrcp.pop %v2321
    %v2323 = vmul.f32 1.0, %v2322
    %v2324 = vadd.f32 %v2104, %v2245
    %v2325 = vxor.u32 %v2324, 2147483648
    %v2326 = vmul.f32 %v2325, 1.442695
    %v2327 = vpow.pop %v2326
    %v2328 = vadd.f32 %v2327, 1.0
    %v2329 = vrcp.pop %v2328
    %v2330 = vmul.f32 1.0, %v2329
    %v2331 = vadd.f32 %v2314, %v168
    %v2332 = vmul.f32 %v2323, %v2331
    %v2333 = vadd.f32 %v2173, %v2332
    %v2334 = vtanh.pop %v2333
    %v2335 = vsub.f32 %v2027, %v2334
    %v2336 = vmul.f32 %v2330, %v2335
    %v2337 = vadd.f32 %v2334, %v2336
    %s2338 = scalar_lea.vmem [#allocation10], 48
    %2339 = vst [vmem:[%s2338] sm:$0xff] %v2337
    %s2340 = scalar_lea.vmem [#allocation2], 56
    %v2341 = vld [vmem:[%s2340] sm:$0xff]
    %v2343 = vsel %vm172, %v2341, 0
    %2345 = vmatprep.subr.mxu0 %v87
    %2346 = vmatpush1.msra.mxu0 %v86
    %2347 = vmatprep.subr.mxu0 %v90
    %2348 = vmatpush1.msra.mxu0 %v89
    %2349 = vmatprep.subr.mxu0 %v93
    %2350 = vmatpush1.msra.mxu0 %v92
    %2351 = vmatprep.subr.mxu0 %v96
    %2352 = vmatpush1.msra.mxu0 %v95
    %2353 = vmatprep.subr.mxu0 0.0
    %2354 = vmatpush1.msra.mxu0 0.0
    %2355 = vmatprep.subr.mxu0 0.0
    %2356 = vmatpush1.msra.mxu0 0.0
    %2357 = vmatprep.subr.mxu0 0.0
    %2358 = vmatpush1.msra.mxu0 0.0
    %2359 = vmatprep.subr.mxu0 0.0
    %2360 = vmatpush1.msra.mxu0 0.0
    %2361 = vmatprep.subr.mxu0 0.0
    %2362 = vmatpush1.msra.mxu0 0.0
    %2363 = vmatprep.subr.mxu0 0.0
    %2364 = vmatpush1.msra.mxu0 0.0
    %2365 = vmatprep.subr.mxu0 0.0
    %2366 = vmatpush1.msra.mxu0 0.0
    %2367 = vmatprep.subr.mxu0 0.0
    %2368 = vmatpush1.msra.mxu0 0.0
    %2369 = vmatprep.subr.mxu0 0.0
    %2370 = vmatpush1.msra.mxu0 0.0
    %2371 = vmatprep.subr.mxu0 0.0
    %2372 = vmatpush1.msra.mxu0 0.0
    %2373 = vmatprep.subr.mxu0 0.0
    %2374 = vmatpush1.msra.mxu0 0.0
    %2375 = vmatprep.subr.mxu0 0.0
    %2376 = vmatpush1.msra.mxu0 0.0
    %2377 = vmatprep.subr.mxu0 0.0
    %2378 = vmatpush1.msra.mxu0 0.0
    %2379 = vmatprep.subr.mxu0 0.0
    %2380 = vmatpush1.msra.mxu0 0.0
    %2381 = vmatprep.subr.mxu0 0.0
    %2382 = vmatpush1.msra.mxu0 0.0
    %2383 = vmatprep.subr.mxu0 0.0
    %2384 = vmatpush1.msra.mxu0 0.0
    %2385 = vmatprep.subr.mxu0 0.0
    %2386 = vmatpush1.msra.mxu0 0.0
    %2387 = vmatprep.subr.mxu0 0.0
    %2388 = vmatpush1.msra.mxu0 0.0
    %2389 = vmatprep.subr.mxu0 0.0
    %2390 = vmatpush1.msra.mxu0 0.0
    %2391 = vmatprep.subr.mxu0 0.0
    %2392 = vmatpush1.msra.mxu0 0.0
    %2393 = vmatprep.subr.mxu0 0.0
    %2394 = vmatpush1.msra.mxu0 0.0
    %2395 = vmatprep.subr.mxu0 0.0
    %2396 = vmatpush1.msra.mxu0 0.0
    %2397 = vmatprep.subr.mxu0 0.0
    %2398 = vmatpush1.msra.mxu0 0.0
    %2399 = vmatprep.subr.mxu0 0.0
    %2400 = vmatpush1.msra.mxu0 0.0
    %2401 = vmatprep.subr.mxu0 0.0
    %2402 = vmatpush1.msra.mxu0 0.0
    %2403 = vmatprep.subr.mxu0 0.0
    %2404 = vmatpush1.msra.mxu0 0.0
    %2405 = vmatprep.subr.mxu0 0.0
    %2406 = vmatpush1.msra.mxu0 0.0
    %2407 = vmatprep.subr.mxu0 0.0
    %2408 = vmatpush1.msra.mxu0 0.0
    %2409 = vmatprep.mubr.f32.mxu0 0.0
    %2410 = vmatmul.mubr.f32.gmra.mrb[0].mxu0 %v2343
    %v2411 = vpop.f32.mrb[0].mxu0
    %v2412 = vadd.f32 %v151, %v2411
    %v2413 = vpop.f32.mrb[0].mxu0
    %v2414 = vadd.f32 %v155, %v2413
    %2415 = vdwg.mxu0
    %2416 = vmatprep.subr.mxu0 0.0
    %2417 = vmatpush1.msra.mxu0 %v88
    %2418 = vmatprep.subr.mxu0 0.0
    %2419 = vmatpush1.msra.mxu0 %v91
    %2420 = vmatprep.subr.mxu0 0.0
    %2421 = vmatpush1.msra.mxu0 %v94
    %2422 = vmatprep.subr.mxu0 0.0
    %2423 = vmatpush1.msra.mxu0 %v97
    %2424 = vmatprep.subr.mxu0 0.0
    %2425 = vmatpush1.msra.mxu0 0.0
    %2426 = vmatprep.subr.mxu0 0.0
    %2427 = vmatpush1.msra.mxu0 0.0
    %2428 = vmatprep.subr.mxu0 0.0
    %2429 = vmatpush1.msra.mxu0 0.0
    %2430 = vmatprep.subr.mxu0 0.0
    %2431 = vmatpush1.msra.mxu0 0.0
    %2432 = vmatprep.subr.mxu0 0.0
    %2433 = vmatpush1.msra.mxu0 0.0
    %2434 = vmatprep.subr.mxu0 0.0
    %2435 = vmatpush1.msra.mxu0 0.0
    %2436 = vmatprep.subr.mxu0 0.0
    %2437 = vmatpush1.msra.mxu0 0.0
    %2438 = vmatprep.subr.mxu0 0.0
    %2439 = vmatpush1.msra.mxu0 0.0
    %2440 = vmatprep.subr.mxu0 0.0
    %2441 = vmatpush1.msra.mxu0 0.0
    %2442 = vmatprep.subr.mxu0 0.0
    %2443 = vmatpush1.msra.mxu0 0.0
    %2444 = vmatprep.subr.mxu0 0.0
    %2445 = vmatpush1.msra.mxu0 0.0
    %2446 = vmatprep.subr.mxu0 0.0
    %2447 = vmatpush1.msra.mxu0 0.0
    %2448 = vmatprep.subr.mxu0 0.0
    %2449 = vmatpush1.msra.mxu0 0.0
    %2450 = vmatprep.subr.mxu0 0.0
    %2451 = vmatpush1.msra.mxu0 0.0
    %2452 = vmatprep.subr.mxu0 0.0
    %2453 = vmatpush1.msra.mxu0 0.0
    %2454 = vmatprep.subr.mxu0 0.0
    %2455 = vmatpush1.msra.mxu0 0.0
    %2456 = vmatprep.subr.mxu0 0.0
    %2457 = vmatpush1.msra.mxu0 0.0
    %2458 = vmatprep.subr.mxu0 0.0
    %2459 = vmatpush1.msra.mxu0 0.0
    %2460 = vmatprep.subr.mxu0 0.0
    %2461 = vmatpush1.msra.mxu0 0.0
    %2462 = vmatprep.subr.mxu0 0.0
    %2463 = vmatpush1.msra.mxu0 0.0
    %2464 = vmatprep.subr.mxu0 0.0
    %2465 = vmatpush1.msra.mxu0 0.0
    %2466 = vmatprep.subr.mxu0 0.0
    %2467 = vmatpush1.msra.mxu0 0.0
    %2468 = vmatprep.subr.mxu0 0.0
    %2469 = vmatpush1.msra.mxu0 0.0
    %2470 = vmatprep.subr.mxu0 0.0
    %2471 = vmatpush1.msra.mxu0 0.0
    %2472 = vmatprep.subr.mxu0 0.0
    %2473 = vmatpush1.msra.mxu0 0.0
    %2474 = vmatprep.subr.mxu0 0.0
    %2475 = vmatpush1.msra.mxu0 0.0
    %2476 = vmatprep.subr.mxu0 0.0
    %2477 = vmatpush1.msra.mxu0 0.0
    %2478 = vmatprep.subr.mxu0 0.0
    %2479 = vmatpush1.msra.mxu0 0.0
    %2480 = vmatprep.mubr.f32.mxu0 0.0
    %2481 = vmatmul.mubr.f32.gmra.mrb[0].mxu0 %v2343
    %v2482 = vpop.f32.mrb[0].mxu0
    %v2483 = vadd.f32 %v159, %v2482
    %v2484 = vpop.f32.mrb[0].mxu0
    %2485 = vdwg.mxu0
    %2486 = vmatprep.subr.mxu0 %v99
    %2487 = vmatpush1.msra.mxu0 %v98
    %2488 = vmatprep.subr.mxu0 %v102
    %2489 = vmatpush1.msra.mxu0 %v101
    %2490 = vmatprep.subr.mxu0 %v105
    %2491 = vmatpush1.msra.mxu0 %v104
    %2492 = vmatprep.subr.mxu0 %v108
    %2493 = vmatpush1.msra.mxu0 %v107
    %2494 = vmatprep.subr.mxu0 %v111
    %2495 = vmatpush1.msra.mxu0 %v110
    %2496 = vmatprep.subr.mxu0 %v114
    %2497 = vmatpush1.msra.mxu0 %v113
    %2498 = vmatprep.subr.mxu0 %v117
    %2499 = vmatpush1.msra.mxu0 %v116
    %2500 = vmatprep.subr.mxu0 %v120
    %2501 = vmatpush1.msra.mxu0 %v119
    %2502 = vmatprep.subr.mxu0 %v123
    %2503 = vmatpush1.msra.mxu0 %v122
    %2504 = vmatprep.subr.mxu0 %v126
    %2505 = vmatpush1.msra.mxu0 %v125
    %2506 = vmatprep.subr.mxu0 %v129
    %2507 = vmatpush1.msra.mxu0 %v128
    %2508 = vmatprep.subr.mxu0 %v132
    %2509 = vmatpush1.msra.mxu0 %v131
    %2510 = vmatprep.subr.mxu0 %v135
    %2511 = vmatpush1.msra.mxu0 %v134
    %2512 = vmatprep.subr.mxu0 %v138
    %2513 = vmatpush1.msra.mxu0 %v137
    %2514 = vmatprep.subr.mxu0 %v141
    %2515 = vmatpush1.msra.mxu0 %v140
    %2516 = vmatprep.subr.mxu0 %v144
    %2517 = vmatpush1.msra.mxu0 %v143
    %2518 = vmatprep.subr.mxu0 0.0
    %2519 = vmatpush1.msra.mxu0 0.0
    %2520 = vmatprep.subr.mxu0 0.0
    %2521 = vmatpush1.msra.mxu0 0.0
    %2522 = vmatprep.subr.mxu0 0.0
    %2523 = vmatpush1.msra.mxu0 0.0
    %2524 = vmatprep.subr.mxu0 0.0
    %2525 = vmatpush1.msra.mxu0 0.0
    %2526 = vmatprep.subr.mxu0 0.0
    %2527 = vmatpush1.msra.mxu0 0.0
    %2528 = vmatprep.subr.mxu0 0.0
    %2529 = vmatpush1.msra.mxu0 0.0
    %2530 = vmatprep.subr.mxu0 0.0
    %2531 = vmatpush1.msra.mxu0 0.0
    %2532 = vmatprep.subr.mxu0 0.0
    %2533 = vmatpush1.msra.mxu0 0.0
    %2534 = vmatprep.subr.mxu0 0.0
    %2535 = vmatpush1.msra.mxu0 0.0
    %2536 = vmatprep.subr.mxu0 0.0
    %2537 = vmatpush1.msra.mxu0 0.0
    %2538 = vmatprep.subr.mxu0 0.0
    %2539 = vmatpush1.msra.mxu0 0.0
    %2540 = vmatprep.subr.mxu0 0.0
    %2541 = vmatpush1.msra.mxu0 0.0
    %2542 = vmatprep.subr.mxu0 0.0
    %2543 = vmatpush1.msra.mxu0 0.0
    %2544 = vmatprep.subr.mxu0 0.0
    %2545 = vmatpush1.msra.mxu0 0.0
    %2546 = vmatprep.subr.mxu0 0.0
    %2547 = vmatpush1.msra.mxu0 0.0
    %2548 = vmatprep.subr.mxu0 0.0
    %2549 = vmatpush1.msra.mxu0 0.0
    %2550 = vmatprep.mubr.f32.mxu0 0.0
    %2551 = vmatmul.mubr.f32.gmra.mrb[0].mxu0 %v2337
    %v2552 = vpop.f32.mrb[0].mxu0
    %v2553 = vadd.f32 0.0, %v2552
    %v2554 = vpop.f32.mrb[0].mxu0
    %v2555 = vadd.f32 0.0, %v2554
    %2556 = vdwg.mxu0
    %2557 = vmatprep.subr.mxu0 0.0
    %2558 = vmatpush1.msra.mxu0 %v100
    %2559 = vmatprep.subr.mxu0 0.0
    %2560 = vmatpush1.msra.mxu0 %v103
    %2561 = vmatprep.subr.mxu0 0.0
    %2562 = vmatpush1.msra.mxu0 %v106
    %2563 = vmatprep.subr.mxu0 0.0
    %2564 = vmatpush1.msra.mxu0 %v109
    %2565 = vmatprep.subr.mxu0 0.0
    %2566 = vmatpush1.msra.mxu0 %v112
    %2567 = vmatprep.subr.mxu0 0.0
    %2568 = vmatpush1.msra.mxu0 %v115
    %2569 = vmatprep.subr.mxu0 0.0
    %2570 = vmatpush1.msra.mxu0 %v118
    %2571 = vmatprep.subr.mxu0 0.0
    %2572 = vmatpush1.msra.mxu0 %v121
    %2573 = vmatprep.subr.mxu0 0.0
    %2574 = vmatpush1.msra.mxu0 %v124
    %2575 = vmatprep.subr.mxu0 0.0
    %2576 = vmatpush1.msra.mxu0 %v127
    %2577 = vmatprep.subr.mxu0 0.0
    %2578 = vmatpush1.msra.mxu0 %v130
    %2579 = vmatprep.subr.mxu0 0.0
    %2580 = vmatpush1.msra.mxu0 %v133
    %2581 = vmatprep.subr.mxu0 0.0
    %2582 = vmatpush1.msra.mxu0 %v136
    %2583 = vmatprep.subr.mxu0 0.0
    %2584 = vmatpush1.msra.mxu0 %v139
    %2585 = vmatprep.subr.mxu0 0.0
    %2586 = vmatpush1.msra.mxu0 %v142
    %2587 = vmatprep.subr.mxu0 0.0
    %2588 = vmatpush1.msra.mxu0 %v145
    %2589 = vmatprep.subr.mxu0 0.0
    %2590 = vmatpush1.msra.mxu0 0.0
    %2591 = vmatprep.subr.mxu0 0.0
    %2592 = vmatpush1.msra.mxu0 0.0
    %2593 = vmatprep.subr.mxu0 0.0
    %2594 = vmatpush1.msra.mxu0 0.0
    %2595 = vmatprep.subr.mxu0 0.0
    %2596 = vmatpush1.msra.mxu0 0.0
    %2597 = vmatprep.subr.mxu0 0.0
    %2598 = vmatpush1.msra.mxu0 0.0
    %2599 = vmatprep.subr.mxu0 0.0
    %2600 = vmatpush1.msra.mxu0 0.0
    %2601 = vmatprep.subr.mxu0 0.0
    %2602 = vmatpush1.msra.mxu0 0.0
    %2603 = vmatprep.subr.mxu0 0.0
    %2604 = vmatpush1.msra.mxu0 0.0
    %2605 = vmatprep.subr.mxu0 0.0
    %2606 = vmatpush1.msra.mxu0 0.0
    %2607 = vmatprep.subr.mxu0 0.0
    %2608 = vmatpush1.msra.mxu0 0.0
    %2609 = vmatprep.subr.mxu0 0.0
    %2610 = vmatpush1.msra.mxu0 0.0
    %2611 = vmatprep.subr.mxu0 0.0
    %2612 = vmatpush1.msra.mxu0 0.0
    %2613 = vmatprep.subr.mxu0 0.0
    %2614 = vmatpush1.msra.mxu0 0.0
    %2615 = vmatprep.subr.mxu0 0.0
    %2616 = vmatpush1.msra.mxu0 0.0
    %2617 = vmatprep.subr.mxu0 0.0
    %2618 = vmatpush1.msra.mxu0 0.0
    %2619 = vmatprep.subr.mxu0 0.0
    %2620 = vmatpush1.msra.mxu0 0.0
    %2621 = vmatprep.mubr.f32.mxu0 0.0
    %2622 = vmatmul.mubr.f32.gmra.mrb[0].mxu0 %v2337
    %v2623 = vpop.f32.mrb[0].mxu0
    %v2624 = vadd.f32 0.0, %v2623
    %v2625 = vpop.f32.mrb[0].mxu0
    %2626 = vdwg.mxu0
    %v2627 = vadd.f32 %v2412, %v2553
    %v2628 = vxor.u32 %v2627, 2147483648
    %v2629 = vmul.f32 %v2628, 1.442695
    %v2630 = vpow.pop %v2629
    %v2631 = vadd.f32 %v2630, 1.0
    %v2632 = vrcp.pop %v2631
    %v2633 = vmul.f32 1.0, %v2632
    %v2634 = vadd.f32 %v2414, %v2555
    %v2635 = vxor.u32 %v2634, 2147483648
    %v2636 = vmul.f32 %v2635, 1.442695
    %v2637 = vpow.pop %v2636
    %v2638 = vadd.f32 %v2637, 1.0
    %v2639 = vrcp.pop %v2638
    %v2640 = vmul.f32 1.0, %v2639
    %v2641 = vadd.f32 %v2624, %v168
    %v2642 = vmul.f32 %v2633, %v2641
    %v2643 = vadd.f32 %v2483, %v2642
    %v2644 = vtanh.pop %v2643
    %v2645 = vsub.f32 %v2337, %v2644
    %v2646 = vmul.f32 %v2640, %v2645
    %v2647 = vadd.f32 %v2644, %v2646
    %s2648 = scalar_lea.vmem [#allocation10], 56
    %2649 = vst [vmem:[%s2648] sm:$0xff] %v2647
    %2650 = vst [vmem:[#allocation11] sm:$0xff] %v2647
    // Predicated region
    $region46: #{tpu_custom_call.1} parent=1 // pred_check
      _
    $region47: #{tpu_custom_call.1} parent=1 // pred_check_branch
      %2652 = sbr.rel (0) target = $region49
    $region48: #{tpu_custom_call.1} parent=1 // pred_region
      %s2654 = ssub.s32 1024, 1024
      %2655 = vsyncadd [#allocation4], %s2654
      %s2656 = sshll.u32 [#allocation10], 4
      %s2657 = int_to_ptr.vmem [resolvable:$true] %s2656
      %2662 = dma.vmem_to_hbm [thread:$0]  %s2657, 1024, %s6, [#allocation4], 128, 128, 8
    $region49: #{tpu_custom_call.1} parent=1 // pred_fallthru
      _
    // Predicated region
    $region50: #{tpu_custom_call.1} parent=1 // pred_check
      _
    $region51: #{tpu_custom_call.1} parent=1 // pred_check_branch
      %2664 = sbr.rel (0) target = $region53
    $region52: #{tpu_custom_call.1} parent=1 // pred_region
      %s2666 = ssub.s32 128, 128
      %2667 = vsyncadd [#allocation12], %s2666
      %s2669 = sshll.u32 [#allocation11], 4
      %s2670 = int_to_ptr.vmem [resolvable:$true] %s2669
      %2672 = dma.vmem_to_hbm [thread:$0]  %s2670, 128, %s7, [#allocation12]
    $region53: #{tpu_custom_call.1} parent=1 // pred_fallthru
      _
    // Predicated region
    $region54: #{tpu_custom_call.1} parent=1 // pred_check
      _
    $region55: #{tpu_custom_call.1} parent=1 // pred_check_branch
      %2674 = sbr.rel (0) target = $region57
    $region56: #{tpu_custom_call.1} parent=1 // pred_region
      %2675 = dma.done [#allocation4], 1024
    $region57: #{tpu_custom_call.1} parent=1 // pred_fallthru
      _
    // Predicated region
    $region58: #{tpu_custom_call.1} parent=1 // pred_check
      _
    $region59: #{tpu_custom_call.1} parent=1 // pred_check_branch
      %2677 = sbr.rel (0) target = $region61
    $region60: #{tpu_custom_call.1} parent=1 // pred_region
      %2678 = dma.done [#allocation12], 128
    $region61: #{tpu_custom_call.1} parent=1 // pred_fallthru
      _
    %2679 = vsyncpa [#allocation3], 1
    %2680 = vsyncpa [#allocation6], 1
    %2681 = vsyncpa [#allocation9], 1
    %2682 = vsyncpa [#allocation4], 1
    %2683 = vsyncpa [#allocation12], 1

</llo_original>
